<compile_context>
chip_gen: v5e
topology: v5e:2x2
jax: 0.10.0
libtpu: 0.0.40
codegen_flags: <defaults>
</compile_context>

<pallas_src>
import functools
import math

import jax
import jax.numpy as jnp
from jax.experimental import pallas as pl
from jax.experimental.pallas import tpu as pltpu


# ----------------------------------------------------------------------------
# Tiling helpers
# ----------------------------------------------------------------------------

def _pick_tile(dim, prefs):
    """Largest preferred tile that divides `dim` exactly, else the full dim."""
    for p in prefs:
        if dim % p == 0:
            return p
    return dim


def _row_tile(m):
    """(tile, padded_extent) for a row (sublane) dimension."""
    for t in (256, 128):
        if m % t == 0:
            return t, m
    if m <= 512:
        return m, m                       # single full-extent tile (always legal)
    mp = ((m + 127) // 128) * 128         # pad long non-aligned row dims
    return 128, mp


def _seq_tile(t):
    """(tile, padded_extent) for an attention sequence dimension."""
    for tt in (256, 128):
        if t % tt == 0:
            return tt, t
    if t <= 512:
        return t, t
    tp = ((t + 127) // 128) * 128
    return 128, tp


def _pad_rows(x, mp):
    m = x.shape[0]
    if m == mp:
        return x
    return jnp.pad(x, ((0, mp - m), (0, 0)))


# ----------------------------------------------------------------------------
# Kernel 1: tiled matmul + bias  (fused QKV / KV / Q / vocab projections)
# ----------------------------------------------------------------------------

def _matmul_bias_kernel(x_ref, w_ref, b_ref, o_ref, acc_ref):
    @pl.when(pl.program_id(2) == 0)
    def _():
        acc_ref[...] = jnp.zeros_like(acc_ref)

    acc_ref[...] += jnp.dot(x_ref[...], w_ref[...],
                            preferred_element_type=jnp.float32)

    @pl.when(pl.program_id(2) == pl.num_programs(2) - 1)
    def _():
        o_ref[...] = (acc_ref[...] + b_ref[...]).astype(o_ref.dtype)


def matmul_bias(x, w, b, out_dtype=jnp.bfloat16):
    """x: (M, K) bf16, w: (K, N) bf16, b: (1, N) f32 -> (M, N) out_dtype."""
    M, K = x.shape
    N = w.shape[1]
    tm, mp = _row_tile(M)
    x = _pad_rows(x, mp)
    tn = _pick_tile(N, (512, 256, 128))
    tk = _pick_tile(K, (512, 256, 128))
    out = pl.pallas_call(
        _matmul_bias_kernel,
        out_shape=jax.ShapeDtypeStruct((mp, N), out_dtype),
        grid=(mp // tm, N // tn, K // tk),
        in_specs=[
            pl.BlockSpec((tm, tk), lambda i, j, k: (i, k)),
            pl.BlockSpec((tk, tn), lambda i, j, k: (k, j)),
            pl.BlockSpec((1, tn), lambda i, j, k: (0, j)),
        ],
        out_specs=pl.BlockSpec((tm, tn), lambda i, j, k: (i, j)),
        scratch_shapes=[pltpu.VMEM((tm, tn), jnp.float32)],
        compiler_params=pltpu.CompilerParams(
            dimension_semantics=("parallel", "parallel", "arbitrary")),
    )(x, w, b)
    return out[:M] if mp != M else out


# ----------------------------------------------------------------------------
# Kernel 2: flash-style multi-head attention (online softmax over kv tiles)
# ----------------------------------------------------------------------------

def _flash_kernel(q_ref, k_ref, v_ref, bias_ref, o_ref, m_sc, l_sc, acc_sc,
                  *, n_heads, scale):
    kv_i = pl.program_id(2)

    @pl.when(kv_i == 0)
    def _():
        m_sc[...] = jnp.full_like(m_sc, -jnp.inf)
        l_sc[...] = jnp.zeros_like(l_sc)
        acc_sc[...] = jnp.zeros_like(acc_sc)

    D = q_ref.shape[-1]
    dk = D // n_heads

    # fold 1/sqrt(dk) into q (touches tq*D elements instead of H*tq*tk scores)
    q = (q_ref[0].astype(jnp.float32) * scale).astype(jnp.bfloat16)   # (tq, D)
    k = k_ref[0]                                                      # (tk, D)
    v = v_ref[0]                                                      # (tk, D)
    bias = bias_ref[0]                                                # (mq, tk)

    for h in range(n_heads):                       # heads split in-kernel
        sl = slice(h * dk, (h + 1) * dk)
        s = jax.lax.dot_general(                   # (tq, tk) f32 on the MXU
            q[:, sl], k[:, sl],
            dimension_numbers=(((1,), (1,)), ((), ())),
            preferred_element_type=jnp.float32)
        s = s + bias                               # additive mask bias

        m_prev = m_sc[h]
        m_new = jnp.maximum(m_prev, jnp.max(s, axis=-1, keepdims=True))
        alpha = jnp.exp(m_prev - m_new)
        p = jnp.exp(s - m_new)
        l_sc[h] = alpha * l_sc[h] + jnp.sum(p, axis=-1, keepdims=True)
        acc_sc[h] = alpha * acc_sc[h] + jnp.dot(
            p.astype(jnp.bfloat16), v[:, sl],
            preferred_element_type=jnp.float32)
        m_sc[h] = m_new

    @pl.when(kv_i == pl.num_programs(2) - 1)
    def _():
        ctx = [
            (acc_sc[h] * pl.reciprocal(l_sc[h], approx=True)).astype(o_ref.dtype)
            for h in range(n_heads)
        ]
        o_ref[0] = jnp.concatenate(ctx, axis=-1)   # lane-dense (tq, D) store


def flash_attn(q, k, v, bias, *, n_heads):
    """q: (B,Tq,D), k/v: (B,Tk,D) bf16; bias: (B, 1|Tq, Tk) f32 additive.
    Returns (B, Tq, D) bf16 attention context (pre-Wo)."""
    B, Tq, D = q.shape
    Tk = k.shape[1]
    dk = D // n_heads
    scale = 1.0 / math.sqrt(dk)

    tq, tq_p = _seq_tile(Tq)
    tk, tk_p = _seq_tile(Tk)

    if tq_p != Tq:
        q = jnp.pad(q, ((0, 0), (0, tq_p - Tq), (0, 0)))
    if tk_p != Tk:
        k = jnp.pad(k, ((0, 0), (0, tk_p - Tk), (0, 0)))
        v = jnp.pad(v, ((0, 0), (0, tk_p - Tk), (0, 0)))
        bias = jnp.pad(bias, ((0, 0), (0, 0), (0, tk_p - Tk)),
                       constant_values=-1e10)      # padded keys masked out
    qm = bias.shape[1]
    if qm != 1 and qm != tq_p:
        bias = jnp.pad(bias, ((0, 0), (0, tq_p - qm), (0, 0)))
        qm = tq_p
    mq = tq if qm != 1 else 1
    if mq == 1:
        bias_map = lambda b, qi, ki: (b, 0, ki)    # broadcast over q in-kernel
    else:
        bias_map = lambda b, qi, ki: (b, qi, ki)

    out = pl.pallas_call(
        functools.partial(_flash_kernel, n_heads=n_heads, scale=scale),
        out_shape=jax.ShapeDtypeStruct((B, tq_p, D), jnp.bfloat16),
        grid=(B, tq_p // tq, tk_p // tk),
        in_specs=[
            pl.BlockSpec((1, tq, D), lambda b, qi, ki: (b, qi, 0)),
            pl.BlockSpec((1, tk, D), lambda b, qi, ki: (b, ki, 0)),
            pl.BlockSpec((1, tk, D), lambda b, qi, ki: (b, ki, 0)),
            pl.BlockSpec((1, mq, tk), bias_map),
        ],
        out_specs=pl.BlockSpec((1, tq, D), lambda b, qi, ki: (b, qi, 0)),
        scratch_shapes=[
            pltpu.VMEM((n_heads, tq, 1), jnp.float32),    # running max
            pltpu.VMEM((n_heads, tq, 1), jnp.float32),    # running denominator
            pltpu.VMEM((n_heads, tq, dk), jnp.float32),   # running numerator
        ],
        compiler_params=pltpu.CompilerParams(
            dimension_semantics=("parallel", "parallel", "arbitrary")),
    )(q, k, v, bias)
    return out[:, :Tq] if tq_p != Tq else out


# ----------------------------------------------------------------------------
# Kernel 3: Wo projection (K-tiled) + residual + LayerNorm (fused epilogue)
# ----------------------------------------------------------------------------

def _proj_add_ln_kernel(a_ref, w_ref, b_ref, r_ref, g_ref, be_ref, o_ref,
                        acc_ref, *, eps):
    @pl.when(pl.program_id(1) == 0)
    def _():
        acc_ref[...] = jnp.zeros_like(acc_ref)

    acc_ref[...] += jnp.dot(a_ref[...], w_ref[...],
                            preferred_element_type=jnp.float32)

    @pl.when(pl.program_id(1) == pl.num_programs(1) - 1)
    def _():
        y = acc_ref[...] + b_ref[...] + r_ref[...].astype(jnp.float32)
        mean = jnp.mean(y, axis=-1, keepdims=True)
        cen = y - mean
        var = jnp.mean(cen * cen, axis=-1, keepdims=True)
        o_ref[...] = (cen * jax.lax.rsqrt(var + eps) * g_ref[...]
                      + be_ref[...]).astype(o_ref.dtype)


def proj_add_ln(a, w, b, resid, gamma, beta, eps=1e-5):
    """LayerNorm(resid + (a @ w + b)); a/resid: (M, D) bf16, w: (D, D) bf16."""
    M, K = a.shape
    D = w.shape[1]
    tm, mp = _row_tile(M)
    a = _pad_rows(a, mp)
    resid = _pad_rows(resid, mp)
    tk = _pick_tile(K, (512, 256))
    out = pl.pallas_call(
        functools.partial(_proj_add_ln_kernel, eps=eps),
        out_shape=jax.ShapeDtypeStruct((mp, D), jnp.bfloat16),
        grid=(mp // tm, K // tk),
        in_specs=[
            pl.BlockSpec((tm, tk), lambda i, k: (i, k)),
            pl.BlockSpec((tk, D), lambda i, k: (k, 0)),
            pl.BlockSpec((1, D), lambda i, k: (0, 0)),
            pl.BlockSpec((tm, D), lambda i, k: (i, 0)),
            pl.BlockSpec((1, D), lambda i, k: (0, 0)),
            pl.BlockSpec((1, D), lambda i, k: (0, 0)),
        ],
        out_specs=pl.BlockSpec((tm, D), lambda i, k: (i, 0)),
        scratch_shapes=[pltpu.VMEM((tm, D), jnp.float32)],
        compiler_params=pltpu.CompilerParams(
            dimension_semantics=("parallel", "arbitrary")),
    )(a, w, b, resid, gamma, beta)
    return out[:M] if mp != M else out


# ----------------------------------------------------------------------------
# Kernel 4: position-wise FFN (F-tiled) + residual + LayerNorm (fused)
# ----------------------------------------------------------------------------

def _ffn_add_ln_kernel(x_ref, w1_ref, b1_ref, w2_ref, b2_ref, g_ref, be_ref,
                       o_ref, acc_ref, *, eps):
    @pl.when(pl.program_id(1) == 0)
    def _():
        acc_ref[...] = jnp.zeros_like(acc_ref)

    x = x_ref[...]                                                 # (tm, D) bf16
    h = jnp.dot(x, w1_ref[...], preferred_element_type=jnp.float32) + b1_ref[...]
    h = jnp.maximum(h, 0.0)                                        # ReLU per F-tile
    acc_ref[...] += jnp.dot(h.astype(jnp.bfloat16), w2_ref[...],
                            preferred_element_type=jnp.float32)

    @pl.when(pl.program_id(1) == pl.num_programs(1) - 1)
    def _():
        y = acc_ref[...] + b2_ref[...] + x.astype(jnp.float32)     # residual
        mean = jnp.mean(y, axis=-1, keepdims=True)
        cen = y - mean
        var = jnp.mean(cen * cen, axis=-1, keepdims=True)
        o_ref[...] = (cen * jax.lax.rsqrt(var + eps) * g_ref[...]
                      + be_ref[...]).astype(o_ref.dtype)


def ffn_add_ln(x, w1, b1, w2, b2, gamma, beta, eps=1e-5):
    """LayerNorm(x + W2(relu(W1 x + b1)) + b2); x: (M, D) bf16."""
    M, D = x.shape
    F = w1.shape[1]
    tm, mp = _row_tile(M)
    x = _pad_rows(x, mp)
    tf = _pick_tile(F, (1024, 512, 256))
    out = pl.pallas_call(
        functools.partial(_ffn_add_ln_kernel, eps=eps),
        out_shape=jax.ShapeDtypeStruct((mp, D), jnp.bfloat16),
        grid=(mp // tm, F // tf),
        in_specs=[
            pl.BlockSpec((tm, D), lambda i, f: (i, 0)),
            pl.BlockSpec((D, tf), lambda i, f: (0, f)),
            pl.BlockSpec((1, tf), lambda i, f: (0, f)),
            pl.BlockSpec((tf, D), lambda i, f: (f, 0)),
            pl.BlockSpec((1, D), lambda i, f: (0, 0)),
            pl.BlockSpec((1, D), lambda i, f: (0, 0)),
            pl.BlockSpec((1, D), lambda i, f: (0, 0)),
        ],
        out_specs=pl.BlockSpec((tm, D), lambda i, f: (i, 0)),
        scratch_shapes=[pltpu.VMEM((tm, D), jnp.float32)],
        compiler_params=pltpu.CompilerParams(
            dimension_semantics=("parallel", "arbitrary")),
    )(x, w1, b1, w2, b2, gamma, beta)
    return out[:M] if mp != M else out


# ----------------------------------------------------------------------------
# Model glue (plain JAX: reshapes / mask bias / parameter bookkeeping)
# ----------------------------------------------------------------------------

def _mask_to_bias(mask):
    """(B, 1, Qm, Tk) {0,1} mask -> (B, Qm, Tk) f32 additive bias (computed once)."""
    m = mask[:, 0]
    return jnp.where(m == 0, jnp.float32(-1e10), jnp.float32(0.0))


def self_attention_block(x, bias, p, n_heads):
    B, T, D = x.shape
    qkv = matmul_bias(x.reshape(B * T, D), p["wqkv"], p["bqkv"])   # (B*T, 3D) bf16
    qkv = qkv.reshape(B, T, 3 * D)
    q, k, v = qkv[..., :D], qkv[..., D:2 * D], qkv[..., 2 * D:]
    return flash_attn(q, k, v, bias, n_heads=n_heads)              # (B, T, D) bf16


def cross_attention_block(x_q, x_kv, bias, p, n_heads):
    B, Tq, D = x_q.shape
    Tk = x_kv.shape[1]
    q = matmul_bias(x_q.reshape(B * Tq, D), p["wq"], p["bq"]).reshape(B, Tq, D)
    kv = matmul_bias(x_kv.reshape(B * Tk, D), p["wkv"], p["bkv"]).reshape(B, Tk, 2 * D)
    k, v = kv[..., :D], kv[..., D:]
    return flash_attn(q, k, v, bias, n_heads=n_heads)


def decoder_layer(trg, src, bias_self, bias_cross, p, n_heads):
    B, T, D = trg.shape
    # masked self-attention  ->  Wo + residual + LN (fused)
    ctx = self_attention_block(trg, bias_self, p["self_attn"], n_heads)
    trg = proj_add_ln(ctx.reshape(B * T, D), p["self_attn"]["wo"],
                      p["self_attn"]["bo"], trg.reshape(B * T, D),
                      p["ln1_g"], p["ln1_b"]).reshape(B, T, D)
    # cross-attention  ->  Wo + residual + LN (fused)
    ctx = cross_attention_block(trg, src, bias_cross, p["cross_attn"], n_heads)
    trg = proj_add_ln(ctx.reshape(B * T, D), p["cross_attn"]["wo"],
                      p["cross_attn"]["bo"], trg.reshape(B * T, D),
                      p["ln2_g"], p["ln2_b"]).reshape(B, T, D)
    # FFN + residual + LN (fully fused, F-tiled)
    trg = ffn_add_ln(trg.reshape(B * T, D), p["w1"], p["b1"], p["w2"], p["b2"],
                     p["ln3_g"], p["ln3_b"]).reshape(B, T, D)
    return trg


def decoder_forward(trg, src, trg_mask, src_mask, params, *, n_heads, vocab_size):
    B, T, D = trg.shape
    x = trg.astype(jnp.bfloat16)          # activations carried bf16 between kernels
    src_b = src.astype(jnp.bfloat16)
    bias_self = _mask_to_bias(trg_mask)   # (B, T, T) f32, built once, reused by all layers
    bias_cross = _mask_to_bias(src_mask)  # (B, 1, S) f32, broadcast over q in-kernel
    for layer_p in params["layers"]:
        x = decoder_layer(x, src_b, bias_self, bias_cross, layer_p, n_heads)
    logits = matmul_bias(x.reshape(B * T, D), params["wo"], params["bo"],
                         out_dtype=jnp.float32)       # padded-vocab logits, f32
    return logits.reshape(B, T, -1)[..., :vocab_size]


# ----------------------------------------------------------------------------
# Deterministic parameter initialization (weights bf16 for the MXU, f32 rest)
# ----------------------------------------------------------------------------

def init_params(key, vocab_size, d_model, n_layers, d_ffn):
    def dense(k, d_in, d_out):
        kw, kb = jax.random.split(k)
        w = (jax.random.normal(kw, (d_in, d_out), jnp.float32) * 0.05
             ).astype(jnp.bfloat16)
        b = jax.random.normal(kb, (1, d_out), jnp.float32) * 0.01
        return w, b

    def self_attn_params(k):
        ks = jax.random.split(k, 4)
        wq, bq = dense(ks[0], d_model, d_model)
        wk, bk = dense(ks[1], d_model, d_model)
        wv, bv = dense(ks[2], d_model, d_model)
        wo, bo = dense(ks[3], d_model, d_model)
        return dict(wqkv=jnp.concatenate([wq, wk, wv], axis=1),
                    bqkv=jnp.concatenate([bq, bk, bv], axis=1),
                    wo=wo, bo=bo)

    def cross_attn_params(k):
        ks = jax.random.split(k, 4)
        wq, bq = dense(ks[0], d_model, d_model)
        wk, bk = dense(ks[1], d_model, d_model)
        wv, bv = dense(ks[2], d_model, d_model)
        wo, bo = dense(ks[3], d_model, d_model)
        return dict(wq=wq, bq=bq,
                    wkv=jnp.concatenate([wk, wv], axis=1),
                    bkv=jnp.concatenate([bk, bv], axis=1),
                    wo=wo, bo=bo)

    layers = []
    for _ in range(n_layers):
        key, k1, k2, k3, k4 = jax.random.split(key, 5)
        w1, b1 = dense(k3, d_model, d_ffn)
        w2, b2 = dense(k4, d_ffn, d_model)
        layers.append(dict(
            self_attn=self_attn_params(k1),
            cross_attn=cross_attn_params(k2),
            w1=w1, b1=b1, w2=w2, b2=b2,
            ln1_g=jnp.ones((1, d_model), jnp.float32),
            ln1_b=jnp.zeros((1, d_model), jnp.float32),
            ln2_g=jnp.ones((1, d_model), jnp.float32),
            ln2_b=jnp.zeros((1, d_model), jnp.float32),
            ln3_g=jnp.ones((1, d_model), jnp.float32),
            ln3_b=jnp.zeros((1, d_model), jnp.float32),
        ))

    # vocab projection: pad N to a lane-tile multiple at init (padded logit
    # columns are sliced off after the kernel) so the tiling never falls back
    # to one giant full-vocab block.
    key, ko = jax.random.split(key)
    wo, bo = dense(ko, d_model, vocab_size)
    vpad = (-vocab_size) % 256
    if vpad:
        wo = jnp.pad(wo, ((0, 0), (0, vpad)))
        bo = jnp.pad(bo, ((0, 0), (0, vpad)))
    return dict(layers=layers, wo=wo, bo=bo)


# ----------------------------------------------------------------------------
# Demo
# ----------------------------------------------------------------------------

if __name__ == "__main__":
    B, T, S = 2, 8, 8
    d_model, n_heads, d_ffn, n_layers = 32, 4, 64, 2
    vocab_size = 50

    key = jax.random.PRNGKey(0)
    key, kt, ks, kp = jax.random.split(key, 4)

    trg = jax.random.normal(kt, (B, T, d_model), jnp.float32)
    src = jax.random.normal(ks, (B, S, d_model), jnp.float32)

    # causal target mask (B, 1, T, T); full source mask (B, 1, 1, S)
    trg_mask = jnp.broadcast_to(
        jnp.tril(jnp.ones((T, T), jnp.float32))[None, None], (B, 1, T, T))
    src_mask = jnp.ones((B, 1, 1, S), jnp.float32)

    params = init_params(kp, vocab_size, d_model, n_layers, d_ffn)

    fwd = jax.jit(functools.partial(decoder_forward, n_heads=n_heads,
                                    vocab_size=vocab_size))
    logits = fwd(trg, src, trg_mask, src_mask, params)
    jax.block_until_ready(logits)
    assert logits.shape == (B, T, vocab_size)
    print("KERNEL_OK")
</pallas_src>

<mosaic_0001>
module attributes {stable_mosaic.version = 11 : i64} {
  func.func @_matmul_bias_kernel(%arg0: i32, %arg1: i32, %arg2: i32, %arg3: memref<16x32xbf16, #tpu.memory_space<vmem>>, %arg4: memref<32x96xbf16, #tpu.memory_space<vmem>>, %arg5: memref<1x96xf32, #tpu.memory_space<vmem>>, %arg6: memref<16x96xbf16, #tpu.memory_space<vmem>>, %arg7: memref<16x96xf32, #tpu.memory_space<vmem>>) attributes {dimension_semantics = [#tpu.dimension_semantics<parallel>, #tpu.dimension_semantics<parallel>, #tpu.dimension_semantics<arbitrary>], iteration_bounds = array<i64: 1, 1, 1>, scalar_prefetch = 0 : i64, scratch_operands = 1 : i64, tpu.core_type = #tpu.core_type<tc>, window_params = [{transform_indices = @transform_0, window_bounds = array<i64: 16, 32>}, {transform_indices = @transform_1, window_bounds = array<i64: 32, 96>}, {transform_indices = @transform_2, window_bounds = array<i64: 1, 96>}, {transform_indices = @transform_3, window_bounds = array<i64: 16, 96>}]} {
    %c0_i32 = arith.constant 0 : i32
    %0 = arith.cmpi eq, %arg2, %c0_i32 : i32
    %1 = arith.extui %0 : i1 to i32
    %c0_i32_0 = arith.constant 0 : i32
    %2 = arith.cmpi ne, %1, %c0_i32_0 : i32
    scf.if %2 {
      %cst_10 = arith.constant 0.000000e+00 : f32
      %12 = vector.broadcast %cst_10 : f32 to vector<16x96xf32>
      %c0_11 = arith.constant 0 : index
      %c0_12 = arith.constant 0 : index
      %13 = vector.load %arg7[%c0_11, %c0_12] : memref<16x96xf32, #tpu.memory_space<vmem>>, vector<16x96xf32>
      tpu.vector_store %arg7[%c0_11, %c0_12], %12 {strides = array<i32>} : memref<16x96xf32, #tpu.memory_space<vmem>>, vector<16x96xf32>,
    } else {
    }
    %c0 = arith.constant 0 : index
    %c0_1 = arith.constant 0 : index
    %3 = vector.load %arg7[%c0, %c0_1] : memref<16x96xf32, #tpu.memory_space<vmem>>, vector<16x96xf32>
    %c0_2 = arith.constant 0 : index
    %c0_3 = arith.constant 0 : index
    %4 = vector.load %arg3[%c0_2, %c0_3] : memref<16x32xbf16, #tpu.memory_space<vmem>>, vector<16x32xbf16>
    %c0_4 = arith.constant 0 : index
    %c0_5 = arith.constant 0 : index
    %5 = vector.load %arg4[%c0_4, %c0_5] : memref<32x96xbf16, #tpu.memory_space<vmem>>, vector<32x96xbf16>
    %cst = arith.constant dense<0.000000e+00> : vector<16x96xf32>
    %6 = tpu.matmul %4, %5, %cst {dimension_numbers = #tpu.dot_dimension_numbers<[1], [0], [0], [1], [0, 0, 1, 1], [], []>} : vector<16x32xbf16>, vector<32x96xbf16>, vector<16x96xf32> -> vector<16x96xf32>
    %7 = arith.addf %3, %6 : vector<16x96xf32>
    %c0_6 = arith.constant 0 : index
    %c0_7 = arith.constant 0 : index
    %8 = vector.load %arg7[%c0_6, %c0_7] : memref<16x96xf32, #tpu.memory_space<vmem>>, vector<16x96xf32>
    tpu.vector_store %arg7[%c0_6, %c0_7], %7 {strides = array<i32>} : memref<16x96xf32, #tpu.memory_space<vmem>>, vector<16x96xf32>,
    %c0_i32_8 = arith.constant 0 : i32
    %9 = arith.cmpi eq, %arg2, %c0_i32_8 : i32
    %10 = arith.extui %9 : i1 to i32
    %c0_i32_9 = arith.constant 0 : i32
    %11 = arith.cmpi ne, %10, %c0_i32_9 : i32
    scf.if %11 {
      %c0_10 = arith.constant 0 : index
      %c0_11 = arith.constant 0 : index
      %12 = vector.load %arg7[%c0_10, %c0_11] : memref<16x96xf32, #tpu.memory_space<vmem>>, vector<16x96xf32>
      %c0_12 = arith.constant 0 : index
      %c0_13 = arith.constant 0 : index
      %13 = vector.load %arg5[%c0_12, %c0_13] : memref<1x96xf32, #tpu.memory_space<vmem>>, vector<1x96xf32>
      %14 = vector.broadcast %13 : vector<1x96xf32> to vector<16x96xf32>
      %15 = arith.addf %12, %14 : vector<16x96xf32>
      %16 = arith.truncf %15 : vector<16x96xf32> to vector<16x96xbf16>
      %c0_14 = arith.constant 0 : index
      %c0_15 = arith.constant 0 : index
      %17 = vector.load %arg6[%c0_14, %c0_15] : memref<16x96xbf16, #tpu.memory_space<vmem>>, vector<16x96xbf16>
      tpu.vector_store %arg6[%c0_14, %c0_15], %16 {strides = array<i32>} : memref<16x96xbf16, #tpu.memory_space<vmem>>, vector<16x96xbf16>,
    } else {
    }
    return
  }
  func.func @transform_0(%arg0: i32, %arg1: i32, %arg2: i32) -> (i32, i32) {
    %c0_i32 = arith.constant 0 : i32
    return %arg0, %arg2 : i32, i32
  }
  func.func @transform_1(%arg0: i32, %arg1: i32, %arg2: i32) -> (i32, i32) {
    %c0_i32 = arith.constant 0 : i32
    return %arg2, %arg1 : i32, i32
  }
  func.func @transform_2(%arg0: i32, %arg1: i32, %arg2: i32) -> (i32, i32) {
    %c0_i32 = arith.constant 0 : i32
    %c0_i32_0 = arith.constant 0 : i32
    return %c0_i32, %arg1 : i32, i32
  }
  func.func @transform_3(%arg0: i32, %arg1: i32, %arg2: i32) -> (i32, i32) {
    %c0_i32 = arith.constant 0 : i32
    return %arg0, %arg1 : i32, i32
  }
}

module attributes {stable_mosaic.version = 11 : i64} {
  func.func @_proj_add_ln_kernel(%arg0: i32, %arg1: i32, %arg2: memref<16x32xbf16, #tpu.memory_space<vmem>>, %arg3: memref<32x32xbf16, #tpu.memory_space<vmem>>, %arg4: memref<1x32xf32, #tpu.memory_space<vmem>>, %arg5: memref<16x32xbf16, #tpu.memory_space<vmem>>, %arg6: memref<1x32xf32, #tpu.memory_space<vmem>>, %arg7: memref<1x32xf32, #tpu.memory_space<vmem>>, %arg8: memref<16x32xbf16, #tpu.memory_space<vmem>>, %arg9: memref<16x32xf32, #tpu.memory_space<vmem>>) attributes {dimension_semantics = [#tpu.dimension_semantics<parallel>, #tpu.dimension_semantics<arbitrary>], iteration_bounds = array<i64: 1, 1>, scalar_prefetch = 0 : i64, scratch_operands = 1 : i64, tpu.core_type = #tpu.core_type<tc>, window_params = [{transform_indices = @transform_0, window_bounds = array<i64: 16, 32>}, {transform_indices = @transform_1, window_bounds = array<i64: 32, 32>}, {pipeline_mode = #tpu.pipeline_mode<synchronous>, transform_indices = @transform_2, window_bounds = array<i64: 1, 32>}, {transform_indices = @transform_3, window_bounds = array<i64: 16, 32>}, {pipeline_mode = #tpu.pipeline_mode<synchronous>, transform_indices = @transform_4, window_bounds = array<i64: 1, 32>}, {pipeline_mode = #tpu.pipeline_mode<synchronous>, transform_indices = @transform_5, window_bounds = array<i64: 1, 32>}, {transform_indices = @transform_6, window_bounds = array<i64: 16, 32>}]} {
    %c0_i32 = arith.constant 0 : i32
    %0 = arith.cmpi eq, %arg1, %c0_i32 : i32
    %1 = arith.extui %0 : i1 to i32
    %c0_i32_0 = arith.constant 0 : i32
    %2 = arith.cmpi ne, %1, %c0_i32_0 : i32
    scf.if %2 {
      %cst_10 = arith.constant 0.000000e+00 : f32
      %12 = vector.broadcast %cst_10 : f32 to vector<16x32xf32>
      %c0_11 = arith.constant 0 : index
      %c0_12 = arith.constant 0 : index
      %13 = vector.load %arg9[%c0_11, %c0_12] : memref<16x32xf32, #tpu.memory_space<vmem>>, vector<16x32xf32>
      tpu.vector_store %arg9[%c0_11, %c0_12], %12 {strides = array<i32>} : memref<16x32xf32, #tpu.memory_space<vmem>>, vector<16x32xf32>,
    } else {
    }
    %c0 = arith.constant 0 : index
    %c0_1 = arith.constant 0 : index
    %3 = vector.load %arg9[%c0, %c0_1] : memref<16x32xf32, #tpu.memory_space<vmem>>, vector<16x32xf32>
    %c0_2 = arith.constant 0 : index
    %c0_3 = arith.constant 0 : index
    %4 = vector.load %arg2[%c0_2, %c0_3] : memref<16x32xbf16, #tpu.memory_space<vmem>>, vector<16x32xbf16>
    %c0_4 = arith.constant 0 : index
    %c0_5 = arith.constant 0 : index
    %5 = vector.load %arg3[%c0_4, %c0_5] : memref<32x32xbf16, #tpu.memory_space<vmem>>, vector<32x32xbf16>
    %cst = arith.constant dense<0.000000e+00> : vector<16x32xf32>
    %6 = tpu.matmul %4, %5, %cst {dimension_numbers = #tpu.dot_dimension_numbers<[1], [0], [0], [1], [0, 0, 1, 1], [], []>} : vector<16x32xbf16>, vector<32x32xbf16>, vector<16x32xf32> -> vector<16x32xf32>
    %7 = arith.addf %3, %6 : vector<16x32xf32>
    %c0_6 = arith.constant 0 : index
    %c0_7 = arith.constant 0 : index
    %8 = vector.load %arg9[%c0_6, %c0_7] : memref<16x32xf32, #tpu.memory_space<vmem>>, vector<16x32xf32>
    tpu.vector_store %arg9[%c0_6, %c0_7], %7 {strides = array<i32>} : memref<16x32xf32, #tpu.memory_space<vmem>>, vector<16x32xf32>,
    %c0_i32_8 = arith.constant 0 : i32
    %9 = arith.cmpi eq, %arg1, %c0_i32_8 : i32
    %10 = arith.extui %9 : i1 to i32
    %c0_i32_9 = arith.constant 0 : i32
    %11 = arith.cmpi ne, %10, %c0_i32_9 : i32
    scf.if %11 {
      %c0_10 = arith.constant 0 : index
      %c0_11 = arith.constant 0 : index
      %12 = vector.load %arg9[%c0_10, %c0_11] : memref<16x32xf32, #tpu.memory_space<vmem>>, vector<16x32xf32>
      %c0_12 = arith.constant 0 : index
      %c0_13 = arith.constant 0 : index
      %13 = vector.load %arg4[%c0_12, %c0_13] : memref<1x32xf32, #tpu.memory_space<vmem>>, vector<1x32xf32>
      %14 = vector.broadcast %13 : vector<1x32xf32> to vector<16x32xf32>
      %15 = arith.addf %12, %14 : vector<16x32xf32>
      %c0_14 = arith.constant 0 : index
      %c0_15 = arith.constant 0 : index
      %16 = vector.load %arg5[%c0_14, %c0_15] : memref<16x32xbf16, #tpu.memory_space<vmem>>, vector<16x32xbf16>
      %17 = arith.extf %16 : vector<16x32xbf16> to vector<16x32xf32>
      %18 = arith.addf %15, %17 : vector<16x32xf32>
      %cst_16 = arith.constant dense<0.000000e+00> : vector<16xf32>
      %19 = vector.multi_reduction <add>, %18, %cst_16 [1] : vector<16x32xf32> to vector<16xf32>
      %20 = vector.shape_cast %19 : vector<16xf32> to vector<16x1xf32>
      %cst_17 = arith.constant 3.200000e+01 : f32
      %21 = vector.broadcast %cst_17 : f32 to vector<16x1xf32>
      %22 = arith.divf %20, %21 : vector<16x1xf32>
      %23 = vector.broadcast %22 : vector<16x1xf32> to vector<16x32xf32>
      %24 = arith.subf %18, %23 : vector<16x32xf32>
      %25 = arith.mulf %24, %24 : vector<16x32xf32>
      %cst_18 = arith.constant dense<0.000000e+00> : vector<16xf32>
      %26 = vector.multi_reduction <add>, %25, %cst_18 [1] : vector<16x32xf32> to vector<16xf32>
      %27 = vector.shape_cast %26 : vector<16xf32> to vector<16x1xf32>
      %cst_19 = arith.constant 3.200000e+01 : f32
      %28 = vector.broadcast %cst_19 : f32 to vector<16x1xf32>
      %29 = arith.divf %27, %28 : vector<16x1xf32>
      %cst_20 = arith.constant 9.99999974E-6 : f32
      %30 = vector.broadcast %cst_20 : f32 to vector<16x1xf32>
      %31 = arith.addf %29, %30 : vector<16x1xf32>
      %32 = math.rsqrt %31 : vector<16x1xf32>
      %33 = vector.broadcast %32 : vector<16x1xf32> to vector<16x32xf32>
      %34 = arith.mulf %24, %33 : vector<16x32xf32>
      %c0_21 = arith.constant 0 : index
      %c0_22 = arith.constant 0 : index
      %35 = vector.load %arg6[%c0_21, %c0_22] : memref<1x32xf32, #tpu.memory_space<vmem>>, vector<1x32xf32>
      %36 = vector.broadcast %35 : vector<1x32xf32> to vector<16x32xf32>
      %37 = arith.mulf %34, %36 : vector<16x32xf32>
      %c0_23 = arith.constant 0 : index
      %c0_24 = arith.constant 0 : index
      %38 = vector.load %arg7[%c0_23, %c0_24] : memref<1x32xf32, #tpu.memory_space<vmem>>, vector<1x32xf32>
      %39 = vector.broadcast %38 : vector<1x32xf32> to vector<16x32xf32>
      %40 = arith.addf %37, %39 : vector<16x32xf32>
      %41 = arith.truncf %40 : vector<16x32xf32> to vector<16x32xbf16>
      %c0_25 = arith.constant 0 : index
      %c0_26 = arith.constant 0 : index
      %42 = vector.load %arg8[%c0_25, %c0_26] : memref<16x32xbf16, #tpu.memory_space<vmem>>, vector<16x32xbf16>
      tpu.vector_store %arg8[%c0_25, %c0_26], %41 {strides = array<i32>} : memref<16x32xbf16, #tpu.memory_space<vmem>>, vector<16x32xbf16>,
    } else {
    }
    return
  }
  func.func @transform_0(%arg0: i32, %arg1: i32) -> (i32, i32) {
    %c0_i32 = arith.constant 0 : i32
    return %arg0, %arg1 : i32, i32
  }
  func.func @transform_1(%arg0: i32, %arg1: i32) -> (i32, i32) {
    %c0_i32 = arith.constant 0 : i32
    %c0_i32_0 = arith.constant 0 : i32
    return %arg1, %c0_i32 : i32, i32
  }
  func.func @transform_2(%arg0: i32, %arg1: i32) -> (i32, i32) {
    %c0_i32 = arith.constant 0 : i32
    %c0_i32_0 = arith.constant 0 : i32
    %c0_i32_1 = arith.constant 0 : i32
    return %c0_i32, %c0_i32_0 : i32, i32
  }
  func.func @transform_3(%arg0: i32, %arg1: i32) -> (i32, i32) {
    %c0_i32 = arith.constant 0 : i32
    %c0_i32_0 = arith.constant 0 : i32
    return %arg0, %c0_i32 : i32, i32
  }
  func.func @transform_4(%arg0: i32, %arg1: i32) -> (i32, i32) {
    %c0_i32 = arith.constant 0 : i32
    %c0_i32_0 = arith.constant 0 : i32
    %c0_i32_1 = arith.constant 0 : i32
    return %c0_i32, %c0_i32_0 : i32, i32
  }
  func.func @transform_5(%arg0: i32, %arg1: i32) -> (i32, i32) {
    %c0_i32 = arith.constant 0 : i32
    %c0_i32_0 = arith.constant 0 : i32
    %c0_i32_1 = arith.constant 0 : i32
    return %c0_i32, %c0_i32_0 : i32, i32
  }
  func.func @transform_6(%arg0: i32, %arg1: i32) -> (i32, i32) {
    %c0_i32 = arith.constant 0 : i32
    %c0_i32_0 = arith.constant 0 : i32
    return %arg0, %c0_i32 : i32, i32
  }
}

module attributes {stable_mosaic.version = 11 : i64} {
  func.func @_flash_kernel(%arg0: i32, %arg1: i32, %arg2: i32, %arg3: memref<1x8x32xbf16, #tpu.memory_space<vmem>>, %arg4: memref<1x8x32xbf16, #tpu.memory_space<vmem>>, %arg5: memref<1x8x32xbf16, #tpu.memory_space<vmem>>, %arg6: memref<1x8x8xf32, #tpu.memory_space<vmem>>, %arg7: memref<1x8x32xbf16, #tpu.memory_space<vmem>>, %arg8: memref<4x8x1xf32, #tpu.memory_space<vmem>>, %arg9: memref<4x8x1xf32, #tpu.memory_space<vmem>>, %arg10: memref<4x8x8xf32, #tpu.memory_space<vmem>>) attributes {dimension_semantics = [#tpu.dimension_semantics<parallel>, #tpu.dimension_semantics<parallel>, #tpu.dimension_semantics<arbitrary>], iteration_bounds = array<i64: 2, 1, 1>, scalar_prefetch = 0 : i64, scratch_operands = 3 : i64, tpu.core_type = #tpu.core_type<tc>, window_params = [{transform_indices = @transform_0, window_bounds = array<i64: 1, 8, 32>}, {transform_indices = @transform_1, window_bounds = array<i64: 1, 8, 32>}, {transform_indices = @transform_2, window_bounds = array<i64: 1, 8, 32>}, {transform_indices = @transform_3, window_bounds = array<i64: 1, 8, 8>}, {transform_indices = @transform_4, window_bounds = array<i64: 1, 8, 32>}]} {
    %c0_i32 = arith.constant 0 : i32
    %0 = arith.cmpi eq, %arg2, %c0_i32 : i32
    %1 = arith.extui %0 : i1 to i32
    %c0_i32_0 = arith.constant 0 : i32
    %2 = arith.cmpi ne, %1, %c0_i32_0 : i32
    scf.if %2 {
      %cst_99 = arith.constant 0xFF800000 : f32
      %166 = vector.broadcast %cst_99 : f32 to vector<4x8x1xf32>
      %c0_100 = arith.constant 0 : index
      %c0_101 = arith.constant 0 : index
      %c0_102 = arith.constant 0 : index
      %167 = vector.load %arg8[%c0_100, %c0_101, %c0_102] : memref<4x8x1xf32, #tpu.memory_space<vmem>>, vector<4x8x1xf32>
      tpu.vector_store %arg8[%c0_100, %c0_101, %c0_102], %166 {strides = array<i32>} : memref<4x8x1xf32, #tpu.memory_space<vmem>>, vector<4x8x1xf32>,
      %cst_103 = arith.constant 0.000000e+00 : f32
      %168 = vector.broadcast %cst_103 : f32 to vector<4x8x1xf32>
      %c0_104 = arith.constant 0 : index
      %c0_105 = arith.constant 0 : index
      %c0_106 = arith.constant 0 : index
      %169 = vector.load %arg9[%c0_104, %c0_105, %c0_106] : memref<4x8x1xf32, #tpu.memory_space<vmem>>, vector<4x8x1xf32>
      tpu.vector_store %arg9[%c0_104, %c0_105, %c0_106], %168 {strides = array<i32>} : memref<4x8x1xf32, #tpu.memory_space<vmem>>, vector<4x8x1xf32>,
      %cst_107 = arith.constant 0.000000e+00 : f32
      %170 = vector.broadcast %cst_107 : f32 to vector<4x8x8xf32>
      %c0_108 = arith.constant 0 : index
      %c0_109 = arith.constant 0 : index
      %c0_110 = arith.constant 0 : index
      %171 = vector.load %arg10[%c0_108, %c0_109, %c0_110] : memref<4x8x8xf32, #tpu.memory_space<vmem>>, vector<4x8x8xf32>
      tpu.vector_store %arg10[%c0_108, %c0_109, %c0_110], %170 {strides = array<i32>} : memref<4x8x8xf32, #tpu.memory_space<vmem>>, vector<4x8x8xf32>,
    } else {
    }
    %c0 = arith.constant 0 : index
    %c0_1 = arith.constant 0 : index
    %c0_2 = arith.constant 0 : index
    %3 = vector.load %arg3[%c0, %c0_1, %c0_2] : memref<1x8x32xbf16, #tpu.memory_space<vmem>>, vector<1x8x32xbf16>
    %4 = vector.shape_cast %3 : vector<1x8x32xbf16> to vector<8x32xbf16>
    %5 = arith.extf %4 : vector<8x32xbf16> to vector<8x32xf32>
    %cst = arith.constant 0.353553385 : f32
    %6 = vector.broadcast %cst : f32 to vector<8x32xf32>
    %7 = arith.mulf %5, %6 : vector<8x32xf32>
    %8 = arith.truncf %7 : vector<8x32xf32> to vector<8x32xbf16>
    %c0_3 = arith.constant 0 : index
    %c0_4 = arith.constant 0 : index
    %c0_5 = arith.constant 0 : index
    %9 = vector.load %arg4[%c0_3, %c0_4, %c0_5] : memref<1x8x32xbf16, #tpu.memory_space<vmem>>, vector<1x8x32xbf16>
    %10 = vector.shape_cast %9 : vector<1x8x32xbf16> to vector<8x32xbf16>
    %c0_6 = arith.constant 0 : index
    %c0_7 = arith.constant 0 : index
    %c0_8 = arith.constant 0 : index
    %11 = vector.load %arg5[%c0_6, %c0_7, %c0_8] : memref<1x8x32xbf16, #tpu.memory_space<vmem>>, vector<1x8x32xbf16>
    %12 = vector.shape_cast %11 : vector<1x8x32xbf16> to vector<8x32xbf16>
    %c0_9 = arith.constant 0 : index
    %c0_10 = arith.constant 0 : index
    %c0_11 = arith.constant 0 : index
    %13 = vector.load %arg6[%c0_9, %c0_10, %c0_11] : memref<1x8x8xf32, #tpu.memory_space<vmem>>, vector<1x8x8xf32>
    %14 = vector.shape_cast %13 : vector<1x8x8xf32> to vector<8x8xf32>
    %15 = vector.extract_strided_slice %8 {offsets = [0, 0], sizes = [8, 8], strides = [1, 1]} : vector<8x32xbf16> to vector<8x8xbf16>
    %16 = vector.extract_strided_slice %10 {offsets = [0, 0], sizes = [8, 8], strides = [1, 1]} : vector<8x32xbf16> to vector<8x8xbf16>
    %cst_12 = arith.constant dense<0.000000e+00> : vector<8x8xf32>
    %17 = tpu.matmul %15, %16, %cst_12 {dimension_numbers = #tpu.dot_dimension_numbers<[1], [1], [0], [0], [0, 0, 1, 0], [], []>} : vector<8x8xbf16>, vector<8x8xbf16>, vector<8x8xf32> -> vector<8x8xf32>
    %18 = arith.addf %17, %14 : vector<8x8xf32>
    %c0_13 = arith.constant 0 : index
    %c0_14 = arith.constant 0 : index
    %c0_15 = arith.constant 0 : index
    %19 = vector.load %arg8[%c0_13, %c0_14, %c0_15] : memref<4x8x1xf32, #tpu.memory_space<vmem>>, vector<1x8x1xf32>
    %20 = vector.shape_cast %19 : vector<1x8x1xf32> to vector<8x1xf32>
    %cst_16 = arith.constant dense<0xFF800000> : vector<8xf32>
    %21 = vector.multi_reduction <maximumf>, %18, %cst_16 [1] : vector<8x8xf32> to vector<8xf32>
    %22 = vector.shape_cast %21 : vector<8xf32> to vector<8x1xf32>
    %23 = arith.maximumf %20, %22 : vector<8x1xf32>
    %24 = arith.subf %20, %23 : vector<8x1xf32>
    %25 = math.exp %24 : vector<8x1xf32>
    %26 = vector.broadcast %23 : vector<8x1xf32> to vector<8x8xf32>
    %27 = arith.subf %18, %26 : vector<8x8xf32>
    %28 = math.exp %27 : vector<8x8xf32>
    %c0_17 = arith.constant 0 : index
    %c0_18 = arith.constant 0 : index
    %c0_19 = arith.constant 0 : index
    %29 = vector.load %arg9[%c0_17, %c0_18, %c0_19] : memref<4x8x1xf32, #tpu.memory_space<vmem>>, vector<1x8x1xf32>
    %30 = vector.shape_cast %29 : vector<1x8x1xf32> to vector<8x1xf32>
    %31 = arith.mulf %25, %30 : vector<8x1xf32>
    %cst_20 = arith.constant dense<0.000000e+00> : vector<8xf32>
    %32 = vector.multi_reduction <add>, %28, %cst_20 [1] : vector<8x8xf32> to vector<8xf32>
    %33 = vector.shape_cast %32 : vector<8xf32> to vector<8x1xf32>
    %34 = arith.addf %31, %33 : vector<8x1xf32>
    %c0_21 = arith.constant 0 : index
    %c0_22 = arith.constant 0 : index
    %c0_23 = arith.constant 0 : index
    %35 = vector.load %arg9[%c0_21, %c0_22, %c0_23] : memref<4x8x1xf32, #tpu.memory_space<vmem>>, vector<1x8x1xf32>
    %36 = vector.shape_cast %35 : vector<1x8x1xf32> to vector<8x1xf32>
    %37 = vector.shape_cast %34 : vector<8x1xf32> to vector<1x8x1xf32>
    tpu.vector_store %arg9[%c0_21, %c0_22, %c0_23], %37 {strides = array<i32>} : memref<4x8x1xf32, #tpu.memory_space<vmem>>, vector<1x8x1xf32>,
    %c0_24 = arith.constant 0 : index
    %c0_25 = arith.constant 0 : index
    %c0_26 = arith.constant 0 : index
    %38 = vector.load %arg10[%c0_24, %c0_25, %c0_26] : memref<4x8x8xf32, #tpu.memory_space<vmem>>, vector<1x8x8xf32>
    %39 = vector.shape_cast %38 : vector<1x8x8xf32> to vector<8x8xf32>
    %40 = vector.broadcast %25 : vector<8x1xf32> to vector<8x8xf32>
    %41 = arith.mulf %40, %39 : vector<8x8xf32>
    %42 = arith.truncf %28 : vector<8x8xf32> to vector<8x8xbf16>
    %43 = vector.extract_strided_slice %12 {offsets = [0, 0], sizes = [8, 8], strides = [1, 1]} : vector<8x32xbf16> to vector<8x8xbf16>
    %cst_27 = arith.constant dense<0.000000e+00> : vector<8x8xf32>
    %44 = tpu.matmul %42, %43, %cst_27 {dimension_numbers = #tpu.dot_dimension_numbers<[1], [0], [0], [1], [0, 0, 1, 1], [], []>} : vector<8x8xbf16>, vector<8x8xbf16>, vector<8x8xf32> -> vector<8x8xf32>
    %45 = arith.addf %41, %44 : vector<8x8xf32>
    %c0_28 = arith.constant 0 : index
    %c0_29 = arith.constant 0 : index
    %c0_30 = arith.constant 0 : index
    %46 = vector.load %arg10[%c0_28, %c0_29, %c0_30] : memref<4x8x8xf32, #tpu.memory_space<vmem>>, vector<1x8x8xf32>
    %47 = vector.shape_cast %46 : vector<1x8x8xf32> to vector<8x8xf32>
    %48 = vector.shape_cast %45 : vector<8x8xf32> to vector<1x8x8xf32>
    tpu.vector_store %arg10[%c0_28, %c0_29, %c0_30], %48 {strides = array<i32>} : memref<4x8x8xf32, #tpu.memory_space<vmem>>, vector<1x8x8xf32>,
    %c0_31 = arith.constant 0 : index
    %c0_32 = arith.constant 0 : index
    %c0_33 = arith.constant 0 : index
    %49 = vector.load %arg8[%c0_31, %c0_32, %c0_33] : memref<4x8x1xf32, #tpu.memory_space<vmem>>, vector<1x8x1xf32>
    %50 = vector.shape_cast %49 : vector<1x8x1xf32> to vector<8x1xf32>
    %51 = vector.shape_cast %23 : vector<8x1xf32> to vector<1x8x1xf32>
    tpu.vector_store %arg8[%c0_31, %c0_32, %c0_33], %51 {strides = array<i32>} : memref<4x8x1xf32, #tpu.memory_space<vmem>>, vector<1x8x1xf32>,
    %52 = vector.extract_strided_slice %8 {offsets = [0, 8], sizes = [8, 8], strides = [1, 1]} : vector<8x32xbf16> to vector<8x8xbf16>
    %53 = vector.extract_strided_slice %10 {offsets = [0, 8], sizes = [8, 8], strides = [1, 1]} : vector<8x32xbf16> to vector<8x8xbf16>
    %cst_34 = arith.constant dense<0.000000e+00> : vector<8x8xf32>
    %54 = tpu.matmul %52, %53, %cst_34 {dimension_numbers = #tpu.dot_dimension_numbers<[1], [1], [0], [0], [0, 0, 1, 0], [], []>} : vector<8x8xbf16>, vector<8x8xbf16>, vector<8x8xf32> -> vector<8x8xf32>
    %55 = arith.addf %54, %14 : vector<8x8xf32>
    %c1 = arith.constant 1 : index
    %c0_35 = arith.constant 0 : index
    %c0_36 = arith.constant 0 : index
    %56 = vector.load %arg8[%c1, %c0_35, %c0_36] : memref<4x8x1xf32, #tpu.memory_space<vmem>>, vector<1x8x1xf32>
    %57 = vector.shape_cast %56 : vector<1x8x1xf32> to vector<8x1xf32>
    %cst_37 = arith.constant dense<0xFF800000> : vector<8xf32>
    %58 = vector.multi_reduction <maximumf>, %55, %cst_37 [1] : vector<8x8xf32> to vector<8xf32>
    %59 = vector.shape_cast %58 : vector<8xf32> to vector<8x1xf32>
    %60 = arith.maximumf %57, %59 : vector<8x1xf32>
    %61 = arith.subf %57, %60 : vector<8x1xf32>
    %62 = math.exp %61 : vector<8x1xf32>
    %63 = vector.broadcast %60 : vector<8x1xf32> to vector<8x8xf32>
    %64 = arith.subf %55, %63 : vector<8x8xf32>
    %65 = math.exp %64 : vector<8x8xf32>
    %c1_38 = arith.constant 1 : index
    %c0_39 = arith.constant 0 : index
    %c0_40 = arith.constant 0 : index
    %66 = vector.load %arg9[%c1_38, %c0_39, %c0_40] : memref<4x8x1xf32, #tpu.memory_space<vmem>>, vector<1x8x1xf32>
    %67 = vector.shape_cast %66 : vector<1x8x1xf32> to vector<8x1xf32>
    %68 = arith.mulf %62, %67 : vector<8x1xf32>
    %cst_41 = arith.constant dense<0.000000e+00> : vector<8xf32>
    %69 = vector.multi_reduction <add>, %65, %cst_41 [1] : vector<8x8xf32> to vector<8xf32>
    %70 = vector.shape_cast %69 : vector<8xf32> to vector<8x1xf32>
    %71 = arith.addf %68, %70 : vector<8x1xf32>
    %c1_42 = arith.constant 1 : index
    %c0_43 = arith.constant 0 : index
    %c0_44 = arith.constant 0 : index
    %72 = vector.load %arg9[%c1_42, %c0_43, %c0_44] : memref<4x8x1xf32, #tpu.memory_space<vmem>>, vector<1x8x1xf32>
    %73 = vector.shape_cast %72 : vector<1x8x1xf32> to vector<8x1xf32>
    %74 = vector.shape_cast %71 : vector<8x1xf32> to vector<1x8x1xf32>
    tpu.vector_store %arg9[%c1_42, %c0_43, %c0_44], %74 {strides = array<i32>} : memref<4x8x1xf32, #tpu.memory_space<vmem>>, vector<1x8x1xf32>,
    %c1_45 = arith.constant 1 : index
    %c0_46 = arith.constant 0 : index
    %c0_47 = arith.constant 0 : index
    %75 = vector.load %arg10[%c1_45, %c0_46, %c0_47] : memref<4x8x8xf32, #tpu.memory_space<vmem>>, vector<1x8x8xf32>
    %76 = vector.shape_cast %75 : vector<1x8x8xf32> to vector<8x8xf32>
    %77 = vector.broadcast %62 : vector<8x1xf32> to vector<8x8xf32>
    %78 = arith.mulf %77, %76 : vector<8x8xf32>
    %79 = arith.truncf %65 : vector<8x8xf32> to vector<8x8xbf16>
    %80 = vector.extract_strided_slice %12 {offsets = [0, 8], sizes = [8, 8], strides = [1, 1]} : vector<8x32xbf16> to vector<8x8xbf16>
    %cst_48 = arith.constant dense<0.000000e+00> : vector<8x8xf32>
    %81 = tpu.matmul %79, %80, %cst_48 {dimension_numbers = #tpu.dot_dimension_numbers<[1], [0], [0], [1], [0, 0, 1, 1], [], []>} : vector<8x8xbf16>, vector<8x8xbf16>, vector<8x8xf32> -> vector<8x8xf32>
    %82 = arith.addf %78, %81 : vector<8x8xf32>
    %c1_49 = arith.constant 1 : index
    %c0_50 = arith.constant 0 : index
    %c0_51 = arith.constant 0 : index
    %83 = vector.load %arg10[%c1_49, %c0_50, %c0_51] : memref<4x8x8xf32, #tpu.memory_space<vmem>>, vector<1x8x8xf32>
    %84 = vector.shape_cast %83 : vector<1x8x8xf32> to vector<8x8xf32>
    %85 = vector.shape_cast %82 : vector<8x8xf32> to vector<1x8x8xf32>
    tpu.vector_store %arg10[%c1_49, %c0_50, %c0_51], %85 {strides = array<i32>} : memref<4x8x8xf32, #tpu.memory_space<vmem>>, vector<1x8x8xf32>,
    %c1_52 = arith.constant 1 : index
    %c0_53 = arith.constant 0 : index
    %c0_54 = arith.constant 0 : index
    %86 = vector.load %arg8[%c1_52, %c0_53, %c0_54] : memref<4x8x1xf32, #tpu.memory_space<vmem>>, vector<1x8x1xf32>
    %87 = vector.shape_cast %86 : vector<1x8x1xf32> to vector<8x1xf32>
    %88 = vector.shape_cast %60 : vector<8x1xf32> to vector<1x8x1xf32>
    tpu.vector_store %arg8[%c1_52, %c0_53, %c0_54], %88 {strides = array<i32>} : memref<4x8x1xf32, #tpu.memory_space<vmem>>, vector<1x8x1xf32>,
    %89 = vector.extract_strided_slice %8 {offsets = [0, 16], sizes = [8, 8], strides = [1, 1]} : vector<8x32xbf16> to vector<8x8xbf16>
    %90 = vector.extract_strided_slice %10 {offsets = [0, 16], sizes = [8, 8], strides = [1, 1]} : vector<8x32xbf16> to vector<8x8xbf16>
    %cst_55 = arith.constant dense<0.000000e+00> : vector<8x8xf32>
    %91 = tpu.matmul %89, %90, %cst_55 {dimension_numbers = #tpu.dot_dimension_numbers<[1], [1], [0], [0], [0, 0, 1, 0], [], []>} : vector<8x8xbf16>, vector<8x8xbf16>, vector<8x8xf32> -> vector<8x8xf32>
    %92 = arith.addf %91, %14 : vector<8x8xf32>
    %c2 = arith.constant 2 : index
    %c0_56 = arith.constant 0 : index
    %c0_57 = arith.constant 0 : index
    %93 = vector.load %arg8[%c2, %c0_56, %c0_57] : memref<4x8x1xf32, #tpu.memory_space<vmem>>, vector<1x8x1xf32>
    %94 = vector.shape_cast %93 : vector<1x8x1xf32> to vector<8x1xf32>
    %cst_58 = arith.constant dense<0xFF800000> : vector<8xf32>
    %95 = vector.multi_reduction <maximumf>, %92, %cst_58 [1] : vector<8x8xf32> to vector<8xf32>
    %96 = vector.shape_cast %95 : vector<8xf32> to vector<8x1xf32>
    %97 = arith.maximumf %94, %96 : vector<8x1xf32>
    %98 = arith.subf %94, %97 : vector<8x1xf32>
    %99 = math.exp %98 : vector<8x1xf32>
    %100 = vector.broadcast %97 : vector<8x1xf32> to vector<8x8xf32>
    %101 = arith.subf %92, %100 : vector<8x8xf32>
    %102 = math.exp %101 : vector<8x8xf32>
    %c2_59 = arith.constant 2 : index
    %c0_60 = arith.constant 0 : index
    %c0_61 = arith.constant 0 : index
    %103 = vector.load %arg9[%c2_59, %c0_60, %c0_61] : memref<4x8x1xf32, #tpu.memory_space<vmem>>, vector<1x8x1xf32>
    %104 = vector.shape_cast %103 : vector<1x8x1xf32> to vector<8x1xf32>
    %105 = arith.mulf %99, %104 : vector<8x1xf32>
    %cst_62 = arith.constant dense<0.000000e+00> : vector<8xf32>
    %106 = vector.multi_reduction <add>, %102, %cst_62 [1] : vector<8x8xf32> to vector<8xf32>
    %107 = vector.shape_cast %106 : vector<8xf32> to vector<8x1xf32>
    %108 = arith.addf %105, %107 : vector<8x1xf32>
    %c2_63 = arith.constant 2 : index
    %c0_64 = arith.constant 0 : index
    %c0_65 = arith.constant 0 : index
    %109 = vector.load %arg9[%c2_63, %c0_64, %c0_65] : memref<4x8x1xf32, #tpu.memory_space<vmem>>, vector<1x8x1xf32>
    %110 = vector.shape_cast %109 : vector<1x8x1xf32> to vector<8x1xf32>
    %111 = vector.shape_cast %108 : vector<8x1xf32> to vector<1x8x1xf32>
    tpu.vector_store %arg9[%c2_63, %c0_64, %c0_65], %111 {strides = array<i32>} : memref<4x8x1xf32, #tpu.memory_space<vmem>>, vector<1x8x1xf32>,
    %c2_66 = arith.constant 2 : index
    %c0_67 = arith.constant 0 : index
    %c0_68 = arith.constant 0 : index
    %112 = vector.load %arg10[%c2_66, %c0_67, %c0_68] : memref<4x8x8xf32, #tpu.memory_space<vmem>>, vector<1x8x8xf32>
    %113 = vector.shape_cast %112 : vector<1x8x8xf32> to vector<8x8xf32>
    %114 = vector.broadcast %99 : vector<8x1xf32> to vector<8x8xf32>
    %115 = arith.mulf %114, %113 : vector<8x8xf32>
    %116 = arith.truncf %102 : vector<8x8xf32> to vector<8x8xbf16>
    %117 = vector.extract_strided_slice %12 {offsets = [0, 16], sizes = [8, 8], strides = [1, 1]} : vector<8x32xbf16> to vector<8x8xbf16>
    %cst_69 = arith.constant dense<0.000000e+00> : vector<8x8xf32>
    %118 = tpu.matmul %116, %117, %cst_69 {dimension_numbers = #tpu.dot_dimension_numbers<[1], [0], [0], [1], [0, 0, 1, 1], [], []>} : vector<8x8xbf16>, vector<8x8xbf16>, vector<8x8xf32> -> vector<8x8xf32>
    %119 = arith.addf %115, %118 : vector<8x8xf32>
    %c2_70 = arith.constant 2 : index
    %c0_71 = arith.constant 0 : index
    %c0_72 = arith.constant 0 : index
    %120 = vector.load %arg10[%c2_70, %c0_71, %c0_72] : memref<4x8x8xf32, #tpu.memory_space<vmem>>, vector<1x8x8xf32>
    %121 = vector.shape_cast %120 : vector<1x8x8xf32> to vector<8x8xf32>
    %122 = vector.shape_cast %119 : vector<8x8xf32> to vector<1x8x8xf32>
    tpu.vector_store %arg10[%c2_70, %c0_71, %c0_72], %122 {strides = array<i32>} : memref<4x8x8xf32, #tpu.memory_space<vmem>>, vector<1x8x8xf32>,
    %c2_73 = arith.constant 2 : index
    %c0_74 = arith.constant 0 : index
    %c0_75 = arith.constant 0 : index
    %123 = vector.load %arg8[%c2_73, %c0_74, %c0_75] : memref<4x8x1xf32, #tpu.memory_space<vmem>>, vector<1x8x1xf32>
    %124 = vector.shape_cast %123 : vector<1x8x1xf32> to vector<8x1xf32>
    %125 = vector.shape_cast %97 : vector<8x1xf32> to vector<1x8x1xf32>
    tpu.vector_store %arg8[%c2_73, %c0_74, %c0_75], %125 {strides = array<i32>} : memref<4x8x1xf32, #tpu.memory_space<vmem>>, vector<1x8x1xf32>,
    %126 = vector.extract_strided_slice %8 {offsets = [0, 24], sizes = [8, 8], strides = [1, 1]} : vector<8x32xbf16> to vector<8x8xbf16>
    %127 = vector.extract_strided_slice %10 {offsets = [0, 24], sizes = [8, 8], strides = [1, 1]} : vector<8x32xbf16> to vector<8x8xbf16>
    %cst_76 = arith.constant dense<0.000000e+00> : vector<8x8xf32>
    %128 = tpu.matmul %126, %127, %cst_76 {dimension_numbers = #tpu.dot_dimension_numbers<[1], [1], [0], [0], [0, 0, 1, 0], [], []>} : vector<8x8xbf16>, vector<8x8xbf16>, vector<8x8xf32> -> vector<8x8xf32>
    %129 = arith.addf %128, %14 : vector<8x8xf32>
    %c3 = arith.constant 3 : index
    %c0_77 = arith.constant 0 : index
    %c0_78 = arith.constant 0 : index
    %130 = vector.load %arg8[%c3, %c0_77, %c0_78] : memref<4x8x1xf32, #tpu.memory_space<vmem>>, vector<1x8x1xf32>
    %131 = vector.shape_cast %130 : vector<1x8x1xf32> to vector<8x1xf32>
    %cst_79 = arith.constant dense<0xFF800000> : vector<8xf32>
    %132 = vector.multi_reduction <maximumf>, %129, %cst_79 [1] : vector<8x8xf32> to vector<8xf32>
    %133 = vector.shape_cast %132 : vector<8xf32> to vector<8x1xf32>
    %134 = arith.maximumf %131, %133 : vector<8x1xf32>
    %135 = arith.subf %131, %134 : vector<8x1xf32>
    %136 = math.exp %135 : vector<8x1xf32>
    %137 = vector.broadcast %134 : vector<8x1xf32> to vector<8x8xf32>
    %138 = arith.subf %129, %137 : vector<8x8xf32>
    %139 = math.exp %138 : vector<8x8xf32>
    %c3_80 = arith.constant 3 : index
    %c0_81 = arith.constant 0 : index
    %c0_82 = arith.constant 0 : index
    %140 = vector.load %arg9[%c3_80, %c0_81, %c0_82] : memref<4x8x1xf32, #tpu.memory_space<vmem>>, vector<1x8x1xf32>
    %141 = vector.shape_cast %140 : vector<1x8x1xf32> to vector<8x1xf32>
    %142 = arith.mulf %136, %141 : vector<8x1xf32>
    %cst_83 = arith.constant dense<0.000000e+00> : vector<8xf32>
    %143 = vector.multi_reduction <add>, %139, %cst_83 [1] : vector<8x8xf32> to vector<8xf32>
    %144 = vector.shape_cast %143 : vector<8xf32> to vector<8x1xf32>
    %145 = arith.addf %142, %144 : vector<8x1xf32>
    %c3_84 = arith.constant 3 : index
    %c0_85 = arith.constant 0 : index
    %c0_86 = arith.constant 0 : index
    %146 = vector.load %arg9[%c3_84, %c0_85, %c0_86] : memref<4x8x1xf32, #tpu.memory_space<vmem>>, vector<1x8x1xf32>
    %147 = vector.shape_cast %146 : vector<1x8x1xf32> to vector<8x1xf32>
    %148 = vector.shape_cast %145 : vector<8x1xf32> to vector<1x8x1xf32>
    tpu.vector_store %arg9[%c3_84, %c0_85, %c0_86], %148 {strides = array<i32>} : memref<4x8x1xf32, #tpu.memory_space<vmem>>, vector<1x8x1xf32>,
    %c3_87 = arith.constant 3 : index
    %c0_88 = arith.constant 0 : index
    %c0_89 = arith.constant 0 : index
    %149 = vector.load %arg10[%c3_87, %c0_88, %c0_89] : memref<4x8x8xf32, #tpu.memory_space<vmem>>, vector<1x8x8xf32>
    %150 = vector.shape_cast %149 : vector<1x8x8xf32> to vector<8x8xf32>
    %151 = vector.broadcast %136 : vector<8x1xf32> to vector<8x8xf32>
    %152 = arith.mulf %151, %150 : vector<8x8xf32>
    %153 = arith.truncf %139 : vector<8x8xf32> to vector<8x8xbf16>
    %154 = vector.extract_strided_slice %12 {offsets = [0, 24], sizes = [8, 8], strides = [1, 1]} : vector<8x32xbf16> to vector<8x8xbf16>
    %cst_90 = arith.constant dense<0.000000e+00> : vector<8x8xf32>
    %155 = tpu.matmul %153, %154, %cst_90 {dimension_numbers = #tpu.dot_dimension_numbers<[1], [0], [0], [1], [0, 0, 1, 1], [], []>} : vector<8x8xbf16>, vector<8x8xbf16>, vector<8x8xf32> -> vector<8x8xf32>
    %156 = arith.addf %152, %155 : vector<8x8xf32>
    %c3_91 = arith.constant 3 : index
    %c0_92 = arith.constant 0 : index
    %c0_93 = arith.constant 0 : index
    %157 = vector.load %arg10[%c3_91, %c0_92, %c0_93] : memref<4x8x8xf32, #tpu.memory_space<vmem>>, vector<1x8x8xf32>
    %158 = vector.shape_cast %157 : vector<1x8x8xf32> to vector<8x8xf32>
    %159 = vector.shape_cast %156 : vector<8x8xf32> to vector<1x8x8xf32>
    tpu.vector_store %arg10[%c3_91, %c0_92, %c0_93], %159 {strides = array<i32>} : memref<4x8x8xf32, #tpu.memory_space<vmem>>, vector<1x8x8xf32>,
    %c3_94 = arith.constant 3 : index
    %c0_95 = arith.constant 0 : index
    %c0_96 = arith.constant 0 : index
    %160 = vector.load %arg8[%c3_94, %c0_95, %c0_96] : memref<4x8x1xf32, #tpu.memory_space<vmem>>, vector<1x8x1xf32>
    %161 = vector.shape_cast %160 : vector<1x8x1xf32> to vector<8x1xf32>
    %162 = vector.shape_cast %134 : vector<8x1xf32> to vector<1x8x1xf32>
    tpu.vector_store %arg8[%c3_94, %c0_95, %c0_96], %162 {strides = array<i32>} : memref<4x8x1xf32, #tpu.memory_space<vmem>>, vector<1x8x1xf32>,
    %c0_i32_97 = arith.constant 0 : i32
    %163 = arith.cmpi eq, %arg2, %c0_i32_97 : i32
    %164 = arith.extui %163 : i1 to i32
    %c0_i32_98 = arith.constant 0 : i32
    %165 = arith.cmpi ne, %164, %c0_i32_98 : i32
    scf.if %165 {
      %c0_99 = arith.constant 0 : index
      %c0_100 = arith.constant 0 : index
      %c0_101 = arith.constant 0 : index
      %166 = vector.load %arg10[%c0_99, %c0_100, %c0_101] : memref<4x8x8xf32, #tpu.memory_space<vmem>>, vector<1x8x8xf32>
      %167 = vector.shape_cast %166 : vector<1x8x8xf32> to vector<8x8xf32>
      %c0_102 = arith.constant 0 : index
      %c0_103 = arith.constant 0 : index
      %c0_104 = arith.constant 0 : index
      %168 = vector.load %arg9[%c0_102, %c0_103, %c0_104] : memref<4x8x1xf32, #tpu.memory_space<vmem>>, vector<1x8x1xf32>
      %169 = vector.shape_cast %168 : vector<1x8x1xf32> to vector<8x1xf32>
      %170 = tpu.reciprocal %169 {approx = true} : vector<8x1xf32> -> vector<8x1xf32>
      %171 = vector.broadcast %170 : vector<8x1xf32> to vector<8x8xf32>
      %172 = arith.mulf %167, %171 : vector<8x8xf32>
      %173 = arith.truncf %172 : vector<8x8xf32> to vector<8x8xbf16>
      %c1_105 = arith.constant 1 : index
      %c0_106 = arith.constant 0 : index
      %c0_107 = arith.constant 0 : index
      %174 = vector.load %arg10[%c1_105, %c0_106, %c0_107] : memref<4x8x8xf32, #tpu.memory_space<vmem>>, vector<1x8x8xf32>
      %175 = vector.shape_cast %174 : vector<1x8x8xf32> to vector<8x8xf32>
      %c1_108 = arith.constant 1 : index
      %c0_109 = arith.constant 0 : index
      %c0_110 = arith.constant 0 : index
      %176 = vector.load %arg9[%c1_108, %c0_109, %c0_110] : memref<4x8x1xf32, #tpu.memory_space<vmem>>, vector<1x8x1xf32>
      %177 = vector.shape_cast %176 : vector<1x8x1xf32> to vector<8x1xf32>
      %178 = tpu.reciprocal %177 {approx = true} : vector<8x1xf32> -> vector<8x1xf32>
      %179 = vector.broadcast %178 : vector<8x1xf32> to vector<8x8xf32>
      %180 = arith.mulf %175, %179 : vector<8x8xf32>
      %181 = arith.truncf %180 : vector<8x8xf32> to vector<8x8xbf16>
      %c2_111 = arith.constant 2 : index
      %c0_112 = arith.constant 0 : index
      %c0_113 = arith.constant 0 : index
      %182 = vector.load %arg10[%c2_111, %c0_112, %c0_113] : memref<4x8x8xf32, #tpu.memory_space<vmem>>, vector<1x8x8xf32>
      %183 = vector.shape_cast %182 : vector<1x8x8xf32> to vector<8x8xf32>
      %c2_114 = arith.constant 2 : index
      %c0_115 = arith.constant 0 : index
      %c0_116 = arith.constant 0 : index
      %184 = vector.load %arg9[%c2_114, %c0_115, %c0_116] : memref<4x8x1xf32, #tpu.memory_space<vmem>>, vector<1x8x1xf32>
      %185 = vector.shape_cast %184 : vector<1x8x1xf32> to vector<8x1xf32>
      %186 = tpu.reciprocal %185 {approx = true} : vector<8x1xf32> -> vector<8x1xf32>
      %187 = vector.broadcast %186 : vector<8x1xf32> to vector<8x8xf32>
      %188 = arith.mulf %183, %187 : vector<8x8xf32>
      %189 = arith.truncf %188 : vector<8x8xf32> to vector<8x8xbf16>
      %c3_117 = arith.constant 3 : index
      %c0_118 = arith.constant 0 : index
      %c0_119 = arith.constant 0 : index
      %190 = vector.load %arg10[%c3_117, %c0_118, %c0_119] : memref<4x8x8xf32, #tpu.memory_space<vmem>>, vector<1x8x8xf32>
      %191 = vector.shape_cast %190 : vector<1x8x8xf32> to vector<8x8xf32>
      %c3_120 = arith.constant 3 : index
      %c0_121 = arith.constant 0 : index
      %c0_122 = arith.constant 0 : index
      %192 = vector.load %arg9[%c3_120, %c0_121, %c0_122] : memref<4x8x1xf32, #tpu.memory_space<vmem>>, vector<1x8x1xf32>
      %193 = vector.shape_cast %192 : vector<1x8x1xf32> to vector<8x1xf32>
      %194 = tpu.reciprocal %193 {approx = true} : vector<8x1xf32> -> vector<8x1xf32>
      %195 = vector.broadcast %194 : vector<8x1xf32> to vector<8x8xf32>
      %196 = arith.mulf %191, %195 : vector<8x8xf32>
      %197 = arith.truncf %196 : vector<8x8xf32> to vector<8x8xbf16>
      %198 = tpu.concatenate %173, %181, %189, %197 in 1 : vector<8x8xbf16>, vector<8x8xbf16>, vector<8x8xbf16>, vector<8x8xbf16> -> vector<8x32xbf16>
      %c0_123 = arith.constant 0 : index
      %c0_124 = arith.constant 0 : index
      %c0_125 = arith.constant 0 : index
      %199 = vector.load %arg7[%c0_123, %c0_124, %c0_125] : memref<1x8x32xbf16, #tpu.memory_space<vmem>>, vector<1x8x32xbf16>
      %200 = vector.shape_cast %199 : vector<1x8x32xbf16> to vector<8x32xbf16>
      %201 = vector.shape_cast %198 : vector<8x32xbf16> to vector<1x8x32xbf16>
      tpu.vector_store %arg7[%c0_123, %c0_124, %c0_125], %201 {strides = array<i32>} : memref<1x8x32xbf16, #tpu.memory_space<vmem>>, vector<1x8x32xbf16>,
    } else {
    }
    return
  }
  func.func @transform_0(%arg0: i32, %arg1: i32, %arg2: i32) -> (i32, i32, i32) {
    %c0_i32 = arith.constant 0 : i32
    %c0_i32_0 = arith.constant 0 : i32
    return %arg0, %arg1, %c0_i32 : i32, i32, i32
  }
  func.func @transform_1(%arg0: i32, %arg1: i32, %arg2: i32) -> (i32, i32, i32) {
    %c0_i32 = arith.constant 0 : i32
    %c0_i32_0 = arith.constant 0 : i32
    return %arg0, %arg2, %c0_i32 : i32, i32, i32
  }
  func.func @transform_2(%arg0: i32, %arg1: i32, %arg2: i32) -> (i32, i32, i32) {
    %c0_i32 = arith.constant 0 : i32
    %c0_i32_0 = arith.constant 0 : i32
    return %arg0, %arg2, %c0_i32 : i32, i32, i32
  }
  func.func @transform_3(%arg0: i32, %arg1: i32, %arg2: i32) -> (i32, i32, i32) {
    %c0_i32 = arith.constant 0 : i32
    return %arg0, %arg1, %arg2 : i32, i32, i32
  }
  func.func @transform_4(%arg0: i32, %arg1: i32, %arg2: i32) -> (i32, i32, i32) {
    %c0_i32 = arith.constant 0 : i32
    %c0_i32_0 = arith.constant 0 : i32
    return %arg0, %arg1, %c0_i32 : i32, i32, i32
  }
}

module attributes {stable_mosaic.version = 11 : i64} {
  func.func @_matmul_bias_kernel(%arg0: i32, %arg1: i32, %arg2: i32, %arg3: memref<16x32xbf16, #tpu.memory_space<vmem>>, %arg4: memref<32x32xbf16, #tpu.memory_space<vmem>>, %arg5: memref<1x32xf32, #tpu.memory_space<vmem>>, %arg6: memref<16x32xbf16, #tpu.memory_space<vmem>>, %arg7: memref<16x32xf32, #tpu.memory_space<vmem>>) attributes {dimension_semantics = [#tpu.dimension_semantics<parallel>, #tpu.dimension_semantics<parallel>, #tpu.dimension_semantics<arbitrary>], iteration_bounds = array<i64: 1, 1, 1>, scalar_prefetch = 0 : i64, scratch_operands = 1 : i64, tpu.core_type = #tpu.core_type<tc>, window_params = [{transform_indices = @transform_0, window_bounds = array<i64: 16, 32>}, {transform_indices = @transform_1, window_bounds = array<i64: 32, 32>}, {transform_indices = @transform_2, window_bounds = array<i64: 1, 32>}, {transform_indices = @transform_3, window_bounds = array<i64: 16, 32>}]} {
    %c0_i32 = arith.constant 0 : i32
    %0 = arith.cmpi eq, %arg2, %c0_i32 : i32
    %1 = arith.extui %0 : i1 to i32
    %c0_i32_0 = arith.constant 0 : i32
    %2 = arith.cmpi ne, %1, %c0_i32_0 : i32
    scf.if %2 {
      %cst_10 = arith.constant 0.000000e+00 : f32
      %12 = vector.broadcast %cst_10 : f32 to vector<16x32xf32>
      %c0_11 = arith.constant 0 : index
      %c0_12 = arith.constant 0 : index
      %13 = vector.load %arg7[%c0_11, %c0_12] : memref<16x32xf32, #tpu.memory_space<vmem>>, vector<16x32xf32>
      tpu.vector_store %arg7[%c0_11, %c0_12], %12 {strides = array<i32>} : memref<16x32xf32, #tpu.memory_space<vmem>>, vector<16x32xf32>,
    } else {
    }
    %c0 = arith.constant 0 : index
    %c0_1 = arith.constant 0 : index
    %3 = vector.load %arg7[%c0, %c0_1] : memref<16x32xf32, #tpu.memory_space<vmem>>, vector<16x32xf32>
    %c0_2 = arith.constant 0 : index
    %c0_3 = arith.constant 0 : index
    %4 = vector.load %arg3[%c0_2, %c0_3] : memref<16x32xbf16, #tpu.memory_space<vmem>>, vector<16x32xbf16>
    %c0_4 = arith.constant 0 : index
    %c0_5 = arith.constant 0 : index
    %5 = vector.load %arg4[%c0_4, %c0_5] : memref<32x32xbf16, #tpu.memory_space<vmem>>, vector<32x32xbf16>
    %cst = arith.constant dense<0.000000e+00> : vector<16x32xf32>
    %6 = tpu.matmul %4, %5, %cst {dimension_numbers = #tpu.dot_dimension_numbers<[1], [0], [0], [1], [0, 0, 1, 1], [], []>} : vector<16x32xbf16>, vector<32x32xbf16>, vector<16x32xf32> -> vector<16x32xf32>
    %7 = arith.addf %3, %6 : vector<16x32xf32>
    %c0_6 = arith.constant 0 : index
    %c0_7 = arith.constant 0 : index
    %8 = vector.load %arg7[%c0_6, %c0_7] : memref<16x32xf32, #tpu.memory_space<vmem>>, vector<16x32xf32>
    tpu.vector_store %arg7[%c0_6, %c0_7], %7 {strides = array<i32>} : memref<16x32xf32, #tpu.memory_space<vmem>>, vector<16x32xf32>,
    %c0_i32_8 = arith.constant 0 : i32
    %9 = arith.cmpi eq, %arg2, %c0_i32_8 : i32
    %10 = arith.extui %9 : i1 to i32
    %c0_i32_9 = arith.constant 0 : i32
    %11 = arith.cmpi ne, %10, %c0_i32_9 : i32
    scf.if %11 {
      %c0_10 = arith.constant 0 : index
      %c0_11 = arith.constant 0 : index
      %12 = vector.load %arg7[%c0_10, %c0_11] : memref<16x32xf32, #tpu.memory_space<vmem>>, vector<16x32xf32>
      %c0_12 = arith.constant 0 : index
      %c0_13 = arith.constant 0 : index
      %13 = vector.load %arg5[%c0_12, %c0_13] : memref<1x32xf32, #tpu.memory_space<vmem>>, vector<1x32xf32>
      %14 = vector.broadcast %13 : vector<1x32xf32> to vector<16x32xf32>
      %15 = arith.addf %12, %14 : vector<16x32xf32>
      %16 = arith.truncf %15 : vector<16x32xf32> to vector<16x32xbf16>
      %c0_14 = arith.constant 0 : index
      %c0_15 = arith.constant 0 : index
      %17 = vector.load %arg6[%c0_14, %c0_15] : memref<16x32xbf16, #tpu.memory_space<vmem>>, vector<16x32xbf16>
      tpu.vector_store %arg6[%c0_14, %c0_15], %16 {strides = array<i32>} : memref<16x32xbf16, #tpu.memory_space<vmem>>, vector<16x32xbf16>,
    } else {
    }
    return
  }
  func.func @transform_0(%arg0: i32, %arg1: i32, %arg2: i32) -> (i32, i32) {
    %c0_i32 = arith.constant 0 : i32
    return %arg0, %arg2 : i32, i32
  }
  func.func @transform_1(%arg0: i32, %arg1: i32, %arg2: i32) -> (i32, i32) {
    %c0_i32 = arith.constant 0 : i32
    return %arg2, %arg1 : i32, i32
  }
  func.func @transform_2(%arg0: i32, %arg1: i32, %arg2: i32) -> (i32, i32) {
    %c0_i32 = arith.constant 0 : i32
    %c0_i32_0 = arith.constant 0 : i32
    return %c0_i32, %arg1 : i32, i32
  }
  func.func @transform_3(%arg0: i32, %arg1: i32, %arg2: i32) -> (i32, i32) {
    %c0_i32 = arith.constant 0 : i32
    return %arg0, %arg1 : i32, i32
  }
}

module attributes {stable_mosaic.version = 11 : i64} {
  func.func @_matmul_bias_kernel(%arg0: i32, %arg1: i32, %arg2: i32, %arg3: memref<16x32xbf16, #tpu.memory_space<vmem>>, %arg4: memref<32x64xbf16, #tpu.memory_space<vmem>>, %arg5: memref<1x64xf32, #tpu.memory_space<vmem>>, %arg6: memref<16x64xbf16, #tpu.memory_space<vmem>>, %arg7: memref<16x64xf32, #tpu.memory_space<vmem>>) attributes {dimension_semantics = [#tpu.dimension_semantics<parallel>, #tpu.dimension_semantics<parallel>, #tpu.dimension_semantics<arbitrary>], iteration_bounds = array<i64: 1, 1, 1>, scalar_prefetch = 0 : i64, scratch_operands = 1 : i64, tpu.core_type = #tpu.core_type<tc>, window_params = [{transform_indices = @transform_0, window_bounds = array<i64: 16, 32>}, {transform_indices = @transform_1, window_bounds = array<i64: 32, 64>}, {transform_indices = @transform_2, window_bounds = array<i64: 1, 64>}, {transform_indices = @transform_3, window_bounds = array<i64: 16, 64>}]} {
    %c0_i32 = arith.constant 0 : i32
    %0 = arith.cmpi eq, %arg2, %c0_i32 : i32
    %1 = arith.extui %0 : i1 to i32
    %c0_i32_0 = arith.constant 0 : i32
    %2 = arith.cmpi ne, %1, %c0_i32_0 : i32
    scf.if %2 {
      %cst_10 = arith.constant 0.000000e+00 : f32
      %12 = vector.broadcast %cst_10 : f32 to vector<16x64xf32>
      %c0_11 = arith.constant 0 : index
      %c0_12 = arith.constant 0 : index
      %13 = vector.load %arg7[%c0_11, %c0_12] : memref<16x64xf32, #tpu.memory_space<vmem>>, vector<16x64xf32>
      tpu.vector_store %arg7[%c0_11, %c0_12], %12 {strides = array<i32>} : memref<16x64xf32, #tpu.memory_space<vmem>>, vector<16x64xf32>,
    } else {
    }
    %c0 = arith.constant 0 : index
    %c0_1 = arith.constant 0 : index
    %3 = vector.load %arg7[%c0, %c0_1] : memref<16x64xf32, #tpu.memory_space<vmem>>, vector<16x64xf32>
    %c0_2 = arith.constant 0 : index
    %c0_3 = arith.constant 0 : index
    %4 = vector.load %arg3[%c0_2, %c0_3] : memref<16x32xbf16, #tpu.memory_space<vmem>>, vector<16x32xbf16>
    %c0_4 = arith.constant 0 : index
    %c0_5 = arith.constant 0 : index
    %5 = vector.load %arg4[%c0_4, %c0_5] : memref<32x64xbf16, #tpu.memory_space<vmem>>, vector<32x64xbf16>
    %cst = arith.constant dense<0.000000e+00> : vector<16x64xf32>
    %6 = tpu.matmul %4, %5, %cst {dimension_numbers = #tpu.dot_dimension_numbers<[1], [0], [0], [1], [0, 0, 1, 1], [], []>} : vector<16x32xbf16>, vector<32x64xbf16>, vector<16x64xf32> -> vector<16x64xf32>
    %7 = arith.addf %3, %6 : vector<16x64xf32>
    %c0_6 = arith.constant 0 : index
    %c0_7 = arith.constant 0 : index
    %8 = vector.load %arg7[%c0_6, %c0_7] : memref<16x64xf32, #tpu.memory_space<vmem>>, vector<16x64xf32>
    tpu.vector_store %arg7[%c0_6, %c0_7], %7 {strides = array<i32>} : memref<16x64xf32, #tpu.memory_space<vmem>>, vector<16x64xf32>,
    %c0_i32_8 = arith.constant 0 : i32
    %9 = arith.cmpi eq, %arg2, %c0_i32_8 : i32
    %10 = arith.extui %9 : i1 to i32
    %c0_i32_9 = arith.constant 0 : i32
    %11 = arith.cmpi ne, %10, %c0_i32_9 : i32
    scf.if %11 {
      %c0_10 = arith.constant 0 : index
      %c0_11 = arith.constant 0 : index
      %12 = vector.load %arg7[%c0_10, %c0_11] : memref<16x64xf32, #tpu.memory_space<vmem>>, vector<16x64xf32>
      %c0_12 = arith.constant 0 : index
      %c0_13 = arith.constant 0 : index
      %13 = vector.load %arg5[%c0_12, %c0_13] : memref<1x64xf32, #tpu.memory_space<vmem>>, vector<1x64xf32>
      %14 = vector.broadcast %13 : vector<1x64xf32> to vector<16x64xf32>
      %15 = arith.addf %12, %14 : vector<16x64xf32>
      %16 = arith.truncf %15 : vector<16x64xf32> to vector<16x64xbf16>
      %c0_14 = arith.constant 0 : index
      %c0_15 = arith.constant 0 : index
      %17 = vector.load %arg6[%c0_14, %c0_15] : memref<16x64xbf16, #tpu.memory_space<vmem>>, vector<16x64xbf16>
      tpu.vector_store %arg6[%c0_14, %c0_15], %16 {strides = array<i32>} : memref<16x64xbf16, #tpu.memory_space<vmem>>, vector<16x64xbf16>,
    } else {
    }
    return
  }
  func.func @transform_0(%arg0: i32, %arg1: i32, %arg2: i32) -> (i32, i32) {
    %c0_i32 = arith.constant 0 : i32
    return %arg0, %arg2 : i32, i32
  }
  func.func @transform_1(%arg0: i32, %arg1: i32, %arg2: i32) -> (i32, i32) {
    %c0_i32 = arith.constant 0 : i32
    return %arg2, %arg1 : i32, i32
  }
  func.func @transform_2(%arg0: i32, %arg1: i32, %arg2: i32) -> (i32, i32) {
    %c0_i32 = arith.constant 0 : i32
    %c0_i32_0 = arith.constant 0 : i32
    return %c0_i32, %arg1 : i32, i32
  }
  func.func @transform_3(%arg0: i32, %arg1: i32, %arg2: i32) -> (i32, i32) {
    %c0_i32 = arith.constant 0 : i32
    return %arg0, %arg1 : i32, i32
  }
}

module attributes {stable_mosaic.version = 11 : i64} {
  func.func @_flash_kernel(%arg0: i32, %arg1: i32, %arg2: i32, %arg3: memref<1x8x32xbf16, #tpu.memory_space<vmem>>, %arg4: memref<1x8x32xbf16, #tpu.memory_space<vmem>>, %arg5: memref<1x8x32xbf16, #tpu.memory_space<vmem>>, %arg6: memref<1x1x8xf32, #tpu.memory_space<vmem>>, %arg7: memref<1x8x32xbf16, #tpu.memory_space<vmem>>, %arg8: memref<4x8x1xf32, #tpu.memory_space<vmem>>, %arg9: memref<4x8x1xf32, #tpu.memory_space<vmem>>, %arg10: memref<4x8x8xf32, #tpu.memory_space<vmem>>) attributes {dimension_semantics = [#tpu.dimension_semantics<parallel>, #tpu.dimension_semantics<parallel>, #tpu.dimension_semantics<arbitrary>], iteration_bounds = array<i64: 2, 1, 1>, scalar_prefetch = 0 : i64, scratch_operands = 3 : i64, tpu.core_type = #tpu.core_type<tc>, window_params = [{transform_indices = @transform_0, window_bounds = array<i64: 1, 8, 32>}, {transform_indices = @transform_1, window_bounds = array<i64: 1, 8, 32>}, {transform_indices = @transform_2, window_bounds = array<i64: 1, 8, 32>}, {transform_indices = @transform_3, window_bounds = array<i64: 1, 1, 8>}, {transform_indices = @transform_4, window_bounds = array<i64: 1, 8, 32>}]} {
    %c0_i32 = arith.constant 0 : i32
    %0 = arith.cmpi eq, %arg2, %c0_i32 : i32
    %1 = arith.extui %0 : i1 to i32
    %c0_i32_0 = arith.constant 0 : i32
    %2 = arith.cmpi ne, %1, %c0_i32_0 : i32
    scf.if %2 {
      %cst_99 = arith.constant 0xFF800000 : f32
      %170 = vector.broadcast %cst_99 : f32 to vector<4x8x1xf32>
      %c0_100 = arith.constant 0 : index
      %c0_101 = arith.constant 0 : index
      %c0_102 = arith.constant 0 : index
      %171 = vector.load %arg8[%c0_100, %c0_101, %c0_102] : memref<4x8x1xf32, #tpu.memory_space<vmem>>, vector<4x8x1xf32>
      tpu.vector_store %arg8[%c0_100, %c0_101, %c0_102], %170 {strides = array<i32>} : memref<4x8x1xf32, #tpu.memory_space<vmem>>, vector<4x8x1xf32>,
      %cst_103 = arith.constant 0.000000e+00 : f32
      %172 = vector.broadcast %cst_103 : f32 to vector<4x8x1xf32>
      %c0_104 = arith.constant 0 : index
      %c0_105 = arith.constant 0 : index
      %c0_106 = arith.constant 0 : index
      %173 = vector.load %arg9[%c0_104, %c0_105, %c0_106] : memref<4x8x1xf32, #tpu.memory_space<vmem>>, vector<4x8x1xf32>
      tpu.vector_store %arg9[%c0_104, %c0_105, %c0_106], %172 {strides = array<i32>} : memref<4x8x1xf32, #tpu.memory_space<vmem>>, vector<4x8x1xf32>,
      %cst_107 = arith.constant 0.000000e+00 : f32
      %174 = vector.broadcast %cst_107 : f32 to vector<4x8x8xf32>
      %c0_108 = arith.constant 0 : index
      %c0_109 = arith.constant 0 : index
      %c0_110 = arith.constant 0 : index
      %175 = vector.load %arg10[%c0_108, %c0_109, %c0_110] : memref<4x8x8xf32, #tpu.memory_space<vmem>>, vector<4x8x8xf32>
      tpu.vector_store %arg10[%c0_108, %c0_109, %c0_110], %174 {strides = array<i32>} : memref<4x8x8xf32, #tpu.memory_space<vmem>>, vector<4x8x8xf32>,
    } else {
    }
    %c0 = arith.constant 0 : index
    %c0_1 = arith.constant 0 : index
    %c0_2 = arith.constant 0 : index
    %3 = vector.load %arg3[%c0, %c0_1, %c0_2] : memref<1x8x32xbf16, #tpu.memory_space<vmem>>, vector<1x8x32xbf16>
    %4 = vector.shape_cast %3 : vector<1x8x32xbf16> to vector<8x32xbf16>
    %5 = arith.extf %4 : vector<8x32xbf16> to vector<8x32xf32>
    %cst = arith.constant 0.353553385 : f32
    %6 = vector.broadcast %cst : f32 to vector<8x32xf32>
    %7 = arith.mulf %5, %6 : vector<8x32xf32>
    %8 = arith.truncf %7 : vector<8x32xf32> to vector<8x32xbf16>
    %c0_3 = arith.constant 0 : index
    %c0_4 = arith.constant 0 : index
    %c0_5 = arith.constant 0 : index
    %9 = vector.load %arg4[%c0_3, %c0_4, %c0_5] : memref<1x8x32xbf16, #tpu.memory_space<vmem>>, vector<1x8x32xbf16>
    %10 = vector.shape_cast %9 : vector<1x8x32xbf16> to vector<8x32xbf16>
    %c0_6 = arith.constant 0 : index
    %c0_7 = arith.constant 0 : index
    %c0_8 = arith.constant 0 : index
    %11 = vector.load %arg5[%c0_6, %c0_7, %c0_8] : memref<1x8x32xbf16, #tpu.memory_space<vmem>>, vector<1x8x32xbf16>
    %12 = vector.shape_cast %11 : vector<1x8x32xbf16> to vector<8x32xbf16>
    %c0_9 = arith.constant 0 : index
    %c0_10 = arith.constant 0 : index
    %c0_11 = arith.constant 0 : index
    %13 = vector.load %arg6[%c0_9, %c0_10, %c0_11] : memref<1x1x8xf32, #tpu.memory_space<vmem>>, vector<1x1x8xf32>
    %14 = vector.shape_cast %13 : vector<1x1x8xf32> to vector<1x8xf32>
    %15 = vector.extract_strided_slice %8 {offsets = [0, 0], sizes = [8, 8], strides = [1, 1]} : vector<8x32xbf16> to vector<8x8xbf16>
    %16 = vector.extract_strided_slice %10 {offsets = [0, 0], sizes = [8, 8], strides = [1, 1]} : vector<8x32xbf16> to vector<8x8xbf16>
    %cst_12 = arith.constant dense<0.000000e+00> : vector<8x8xf32>
    %17 = tpu.matmul %15, %16, %cst_12 {dimension_numbers = #tpu.dot_dimension_numbers<[1], [1], [0], [0], [0, 0, 1, 0], [], []>} : vector<8x8xbf16>, vector<8x8xbf16>, vector<8x8xf32> -> vector<8x8xf32>
    %18 = vector.broadcast %14 : vector<1x8xf32> to vector<8x8xf32>
    %19 = arith.addf %17, %18 : vector<8x8xf32>
    %c0_13 = arith.constant 0 : index
    %c0_14 = arith.constant 0 : index
    %c0_15 = arith.constant 0 : index
    %20 = vector.load %arg8[%c0_13, %c0_14, %c0_15] : memref<4x8x1xf32, #tpu.memory_space<vmem>>, vector<1x8x1xf32>
    %21 = vector.shape_cast %20 : vector<1x8x1xf32> to vector<8x1xf32>
    %cst_16 = arith.constant dense<0xFF800000> : vector<8xf32>
    %22 = vector.multi_reduction <maximumf>, %19, %cst_16 [1] : vector<8x8xf32> to vector<8xf32>
    %23 = vector.shape_cast %22 : vector<8xf32> to vector<8x1xf32>
    %24 = arith.maximumf %21, %23 : vector<8x1xf32>
    %25 = arith.subf %21, %24 : vector<8x1xf32>
    %26 = math.exp %25 : vector<8x1xf32>
    %27 = vector.broadcast %24 : vector<8x1xf32> to vector<8x8xf32>
    %28 = arith.subf %19, %27 : vector<8x8xf32>
    %29 = math.exp %28 : vector<8x8xf32>
    %c0_17 = arith.constant 0 : index
    %c0_18 = arith.constant 0 : index
    %c0_19 = arith.constant 0 : index
    %30 = vector.load %arg9[%c0_17, %c0_18, %c0_19] : memref<4x8x1xf32, #tpu.memory_space<vmem>>, vector<1x8x1xf32>
    %31 = vector.shape_cast %30 : vector<1x8x1xf32> to vector<8x1xf32>
    %32 = arith.mulf %26, %31 : vector<8x1xf32>
    %cst_20 = arith.constant dense<0.000000e+00> : vector<8xf32>
    %33 = vector.multi_reduction <add>, %29, %cst_20 [1] : vector<8x8xf32> to vector<8xf32>
    %34 = vector.shape_cast %33 : vector<8xf32> to vector<8x1xf32>
    %35 = arith.addf %32, %34 : vector<8x1xf32>
    %c0_21 = arith.constant 0 : index
    %c0_22 = arith.constant 0 : index
    %c0_23 = arith.constant 0 : index
    %36 = vector.load %arg9[%c0_21, %c0_22, %c0_23] : memref<4x8x1xf32, #tpu.memory_space<vmem>>, vector<1x8x1xf32>
    %37 = vector.shape_cast %36 : vector<1x8x1xf32> to vector<8x1xf32>
    %38 = vector.shape_cast %35 : vector<8x1xf32> to vector<1x8x1xf32>
    tpu.vector_store %arg9[%c0_21, %c0_22, %c0_23], %38 {strides = array<i32>} : memref<4x8x1xf32, #tpu.memory_space<vmem>>, vector<1x8x1xf32>,
    %c0_24 = arith.constant 0 : index
    %c0_25 = arith.constant 0 : index
    %c0_26 = arith.constant 0 : index
    %39 = vector.load %arg10[%c0_24, %c0_25, %c0_26] : memref<4x8x8xf32, #tpu.memory_space<vmem>>, vector<1x8x8xf32>
    %40 = vector.shape_cast %39 : vector<1x8x8xf32> to vector<8x8xf32>
    %41 = vector.broadcast %26 : vector<8x1xf32> to vector<8x8xf32>
    %42 = arith.mulf %41, %40 : vector<8x8xf32>
    %43 = arith.truncf %29 : vector<8x8xf32> to vector<8x8xbf16>
    %44 = vector.extract_strided_slice %12 {offsets = [0, 0], sizes = [8, 8], strides = [1, 1]} : vector<8x32xbf16> to vector<8x8xbf16>
    %cst_27 = arith.constant dense<0.000000e+00> : vector<8x8xf32>
    %45 = tpu.matmul %43, %44, %cst_27 {dimension_numbers = #tpu.dot_dimension_numbers<[1], [0], [0], [1], [0, 0, 1, 1], [], []>} : vector<8x8xbf16>, vector<8x8xbf16>, vector<8x8xf32> -> vector<8x8xf32>
    %46 = arith.addf %42, %45 : vector<8x8xf32>
    %c0_28 = arith.constant 0 : index
    %c0_29 = arith.constant 0 : index
    %c0_30 = arith.constant 0 : index
    %47 = vector.load %arg10[%c0_28, %c0_29, %c0_30] : memref<4x8x8xf32, #tpu.memory_space<vmem>>, vector<1x8x8xf32>
    %48 = vector.shape_cast %47 : vector<1x8x8xf32> to vector<8x8xf32>
    %49 = vector.shape_cast %46 : vector<8x8xf32> to vector<1x8x8xf32>
    tpu.vector_store %arg10[%c0_28, %c0_29, %c0_30], %49 {strides = array<i32>} : memref<4x8x8xf32, #tpu.memory_space<vmem>>, vector<1x8x8xf32>,
    %c0_31 = arith.constant 0 : index
    %c0_32 = arith.constant 0 : index
    %c0_33 = arith.constant 0 : index
    %50 = vector.load %arg8[%c0_31, %c0_32, %c0_33] : memref<4x8x1xf32, #tpu.memory_space<vmem>>, vector<1x8x1xf32>
    %51 = vector.shape_cast %50 : vector<1x8x1xf32> to vector<8x1xf32>
    %52 = vector.shape_cast %24 : vector<8x1xf32> to vector<1x8x1xf32>
    tpu.vector_store %arg8[%c0_31, %c0_32, %c0_33], %52 {strides = array<i32>} : memref<4x8x1xf32, #tpu.memory_space<vmem>>, vector<1x8x1xf32>,
    %53 = vector.extract_strided_slice %8 {offsets = [0, 8], sizes = [8, 8], strides = [1, 1]} : vector<8x32xbf16> to vector<8x8xbf16>
    %54 = vector.extract_strided_slice %10 {offsets = [0, 8], sizes = [8, 8], strides = [1, 1]} : vector<8x32xbf16> to vector<8x8xbf16>
    %cst_34 = arith.constant dense<0.000000e+00> : vector<8x8xf32>
    %55 = tpu.matmul %53, %54, %cst_34 {dimension_numbers = #tpu.dot_dimension_numbers<[1], [1], [0], [0], [0, 0, 1, 0], [], []>} : vector<8x8xbf16>, vector<8x8xbf16>, vector<8x8xf32> -> vector<8x8xf32>
    %56 = vector.broadcast %14 : vector<1x8xf32> to vector<8x8xf32>
    %57 = arith.addf %55, %56 : vector<8x8xf32>
    %c1 = arith.constant 1 : index
    %c0_35 = arith.constant 0 : index
    %c0_36 = arith.constant 0 : index
    %58 = vector.load %arg8[%c1, %c0_35, %c0_36] : memref<4x8x1xf32, #tpu.memory_space<vmem>>, vector<1x8x1xf32>
    %59 = vector.shape_cast %58 : vector<1x8x1xf32> to vector<8x1xf32>
    %cst_37 = arith.constant dense<0xFF800000> : vector<8xf32>
    %60 = vector.multi_reduction <maximumf>, %57, %cst_37 [1] : vector<8x8xf32> to vector<8xf32>
    %61 = vector.shape_cast %60 : vector<8xf32> to vector<8x1xf32>
    %62 = arith.maximumf %59, %61 : vector<8x1xf32>
    %63 = arith.subf %59, %62 : vector<8x1xf32>
    %64 = math.exp %63 : vector<8x1xf32>
    %65 = vector.broadcast %62 : vector<8x1xf32> to vector<8x8xf32>
    %66 = arith.subf %57, %65 : vector<8x8xf32>
    %67 = math.exp %66 : vector<8x8xf32>
    %c1_38 = arith.constant 1 : index
    %c0_39 = arith.constant 0 : index
    %c0_40 = arith.constant 0 : index
    %68 = vector.load %arg9[%c1_38, %c0_39, %c0_40] : memref<4x8x1xf32, #tpu.memory_space<vmem>>, vector<1x8x1xf32>
    %69 = vector.shape_cast %68 : vector<1x8x1xf32> to vector<8x1xf32>
    %70 = arith.mulf %64, %69 : vector<8x1xf32>
    %cst_41 = arith.constant dense<0.000000e+00> : vector<8xf32>
    %71 = vector.multi_reduction <add>, %67, %cst_41 [1] : vector<8x8xf32> to vector<8xf32>
    %72 = vector.shape_cast %71 : vector<8xf32> to vector<8x1xf32>
    %73 = arith.addf %70, %72 : vector<8x1xf32>
    %c1_42 = arith.constant 1 : index
    %c0_43 = arith.constant 0 : index
    %c0_44 = arith.constant 0 : index
    %74 = vector.load %arg9[%c1_42, %c0_43, %c0_44] : memref<4x8x1xf32, #tpu.memory_space<vmem>>, vector<1x8x1xf32>
    %75 = vector.shape_cast %74 : vector<1x8x1xf32> to vector<8x1xf32>
    %76 = vector.shape_cast %73 : vector<8x1xf32> to vector<1x8x1xf32>
    tpu.vector_store %arg9[%c1_42, %c0_43, %c0_44], %76 {strides = array<i32>} : memref<4x8x1xf32, #tpu.memory_space<vmem>>, vector<1x8x1xf32>,
    %c1_45 = arith.constant 1 : index
    %c0_46 = arith.constant 0 : index
    %c0_47 = arith.constant 0 : index
    %77 = vector.load %arg10[%c1_45, %c0_46, %c0_47] : memref<4x8x8xf32, #tpu.memory_space<vmem>>, vector<1x8x8xf32>
    %78 = vector.shape_cast %77 : vector<1x8x8xf32> to vector<8x8xf32>
    %79 = vector.broadcast %64 : vector<8x1xf32> to vector<8x8xf32>
    %80 = arith.mulf %79, %78 : vector<8x8xf32>
    %81 = arith.truncf %67 : vector<8x8xf32> to vector<8x8xbf16>
    %82 = vector.extract_strided_slice %12 {offsets = [0, 8], sizes = [8, 8], strides = [1, 1]} : vector<8x32xbf16> to vector<8x8xbf16>
    %cst_48 = arith.constant dense<0.000000e+00> : vector<8x8xf32>
    %83 = tpu.matmul %81, %82, %cst_48 {dimension_numbers = #tpu.dot_dimension_numbers<[1], [0], [0], [1], [0, 0, 1, 1], [], []>} : vector<8x8xbf16>, vector<8x8xbf16>, vector<8x8xf32> -> vector<8x8xf32>
    %84 = arith.addf %80, %83 : vector<8x8xf32>
    %c1_49 = arith.constant 1 : index
    %c0_50 = arith.constant 0 : index
    %c0_51 = arith.constant 0 : index
    %85 = vector.load %arg10[%c1_49, %c0_50, %c0_51] : memref<4x8x8xf32, #tpu.memory_space<vmem>>, vector<1x8x8xf32>
    %86 = vector.shape_cast %85 : vector<1x8x8xf32> to vector<8x8xf32>
    %87 = vector.shape_cast %84 : vector<8x8xf32> to vector<1x8x8xf32>
    tpu.vector_store %arg10[%c1_49, %c0_50, %c0_51], %87 {strides = array<i32>} : memref<4x8x8xf32, #tpu.memory_space<vmem>>, vector<1x8x8xf32>,
    %c1_52 = arith.constant 1 : index
    %c0_53 = arith.constant 0 : index
    %c0_54 = arith.constant 0 : index
    %88 = vector.load %arg8[%c1_52, %c0_53, %c0_54] : memref<4x8x1xf32, #tpu.memory_space<vmem>>, vector<1x8x1xf32>
    %89 = vector.shape_cast %88 : vector<1x8x1xf32> to vector<8x1xf32>
    %90 = vector.shape_cast %62 : vector<8x1xf32> to vector<1x8x1xf32>
    tpu.vector_store %arg8[%c1_52, %c0_53, %c0_54], %90 {strides = array<i32>} : memref<4x8x1xf32, #tpu.memory_space<vmem>>, vector<1x8x1xf32>,
    %91 = vector.extract_strided_slice %8 {offsets = [0, 16], sizes = [8, 8], strides = [1, 1]} : vector<8x32xbf16> to vector<8x8xbf16>
    %92 = vector.extract_strided_slice %10 {offsets = [0, 16], sizes = [8, 8], strides = [1, 1]} : vector<8x32xbf16> to vector<8x8xbf16>
    %cst_55 = arith.constant dense<0.000000e+00> : vector<8x8xf32>
    %93 = tpu.matmul %91, %92, %cst_55 {dimension_numbers = #tpu.dot_dimension_numbers<[1], [1], [0], [0], [0, 0, 1, 0], [], []>} : vector<8x8xbf16>, vector<8x8xbf16>, vector<8x8xf32> -> vector<8x8xf32>
    %94 = vector.broadcast %14 : vector<1x8xf32> to vector<8x8xf32>
    %95 = arith.addf %93, %94 : vector<8x8xf32>
    %c2 = arith.constant 2 : index
    %c0_56 = arith.constant 0 : index
    %c0_57 = arith.constant 0 : index
    %96 = vector.load %arg8[%c2, %c0_56, %c0_57] : memref<4x8x1xf32, #tpu.memory_space<vmem>>, vector<1x8x1xf32>
    %97 = vector.shape_cast %96 : vector<1x8x1xf32> to vector<8x1xf32>
    %cst_58 = arith.constant dense<0xFF800000> : vector<8xf32>
    %98 = vector.multi_reduction <maximumf>, %95, %cst_58 [1] : vector<8x8xf32> to vector<8xf32>
    %99 = vector.shape_cast %98 : vector<8xf32> to vector<8x1xf32>
    %100 = arith.maximumf %97, %99 : vector<8x1xf32>
    %101 = arith.subf %97, %100 : vector<8x1xf32>
    %102 = math.exp %101 : vector<8x1xf32>
    %103 = vector.broadcast %100 : vector<8x1xf32> to vector<8x8xf32>
    %104 = arith.subf %95, %103 : vector<8x8xf32>
    %105 = math.exp %104 : vector<8x8xf32>
    %c2_59 = arith.constant 2 : index
    %c0_60 = arith.constant 0 : index
    %c0_61 = arith.constant 0 : index
    %106 = vector.load %arg9[%c2_59, %c0_60, %c0_61] : memref<4x8x1xf32, #tpu.memory_space<vmem>>, vector<1x8x1xf32>
    %107 = vector.shape_cast %106 : vector<1x8x1xf32> to vector<8x1xf32>
    %108 = arith.mulf %102, %107 : vector<8x1xf32>
    %cst_62 = arith.constant dense<0.000000e+00> : vector<8xf32>
    %109 = vector.multi_reduction <add>, %105, %cst_62 [1] : vector<8x8xf32> to vector<8xf32>
    %110 = vector.shape_cast %109 : vector<8xf32> to vector<8x1xf32>
    %111 = arith.addf %108, %110 : vector<8x1xf32>
    %c2_63 = arith.constant 2 : index
    %c0_64 = arith.constant 0 : index
    %c0_65 = arith.constant 0 : index
    %112 = vector.load %arg9[%c2_63, %c0_64, %c0_65] : memref<4x8x1xf32, #tpu.memory_space<vmem>>, vector<1x8x1xf32>
    %113 = vector.shape_cast %112 : vector<1x8x1xf32> to vector<8x1xf32>
    %114 = vector.shape_cast %111 : vector<8x1xf32> to vector<1x8x1xf32>
    tpu.vector_store %arg9[%c2_63, %c0_64, %c0_65], %114 {strides = array<i32>} : memref<4x8x1xf32, #tpu.memory_space<vmem>>, vector<1x8x1xf32>,
    %c2_66 = arith.constant 2 : index
    %c0_67 = arith.constant 0 : index
    %c0_68 = arith.constant 0 : index
    %115 = vector.load %arg10[%c2_66, %c0_67, %c0_68] : memref<4x8x8xf32, #tpu.memory_space<vmem>>, vector<1x8x8xf32>
    %116 = vector.shape_cast %115 : vector<1x8x8xf32> to vector<8x8xf32>
    %117 = vector.broadcast %102 : vector<8x1xf32> to vector<8x8xf32>
    %118 = arith.mulf %117, %116 : vector<8x8xf32>
    %119 = arith.truncf %105 : vector<8x8xf32> to vector<8x8xbf16>
    %120 = vector.extract_strided_slice %12 {offsets = [0, 16], sizes = [8, 8], strides = [1, 1]} : vector<8x32xbf16> to vector<8x8xbf16>
    %cst_69 = arith.constant dense<0.000000e+00> : vector<8x8xf32>
    %121 = tpu.matmul %119, %120, %cst_69 {dimension_numbers = #tpu.dot_dimension_numbers<[1], [0], [0], [1], [0, 0, 1, 1], [], []>} : vector<8x8xbf16>, vector<8x8xbf16>, vector<8x8xf32> -> vector<8x8xf32>
    %122 = arith.addf %118, %121 : vector<8x8xf32>
    %c2_70 = arith.constant 2 : index
    %c0_71 = arith.constant 0 : index
    %c0_72 = arith.constant 0 : index
    %123 = vector.load %arg10[%c2_70, %c0_71, %c0_72] : memref<4x8x8xf32, #tpu.memory_space<vmem>>, vector<1x8x8xf32>
    %124 = vector.shape_cast %123 : vector<1x8x8xf32> to vector<8x8xf32>
    %125 = vector.shape_cast %122 : vector<8x8xf32> to vector<1x8x8xf32>
    tpu.vector_store %arg10[%c2_70, %c0_71, %c0_72], %125 {strides = array<i32>} : memref<4x8x8xf32, #tpu.memory_space<vmem>>, vector<1x8x8xf32>,
    %c2_73 = arith.constant 2 : index
    %c0_74 = arith.constant 0 : index
    %c0_75 = arith.constant 0 : index
    %126 = vector.load %arg8[%c2_73, %c0_74, %c0_75] : memref<4x8x1xf32, #tpu.memory_space<vmem>>, vector<1x8x1xf32>
    %127 = vector.shape_cast %126 : vector<1x8x1xf32> to vector<8x1xf32>
    %128 = vector.shape_cast %100 : vector<8x1xf32> to vector<1x8x1xf32>
    tpu.vector_store %arg8[%c2_73, %c0_74, %c0_75], %128 {strides = array<i32>} : memref<4x8x1xf32, #tpu.memory_space<vmem>>, vector<1x8x1xf32>,
    %129 = vector.extract_strided_slice %8 {offsets = [0, 24], sizes = [8, 8], strides = [1, 1]} : vector<8x32xbf16> to vector<8x8xbf16>
    %130 = vector.extract_strided_slice %10 {offsets = [0, 24], sizes = [8, 8], strides = [1, 1]} : vector<8x32xbf16> to vector<8x8xbf16>
    %cst_76 = arith.constant dense<0.000000e+00> : vector<8x8xf32>
    %131 = tpu.matmul %129, %130, %cst_76 {dimension_numbers = #tpu.dot_dimension_numbers<[1], [1], [0], [0], [0, 0, 1, 0], [], []>} : vector<8x8xbf16>, vector<8x8xbf16>, vector<8x8xf32> -> vector<8x8xf32>
    %132 = vector.broadcast %14 : vector<1x8xf32> to vector<8x8xf32>
    %133 = arith.addf %131, %132 : vector<8x8xf32>
    %c3 = arith.constant 3 : index
    %c0_77 = arith.constant 0 : index
    %c0_78 = arith.constant 0 : index
    %134 = vector.load %arg8[%c3, %c0_77, %c0_78] : memref<4x8x1xf32, #tpu.memory_space<vmem>>, vector<1x8x1xf32>
    %135 = vector.shape_cast %134 : vector<1x8x1xf32> to vector<8x1xf32>
    %cst_79 = arith.constant dense<0xFF800000> : vector<8xf32>
    %136 = vector.multi_reduction <maximumf>, %133, %cst_79 [1] : vector<8x8xf32> to vector<8xf32>
    %137 = vector.shape_cast %136 : vector<8xf32> to vector<8x1xf32>
    %138 = arith.maximumf %135, %137 : vector<8x1xf32>
    %139 = arith.subf %135, %138 : vector<8x1xf32>
    %140 = math.exp %139 : vector<8x1xf32>
    %141 = vector.broadcast %138 : vector<8x1xf32> to vector<8x8xf32>
    %142 = arith.subf %133, %141 : vector<8x8xf32>
    %143 = math.exp %142 : vector<8x8xf32>
    %c3_80 = arith.constant 3 : index
    %c0_81 = arith.constant 0 : index
    %c0_82 = arith.constant 0 : index
    %144 = vector.load %arg9[%c3_80, %c0_81, %c0_82] : memref<4x8x1xf32, #tpu.memory_space<vmem>>, vector<1x8x1xf32>
    %145 = vector.shape_cast %144 : vector<1x8x1xf32> to vector<8x1xf32>
    %146 = arith.mulf %140, %145 : vector<8x1xf32>
    %cst_83 = arith.constant dense<0.000000e+00> : vector<8xf32>
    %147 = vector.multi_reduction <add>, %143, %cst_83 [1] : vector<8x8xf32> to vector<8xf32>
    %148 = vector.shape_cast %147 : vector<8xf32> to vector<8x1xf32>
    %149 = arith.addf %146, %148 : vector<8x1xf32>
    %c3_84 = arith.constant 3 : index
    %c0_85 = arith.constant 0 : index
    %c0_86 = arith.constant 0 : index
    %150 = vector.load %arg9[%c3_84, %c0_85, %c0_86] : memref<4x8x1xf32, #tpu.memory_space<vmem>>, vector<1x8x1xf32>
    %151 = vector.shape_cast %150 : vector<1x8x1xf32> to vector<8x1xf32>
    %152 = vector.shape_cast %149 : vector<8x1xf32> to vector<1x8x1xf32>
    tpu.vector_store %arg9[%c3_84, %c0_85, %c0_86], %152 {strides = array<i32>} : memref<4x8x1xf32, #tpu.memory_space<vmem>>, vector<1x8x1xf32>,
    %c3_87 = arith.constant 3 : index
    %c0_88 = arith.constant 0 : index
    %c0_89 = arith.constant 0 : index
    %153 = vector.load %arg10[%c3_87, %c0_88, %c0_89] : memref<4x8x8xf32, #tpu.memory_space<vmem>>, vector<1x8x8xf32>
    %154 = vector.shape_cast %153 : vector<1x8x8xf32> to vector<8x8xf32>
    %155 = vector.broadcast %140 : vector<8x1xf32> to vector<8x8xf32>
    %156 = arith.mulf %155, %154 : vector<8x8xf32>
    %157 = arith.truncf %143 : vector<8x8xf32> to vector<8x8xbf16>
    %158 = vector.extract_strided_slice %12 {offsets = [0, 24], sizes = [8, 8], strides = [1, 1]} : vector<8x32xbf16> to vector<8x8xbf16>
    %cst_90 = arith.constant dense<0.000000e+00> : vector<8x8xf32>
    %159 = tpu.matmul %157, %158, %cst_90 {dimension_numbers = #tpu.dot_dimension_numbers<[1], [0], [0], [1], [0, 0, 1, 1], [], []>} : vector<8x8xbf16>, vector<8x8xbf16>, vector<8x8xf32> -> vector<8x8xf32>
    %160 = arith.addf %156, %159 : vector<8x8xf32>
    %c3_91 = arith.constant 3 : index
    %c0_92 = arith.constant 0 : index
    %c0_93 = arith.constant 0 : index
    %161 = vector.load %arg10[%c3_91, %c0_92, %c0_93] : memref<4x8x8xf32, #tpu.memory_space<vmem>>, vector<1x8x8xf32>
    %162 = vector.shape_cast %161 : vector<1x8x8xf32> to vector<8x8xf32>
    %163 = vector.shape_cast %160 : vector<8x8xf32> to vector<1x8x8xf32>
    tpu.vector_store %arg10[%c3_91, %c0_92, %c0_93], %163 {strides = array<i32>} : memref<4x8x8xf32, #tpu.memory_space<vmem>>, vector<1x8x8xf32>,
    %c3_94 = arith.constant 3 : index
    %c0_95 = arith.constant 0 : index
    %c0_96 = arith.constant 0 : index
    %164 = vector.load %arg8[%c3_94, %c0_95, %c0_96] : memref<4x8x1xf32, #tpu.memory_space<vmem>>, vector<1x8x1xf32>
    %165 = vector.shape_cast %164 : vector<1x8x1xf32> to vector<8x1xf32>
    %166 = vector.shape_cast %138 : vector<8x1xf32> to vector<1x8x1xf32>
    tpu.vector_store %arg8[%c3_94, %c0_95, %c0_96], %166 {strides = array<i32>} : memref<4x8x1xf32, #tpu.memory_space<vmem>>, vector<1x8x1xf32>,
    %c0_i32_97 = arith.constant 0 : i32
    %167 = arith.cmpi eq, %arg2, %c0_i32_97 : i32
    %168 = arith.extui %167 : i1 to i32
    %c0_i32_98 = arith.constant 0 : i32
    %169 = arith.cmpi ne, %168, %c0_i32_98 : i32
    scf.if %169 {
      %c0_99 = arith.constant 0 : index
      %c0_100 = arith.constant 0 : index
      %c0_101 = arith.constant 0 : index
      %170 = vector.load %arg10[%c0_99, %c0_100, %c0_101] : memref<4x8x8xf32, #tpu.memory_space<vmem>>, vector<1x8x8xf32>
      %171 = vector.shape_cast %170 : vector<1x8x8xf32> to vector<8x8xf32>
      %c0_102 = arith.constant 0 : index
      %c0_103 = arith.constant 0 : index
      %c0_104 = arith.constant 0 : index
      %172 = vector.load %arg9[%c0_102, %c0_103, %c0_104] : memref<4x8x1xf32, #tpu.memory_space<vmem>>, vector<1x8x1xf32>
      %173 = vector.shape_cast %172 : vector<1x8x1xf32> to vector<8x1xf32>
      %174 = tpu.reciprocal %173 {approx = true} : vector<8x1xf32> -> vector<8x1xf32>
      %175 = vector.broadcast %174 : vector<8x1xf32> to vector<8x8xf32>
      %176 = arith.mulf %171, %175 : vector<8x8xf32>
      %177 = arith.truncf %176 : vector<8x8xf32> to vector<8x8xbf16>
      %c1_105 = arith.constant 1 : index
      %c0_106 = arith.constant 0 : index
      %c0_107 = arith.constant 0 : index
      %178 = vector.load %arg10[%c1_105, %c0_106, %c0_107] : memref<4x8x8xf32, #tpu.memory_space<vmem>>, vector<1x8x8xf32>
      %179 = vector.shape_cast %178 : vector<1x8x8xf32> to vector<8x8xf32>
      %c1_108 = arith.constant 1 : index
      %c0_109 = arith.constant 0 : index
      %c0_110 = arith.constant 0 : index
      %180 = vector.load %arg9[%c1_108, %c0_109, %c0_110] : memref<4x8x1xf32, #tpu.memory_space<vmem>>, vector<1x8x1xf32>
      %181 = vector.shape_cast %180 : vector<1x8x1xf32> to vector<8x1xf32>
      %182 = tpu.reciprocal %181 {approx = true} : vector<8x1xf32> -> vector<8x1xf32>
      %183 = vector.broadcast %182 : vector<8x1xf32> to vector<8x8xf32>
      %184 = arith.mulf %179, %183 : vector<8x8xf32>
      %185 = arith.truncf %184 : vector<8x8xf32> to vector<8x8xbf16>
      %c2_111 = arith.constant 2 : index
      %c0_112 = arith.constant 0 : index
      %c0_113 = arith.constant 0 : index
      %186 = vector.load %arg10[%c2_111, %c0_112, %c0_113] : memref<4x8x8xf32, #tpu.memory_space<vmem>>, vector<1x8x8xf32>
      %187 = vector.shape_cast %186 : vector<1x8x8xf32> to vector<8x8xf32>
      %c2_114 = arith.constant 2 : index
      %c0_115 = arith.constant 0 : index
      %c0_116 = arith.constant 0 : index
      %188 = vector.load %arg9[%c2_114, %c0_115, %c0_116] : memref<4x8x1xf32, #tpu.memory_space<vmem>>, vector<1x8x1xf32>
      %189 = vector.shape_cast %188 : vector<1x8x1xf32> to vector<8x1xf32>
      %190 = tpu.reciprocal %189 {approx = true} : vector<8x1xf32> -> vector<8x1xf32>
      %191 = vector.broadcast %190 : vector<8x1xf32> to vector<8x8xf32>
      %192 = arith.mulf %187, %191 : vector<8x8xf32>
      %193 = arith.truncf %192 : vector<8x8xf32> to vector<8x8xbf16>
      %c3_117 = arith.constant 3 : index
      %c0_118 = arith.constant 0 : index
      %c0_119 = arith.constant 0 : index
      %194 = vector.load %arg10[%c3_117, %c0_118, %c0_119] : memref<4x8x8xf32, #tpu.memory_space<vmem>>, vector<1x8x8xf32>
      %195 = vector.shape_cast %194 : vector<1x8x8xf32> to vector<8x8xf32>
      %c3_120 = arith.constant 3 : index
      %c0_121 = arith.constant 0 : index
      %c0_122 = arith.constant 0 : index
      %196 = vector.load %arg9[%c3_120, %c0_121, %c0_122] : memref<4x8x1xf32, #tpu.memory_space<vmem>>, vector<1x8x1xf32>
      %197 = vector.shape_cast %196 : vector<1x8x1xf32> to vector<8x1xf32>
      %198 = tpu.reciprocal %197 {approx = true} : vector<8x1xf32> -> vector<8x1xf32>
      %199 = vector.broadcast %198 : vector<8x1xf32> to vector<8x8xf32>
      %200 = arith.mulf %195, %199 : vector<8x8xf32>
      %201 = arith.truncf %200 : vector<8x8xf32> to vector<8x8xbf16>
      %202 = tpu.concatenate %177, %185, %193, %201 in 1 : vector<8x8xbf16>, vector<8x8xbf16>, vector<8x8xbf16>, vector<8x8xbf16> -> vector<8x32xbf16>
      %c0_123 = arith.constant 0 : index
      %c0_124 = arith.constant 0 : index
      %c0_125 = arith.constant 0 : index
      %203 = vector.load %arg7[%c0_123, %c0_124, %c0_125] : memref<1x8x32xbf16, #tpu.memory_space<vmem>>, vector<1x8x32xbf16>
      %204 = vector.shape_cast %203 : vector<1x8x32xbf16> to vector<8x32xbf16>
      %205 = vector.shape_cast %202 : vector<8x32xbf16> to vector<1x8x32xbf16>
      tpu.vector_store %arg7[%c0_123, %c0_124, %c0_125], %205 {strides = array<i32>} : memref<1x8x32xbf16, #tpu.memory_space<vmem>>, vector<1x8x32xbf16>,
    } else {
    }
    return
  }
  func.func @transform_0(%arg0: i32, %arg1: i32, %arg2: i32) -> (i32, i32, i32) {
    %c0_i32 = arith.constant 0 : i32
    %c0_i32_0 = arith.constant 0 : i32
    return %arg0, %arg1, %c0_i32 : i32, i32, i32
  }
  func.func @transform_1(%arg0: i32, %arg1: i32, %arg2: i32) -> (i32, i32, i32) {
    %c0_i32 = arith.constant 0 : i32
    %c0_i32_0 = arith.constant 0 : i32
    return %arg0, %arg2, %c0_i32 : i32, i32, i32
  }
  func.func @transform_2(%arg0: i32, %arg1: i32, %arg2: i32) -> (i32, i32, i32) {
    %c0_i32 = arith.constant 0 : i32
    %c0_i32_0 = arith.constant 0 : i32
    return %arg0, %arg2, %c0_i32 : i32, i32, i32
  }
  func.func @transform_3(%arg0: i32, %arg1: i32, %arg2: i32) -> (i32, i32, i32) {
    %c0_i32 = arith.constant 0 : i32
    %c0_i32_0 = arith.constant 0 : i32
    return %arg0, %c0_i32, %arg2 : i32, i32, i32
  }
  func.func @transform_4(%arg0: i32, %arg1: i32, %arg2: i32) -> (i32, i32, i32) {
    %c0_i32 = arith.constant 0 : i32
    %c0_i32_0 = arith.constant 0 : i32
    return %arg0, %arg1, %c0_i32 : i32, i32, i32
  }
}

module attributes {stable_mosaic.version = 11 : i64} {
  func.func @_ffn_add_ln_kernel(%arg0: i32, %arg1: i32, %arg2: memref<16x32xbf16, #tpu.memory_space<vmem>>, %arg3: memref<32x64xbf16, #tpu.memory_space<vmem>>, %arg4: memref<1x64xf32, #tpu.memory_space<vmem>>, %arg5: memref<64x32xbf16, #tpu.memory_space<vmem>>, %arg6: memref<1x32xf32, #tpu.memory_space<vmem>>, %arg7: memref<1x32xf32, #tpu.memory_space<vmem>>, %arg8: memref<1x32xf32, #tpu.memory_space<vmem>>, %arg9: memref<16x32xbf16, #tpu.memory_space<vmem>>, %arg10: memref<16x32xf32, #tpu.memory_space<vmem>>) attributes {dimension_semantics = [#tpu.dimension_semantics<parallel>, #tpu.dimension_semantics<arbitrary>], iteration_bounds = array<i64: 1, 1>, scalar_prefetch = 0 : i64, scratch_operands = 1 : i64, tpu.core_type = #tpu.core_type<tc>, window_params = [{transform_indices = @transform_0, window_bounds = array<i64: 16, 32>}, {transform_indices = @transform_1, window_bounds = array<i64: 32, 64>}, {transform_indices = @transform_2, window_bounds = array<i64: 1, 64>}, {transform_indices = @transform_3, window_bounds = array<i64: 64, 32>}, {pipeline_mode = #tpu.pipeline_mode<synchronous>, transform_indices = @transform_4, window_bounds = array<i64: 1, 32>}, {pipeline_mode = #tpu.pipeline_mode<synchronous>, transform_indices = @transform_5, window_bounds = array<i64: 1, 32>}, {pipeline_mode = #tpu.pipeline_mode<synchronous>, transform_indices = @transform_6, window_bounds = array<i64: 1, 32>}, {transform_indices = @transform_7, window_bounds = array<i64: 16, 32>}]} {
    %c0_i32 = arith.constant 0 : i32
    %0 = arith.cmpi eq, %arg1, %c0_i32 : i32
    %1 = arith.extui %0 : i1 to i32
    %c0_i32_0 = arith.constant 0 : i32
    %2 = arith.cmpi ne, %1, %c0_i32_0 : i32
    scf.if %2 {
      %cst_16 = arith.constant 0.000000e+00 : f32
      %20 = vector.broadcast %cst_16 : f32 to vector<16x32xf32>
      %c0_17 = arith.constant 0 : index
      %c0_18 = arith.constant 0 : index
      %21 = vector.load %arg10[%c0_17, %c0_18] : memref<16x32xf32, #tpu.memory_space<vmem>>, vector<16x32xf32>
      tpu.vector_store %arg10[%c0_17, %c0_18], %20 {strides = array<i32>} : memref<16x32xf32, #tpu.memory_space<vmem>>, vector<16x32xf32>,
    } else {
    }
    %c0 = arith.constant 0 : index
    %c0_1 = arith.constant 0 : index
    %3 = vector.load %arg2[%c0, %c0_1] : memref<16x32xbf16, #tpu.memory_space<vmem>>, vector<16x32xbf16>
    %c0_2 = arith.constant 0 : index
    %c0_3 = arith.constant 0 : index
    %4 = vector.load %arg3[%c0_2, %c0_3] : memref<32x64xbf16, #tpu.memory_space<vmem>>, vector<32x64xbf16>
    %cst = arith.constant dense<0.000000e+00> : vector<16x64xf32>
    %5 = tpu.matmul %3, %4, %cst {dimension_numbers = #tpu.dot_dimension_numbers<[1], [0], [0], [1], [0, 0, 1, 1], [], []>} : vector<16x32xbf16>, vector<32x64xbf16>, vector<16x64xf32> -> vector<16x64xf32>
    %c0_4 = arith.constant 0 : index
    %c0_5 = arith.constant 0 : index
    %6 = vector.load %arg4[%c0_4, %c0_5] : memref<1x64xf32, #tpu.memory_space<vmem>>, vector<1x64xf32>
    %7 = vector.broadcast %6 : vector<1x64xf32> to vector<16x64xf32>
    %8 = arith.addf %5, %7 : vector<16x64xf32>
    %cst_6 = arith.constant 0.000000e+00 : f32
    %9 = vector.broadcast %cst_6 : f32 to vector<16x64xf32>
    %10 = arith.maximumf %8, %9 : vector<16x64xf32>
    %c0_7 = arith.constant 0 : index
    %c0_8 = arith.constant 0 : index
    %11 = vector.load %arg10[%c0_7, %c0_8] : memref<16x32xf32, #tpu.memory_space<vmem>>, vector<16x32xf32>
    %12 = arith.truncf %10 : vector<16x64xf32> to vector<16x64xbf16>
    %c0_9 = arith.constant 0 : index
    %c0_10 = arith.constant 0 : index
    %13 = vector.load %arg5[%c0_9, %c0_10] : memref<64x32xbf16, #tpu.memory_space<vmem>>, vector<64x32xbf16>
    %cst_11 = arith.constant dense<0.000000e+00> : vector<16x32xf32>
    %14 = tpu.matmul %12, %13, %cst_11 {dimension_numbers = #tpu.dot_dimension_numbers<[1], [0], [0], [1], [0, 0, 1, 1], [], []>} : vector<16x64xbf16>, vector<64x32xbf16>, vector<16x32xf32> -> vector<16x32xf32>
    %15 = arith.addf %11, %14 : vector<16x32xf32>
    %c0_12 = arith.constant 0 : index
    %c0_13 = arith.constant 0 : index
    %16 = vector.load %arg10[%c0_12, %c0_13] : memref<16x32xf32, #tpu.memory_space<vmem>>, vector<16x32xf32>
    tpu.vector_store %arg10[%c0_12, %c0_13], %15 {strides = array<i32>} : memref<16x32xf32, #tpu.memory_space<vmem>>, vector<16x32xf32>,
    %c0_i32_14 = arith.constant 0 : i32
    %17 = arith.cmpi eq, %arg1, %c0_i32_14 : i32
    %18 = arith.extui %17 : i1 to i32
    %c0_i32_15 = arith.constant 0 : i32
    %19 = arith.cmpi ne, %18, %c0_i32_15 : i32
    scf.if %19 {
      %c0_16 = arith.constant 0 : index
      %c0_17 = arith.constant 0 : index
      %20 = vector.load %arg10[%c0_16, %c0_17] : memref<16x32xf32, #tpu.memory_space<vmem>>, vector<16x32xf32>
      %c0_18 = arith.constant 0 : index
      %c0_19 = arith.constant 0 : index
      %21 = vector.load %arg6[%c0_18, %c0_19] : memref<1x32xf32, #tpu.memory_space<vmem>>, vector<1x32xf32>
      %22 = vector.broadcast %21 : vector<1x32xf32> to vector<16x32xf32>
      %23 = arith.addf %20, %22 : vector<16x32xf32>
      %24 = arith.extf %3 : vector<16x32xbf16> to vector<16x32xf32>
      %25 = arith.addf %23, %24 : vector<16x32xf32>
      %cst_20 = arith.constant dense<0.000000e+00> : vector<16xf32>
      %26 = vector.multi_reduction <add>, %25, %cst_20 [1] : vector<16x32xf32> to vector<16xf32>
      %27 = vector.shape_cast %26 : vector<16xf32> to vector<16x1xf32>
      %cst_21 = arith.constant 3.200000e+01 : f32
      %28 = vector.broadcast %cst_21 : f32 to vector<16x1xf32>
      %29 = arith.divf %27, %28 : vector<16x1xf32>
      %30 = vector.broadcast %29 : vector<16x1xf32> to vector<16x32xf32>
      %31 = arith.subf %25, %30 : vector<16x32xf32>
      %32 = arith.mulf %31, %31 : vector<16x32xf32>
      %cst_22 = arith.constant dense<0.000000e+00> : vector<16xf32>
      %33 = vector.multi_reduction <add>, %32, %cst_22 [1] : vector<16x32xf32> to vector<16xf32>
      %34 = vector.shape_cast %33 : vector<16xf32> to vector<16x1xf32>
      %cst_23 = arith.constant 3.200000e+01 : f32
      %35 = vector.broadcast %cst_23 : f32 to vector<16x1xf32>
      %36 = arith.divf %34, %35 : vector<16x1xf32>
      %cst_24 = arith.constant 9.99999974E-6 : f32
      %37 = vector.broadcast %cst_24 : f32 to vector<16x1xf32>
      %38 = arith.addf %36, %37 : vector<16x1xf32>
      %39 = math.rsqrt %38 : vector<16x1xf32>
      %40 = vector.broadcast %39 : vector<16x1xf32> to vector<16x32xf32>
      %41 = arith.mulf %31, %40 : vector<16x32xf32>
      %c0_25 = arith.constant 0 : index
      %c0_26 = arith.constant 0 : index
      %42 = vector.load %arg7[%c0_25, %c0_26] : memref<1x32xf32, #tpu.memory_space<vmem>>, vector<1x32xf32>
      %43 = vector.broadcast %42 : vector<1x32xf32> to vector<16x32xf32>
      %44 = arith.mulf %41, %43 : vector<16x32xf32>
      %c0_27 = arith.constant 0 : index
      %c0_28 = arith.constant 0 : index
      %45 = vector.load %arg8[%c0_27, %c0_28] : memref<1x32xf32, #tpu.memory_space<vmem>>, vector<1x32xf32>
      %46 = vector.broadcast %45 : vector<1x32xf32> to vector<16x32xf32>
      %47 = arith.addf %44, %46 : vector<16x32xf32>
      %48 = arith.truncf %47 : vector<16x32xf32> to vector<16x32xbf16>
      %c0_29 = arith.constant 0 : index
      %c0_30 = arith.constant 0 : index
      %49 = vector.load %arg9[%c0_29, %c0_30] : memref<16x32xbf16, #tpu.memory_space<vmem>>, vector<16x32xbf16>
      tpu.vector_store %arg9[%c0_29, %c0_30], %48 {strides = array<i32>} : memref<16x32xbf16, #tpu.memory_space<vmem>>, vector<16x32xbf16>,
    } else {
    }
    return
  }
  func.func @transform_0(%arg0: i32, %arg1: i32) -> (i32, i32) {
    %c0_i32 = arith.constant 0 : i32
    %c0_i32_0 = arith.constant 0 : i32
    return %arg0, %c0_i32 : i32, i32
  }
  func.func @transform_1(%arg0: i32, %arg1: i32) -> (i32, i32) {
    %c0_i32 = arith.constant 0 : i32
    %c0_i32_0 = arith.constant 0 : i32
    return %c0_i32, %arg1 : i32, i32
  }
  func.func @transform_2(%arg0: i32, %arg1: i32) -> (i32, i32) {
    %c0_i32 = arith.constant 0 : i32
    %c0_i32_0 = arith.constant 0 : i32
    return %c0_i32, %arg1 : i32, i32
  }
  func.func @transform_3(%arg0: i32, %arg1: i32) -> (i32, i32) {
    %c0_i32 = arith.constant 0 : i32
    %c0_i32_0 = arith.constant 0 : i32
    return %arg1, %c0_i32 : i32, i32
  }
  func.func @transform_4(%arg0: i32, %arg1: i32) -> (i32, i32) {
    %c0_i32 = arith.constant 0 : i32
    %c0_i32_0 = arith.constant 0 : i32
    %c0_i32_1 = arith.constant 0 : i32
    return %c0_i32, %c0_i32_0 : i32, i32
  }
  func.func @transform_5(%arg0: i32, %arg1: i32) -> (i32, i32) {
    %c0_i32 = arith.constant 0 : i32
    %c0_i32_0 = arith.constant 0 : i32
    %c0_i32_1 = arith.constant 0 : i32
    return %c0_i32, %c0_i32_0 : i32, i32
  }
  func.func @transform_6(%arg0: i32, %arg1: i32) -> (i32, i32) {
    %c0_i32 = arith.constant 0 : i32
    %c0_i32_0 = arith.constant 0 : i32
    %c0_i32_1 = arith.constant 0 : i32
    return %c0_i32, %c0_i32_0 : i32, i32
  }
  func.func @transform_7(%arg0: i32, %arg1: i32) -> (i32, i32) {
    %c0_i32 = arith.constant 0 : i32
    %c0_i32_0 = arith.constant 0 : i32
    return %arg0, %c0_i32 : i32, i32
  }
}

module attributes {stable_mosaic.version = 11 : i64} {
  func.func @_matmul_bias_kernel(%arg0: i32, %arg1: i32, %arg2: i32, %arg3: memref<16x32xbf16, #tpu.memory_space<vmem>>, %arg4: memref<32x256xbf16, #tpu.memory_space<vmem>>, %arg5: memref<1x256xf32, #tpu.memory_space<vmem>>, %arg6: memref<16x256xf32, #tpu.memory_space<vmem>>, %arg7: memref<16x256xf32, #tpu.memory_space<vmem>>) attributes {dimension_semantics = [#tpu.dimension_semantics<parallel>, #tpu.dimension_semantics<parallel>, #tpu.dimension_semantics<arbitrary>], iteration_bounds = array<i64: 1, 1, 1>, scalar_prefetch = 0 : i64, scratch_operands = 1 : i64, tpu.core_type = #tpu.core_type<tc>, window_params = [{transform_indices = @transform_0, window_bounds = array<i64: 16, 32>}, {transform_indices = @transform_1, window_bounds = array<i64: 32, 256>}, {transform_indices = @transform_2, window_bounds = array<i64: 1, 256>}, {transform_indices = @transform_3, window_bounds = array<i64: 16, 256>}]} {
    %c0_i32 = arith.constant 0 : i32
    %0 = arith.cmpi eq, %arg2, %c0_i32 : i32
    %1 = arith.extui %0 : i1 to i32
    %c0_i32_0 = arith.constant 0 : i32
    %2 = arith.cmpi ne, %1, %c0_i32_0 : i32
    scf.if %2 {
      %cst_10 = arith.constant 0.000000e+00 : f32
      %12 = vector.broadcast %cst_10 : f32 to vector<16x256xf32>
      %c0_11 = arith.constant 0 : index
      %c0_12 = arith.constant 0 : index
      %13 = vector.load %arg7[%c0_11, %c0_12] : memref<16x256xf32, #tpu.memory_space<vmem>>, vector<16x256xf32>
      tpu.vector_store %arg7[%c0_11, %c0_12], %12 {strides = array<i32>} : memref<16x256xf32, #tpu.memory_space<vmem>>, vector<16x256xf32>,
    } else {
    }
    %c0 = arith.constant 0 : index
    %c0_1 = arith.constant 0 : index
    %3 = vector.load %arg7[%c0, %c0_1] : memref<16x256xf32, #tpu.memory_space<vmem>>, vector<16x256xf32>
    %c0_2 = arith.constant 0 : index
    %c0_3 = arith.constant 0 : index
    %4 = vector.load %arg3[%c0_2, %c0_3] : memref<16x32xbf16, #tpu.memory_space<vmem>>, vector<16x32xbf16>
    %c0_4 = arith.constant 0 : index
    %c0_5 = arith.constant 0 : index
    %5 = vector.load %arg4[%c0_4, %c0_5] : memref<32x256xbf16, #tpu.memory_space<vmem>>, vector<32x256xbf16>
    %cst = arith.constant dense<0.000000e+00> : vector<16x256xf32>
    %6 = tpu.matmul %4, %5, %cst {dimension_numbers = #tpu.dot_dimension_numbers<[1], [0], [0], [1], [0, 0, 1, 1], [], []>} : vector<16x32xbf16>, vector<32x256xbf16>, vector<16x256xf32> -> vector<16x256xf32>
    %7 = arith.addf %3, %6 : vector<16x256xf32>
    %c0_6 = arith.constant 0 : index
    %c0_7 = arith.constant 0 : index
    %8 = vector.load %arg7[%c0_6, %c0_7] : memref<16x256xf32, #tpu.memory_space<vmem>>, vector<16x256xf32>
    tpu.vector_store %arg7[%c0_6, %c0_7], %7 {strides = array<i32>} : memref<16x256xf32, #tpu.memory_space<vmem>>, vector<16x256xf32>,
    %c0_i32_8 = arith.constant 0 : i32
    %9 = arith.cmpi eq, %arg2, %c0_i32_8 : i32
    %10 = arith.extui %9 : i1 to i32
    %c0_i32_9 = arith.constant 0 : i32
    %11 = arith.cmpi ne, %10, %c0_i32_9 : i32
    scf.if %11 {
      %c0_10 = arith.constant 0 : index
      %c0_11 = arith.constant 0 : index
      %12 = vector.load %arg7[%c0_10, %c0_11] : memref<16x256xf32, #tpu.memory_space<vmem>>, vector<16x256xf32>
      %c0_12 = arith.constant 0 : index
      %c0_13 = arith.constant 0 : index
      %13 = vector.load %arg5[%c0_12, %c0_13] : memref<1x256xf32, #tpu.memory_space<vmem>>, vector<1x256xf32>
      %14 = vector.broadcast %13 : vector<1x256xf32> to vector<16x256xf32>
      %15 = arith.addf %12, %14 : vector<16x256xf32>
      %c0_14 = arith.constant 0 : index
      %c0_15 = arith.constant 0 : index
      %16 = vector.load %arg6[%c0_14, %c0_15] : memref<16x256xf32, #tpu.memory_space<vmem>>, vector<16x256xf32>
      tpu.vector_store %arg6[%c0_14, %c0_15], %15 {strides = array<i32>} : memref<16x256xf32, #tpu.memory_space<vmem>>, vector<16x256xf32>,
    } else {
    }
    return
  }
  func.func @transform_0(%arg0: i32, %arg1: i32, %arg2: i32) -> (i32, i32) {
    %c0_i32 = arith.constant 0 : i32
    return %arg0, %arg2 : i32, i32
  }
  func.func @transform_1(%arg0: i32, %arg1: i32, %arg2: i32) -> (i32, i32) {
    %c0_i32 = arith.constant 0 : i32
    return %arg2, %arg1 : i32, i32
  }
  func.func @transform_2(%arg0: i32, %arg1: i32, %arg2: i32) -> (i32, i32) {
    %c0_i32 = arith.constant 0 : i32
    %c0_i32_0 = arith.constant 0 : i32
    return %c0_i32, %arg1 : i32, i32
  }
  func.func @transform_3(%arg0: i32, %arg1: i32, %arg2: i32) -> (i32, i32) {
    %c0_i32 = arith.constant 0 : i32
    return %arg0, %arg1 : i32, i32
  }
}

</mosaic_0001>

<llo_original>
// kernel: decoder_forward.17
$region0: #{decoder_forward.17}
  #allocation0 [shape = 'u32[]', space=smem, size = 0x4, offset = 0x4, fixed_abs, tag = 'smem constant byte address 0x4 - core index']
  #allocation1 [shape = 'u32[72,128]{1,0:T(1,128)}', space=vmem, size = 0x9000, scoped, tag = 'internal scratch']
  #allocation2 [shape = 'f32[16,96]{1,0:T(8,128)}', space=vmem, size = 0x2000, scoped, tag = 'scratch operand']
  %s0 = inlined_call_operand.vmem [shape: bf16[16,32], index: 0, kind: input, shape index: {}]
  %s1 = inlined_call_operand.vmem [shape: bf16[32,96], index: 1, kind: input, shape index: {}]
  %s2 = inlined_call_operand.vmem [shape: f32[1,96], index: 2, kind: input, shape index: {}]
  %s3 = inlined_call_operand.vmem [shape: bf16[16,96], index: 3, kind: output, shape index: {}]
  %s4 = sld [smem:[#allocation0]]
  $region30: #{decoder_forward.17} parent=0
    _
  %s6 = ssub.s32 1, %s4
  %s7 = scalar_select 0, %s6, %s4
  // Predicated region
  $region2: #{decoder_forward.17} parent=0 // pred_check
    _
  $region3: #{decoder_forward.17} parent=0 // pred_check_branch
    %9 = sbr.rel (0) target = $region5
  $region4: #{decoder_forward.17} parent=0 // pred_region
    _
  $region5: #{decoder_forward.17} parent=0 // pred_fallthru
    _
  // Predicated region
  $region6: #{decoder_forward.17} parent=0 // pred_check
    _
  $region7: #{decoder_forward.17} parent=0 // pred_check_branch
    %11 = sbr.rel (0) target = $region9
  $region8: #{decoder_forward.17} parent=0 // pred_region
    _
  $region9: #{decoder_forward.17} parent=0 // pred_fallthru
    _
  // Predicated region
  $region10: #{decoder_forward.17} parent=0 // pred_check
    _
  $region11: #{decoder_forward.17} parent=0 // pred_check_branch
    %13 = sbr.rel (0) target = $region13
  $region12: #{decoder_forward.17} parent=0 // pred_region
    _
  $region13: #{decoder_forward.17} parent=0 // pred_fallthru
    _
  %p15 = scmp.eq.s32.totalorder 0, 0
  // Predicated region
  $region14: #{decoder_forward.17} parent=0 // pred_check
    %p16 = pneg %p15
  $region15: #{decoder_forward.17} parent=0 // pred_check_branch
    %18 = sbr.rel (%p16) target = $region17
  $region16: #{decoder_forward.17} parent=0 // pred_region
    %vm19 = vcmask 785408
    %20 = vst.msk [vmem:[#allocation2] sm:$0xff] %vm19, 0.0
    %21 = vst.msk [vmem:[#allocation2 + $0x8] sm:$0xff] %vm19, 0.0
  $region17: #{decoder_forward.17} parent=0 // pred_fallthru
    _
  %v22 = vld [vmem:[#allocation2] sm:$0xff]
  %v23 = vld [vmem:[#allocation2 + $0x8] sm:$0xff]
  %v24 = vld [vmem:[%s0] sm:$0xf]
  %v25 = vld [vmem:[%s0 + $0x4] sm:$0xf]
  %v26 = vld [vmem:[%s1] sm:$0xf]
  %v27 = vld [vmem:[%s1 + $0x4] sm:$0xf]
  %v28 = vld [vmem:[%s1 + $0x8] sm:$0xf]
  %v29 = vld [vmem:[%s1 + $0xc] sm:$0xf]
  %v32 = vunpack.c.l.b16 %v24
  %v33 = vunpack.c.l.b16 %v25
  %v34 = vpack.c.b16 %v33, %v32
  %v39 = vunpack.c.l.b16 %v26
  %v40 = vunpack.c.l.b16 %v27
  %v41 = vunpack.c.l.b16 %v28
  %v42 = vunpack.c.l.b16 %v29
  %v43 = vpack.c.b16 %v40, %v39
  %v44 = vpack.c.b16 %v42, %v41
  %vm47 = vcmask 261120
  %v49 = vsel %vm47, %v34, 0
  %51 = vmatpush.bf16.msra.mxu0 0
  %52 = vmatpush.bf16.msra.mxu0 0
  %53 = vmatpush.bf16.msra.mxu0 0
  %54 = vmatpush.bf16.msra.mxu0 0
  %55 = vmatpush.bf16.msra.mxu0 0
  %56 = vmatpush.bf16.msra.mxu0 0
  %57 = vmatpush.bf16.msra.mxu0 %v44
  %58 = vmatpush.bf16.msra.mxu0 %v43
  %59 = vmatmul.bf16.gmra.mxu0 %v49
  %v60 = vpop.f32.mrf.mxu0
  %v61 = vadd.f32 0.0, %v60
  %v62 = vpop.f32.mrf.mxu0
  %v63 = vadd.f32 0.0, %v62
  %64 = vdwg.mxu0
  %v65 = vadd.f32 %v22, %v61
  %v66 = vadd.f32 %v23, %v63
  %vm67 = vcmask 785408
  %68 = vst.msk [vmem:[#allocation2] sm:$0xff] %vm67, %v65
  %69 = vst.msk [vmem:[#allocation2 + $0x8] sm:$0xff] %vm67, %v66
  // Predicated region
  $region18: #{decoder_forward.17} parent=0 // pred_check
    %p70 = pneg %p15
  $region19: #{decoder_forward.17} parent=0 // pred_check_branch
    %72 = sbr.rel (%p70) target = $region21
  $region20: #{decoder_forward.17} parent=0 // pred_region
    %v73 = vld [vmem:[#allocation2] sm:$0xff]
    %v74 = vld [vmem:[#allocation2 + $0x8] sm:$0xff]
    %v75 = vld [vmem:[%s2] sm:$0x1]
    %v77 = vperm.slane %v75, 0
    %v79 = vadd.f32 %v73, %v77
    %v80 = vadd.f32 %v74, %v77
    %v81 = vpack.c.bf16 %v79, %v79
    %v82 = vpack.c.bf16 %v80, %v80
    %vm83 = vcmask 781312
    %84 = vst.msk [vmem:[%s3] sm:$0xf] %vm83, %v81
    %85 = vst.msk [vmem:[%s3 + $0x4] sm:$0xf] %vm83, %v82
  $region21: #{decoder_forward.17} parent=0 // pred_fallthru
    _
  // Predicated region
  $region22: #{decoder_forward.17} parent=0 // pred_check
    _
  $region23: #{decoder_forward.17} parent=0 // pred_check_branch
    %87 = sbr.rel (0) target = $region25
  $region24: #{decoder_forward.17} parent=0 // pred_region
    _
  $region25: #{decoder_forward.17} parent=0 // pred_fallthru
    _
  // Predicated region
  $region26: #{decoder_forward.17} parent=0 // pred_check
    _
  $region27: #{decoder_forward.17} parent=0 // pred_check_branch
    %89 = sbr.rel (0) target = $region29
  $region28: #{decoder_forward.17} parent=0 // pred_region
    _
  $region29: #{decoder_forward.17} parent=0 // pred_fallthru
    _

// kernel: decoder_forward.19
$region0: #{decoder_forward.19}
  #allocation0 [shape = 'u32[]', space=smem, size = 0x4, offset = 0x4, fixed_abs, tag = 'smem constant byte address 0x4 - core index']
  #allocation1 [shape = 'u32[72,128]{1,0:T(1,128)}', space=vmem, size = 0x9000, scoped, tag = 'internal scratch']
  #allocation2 [shape = 'f32[16,32]{1,0:T(8,128)}', space=vmem, size = 0x2000, scoped, tag = 'scratch operand']
  %s0 = inlined_call_operand.vmem [shape: bf16[16,32], index: 0, kind: input, shape index: {}]
  %s1 = inlined_call_operand.vmem [shape: bf16[32,32], index: 1, kind: input, shape index: {}]
  %s2 = inlined_call_operand.vmem [shape: f32[1,32], index: 2, kind: input, shape index: {}]
  %s3 = inlined_call_operand.vmem [shape: bf16[16,32], index: 3, kind: input, shape index: {}]
  %s4 = inlined_call_operand.vmem [shape: f32[1,32], index: 4, kind: input, shape index: {}]
  %s5 = inlined_call_operand.vmem [shape: f32[1,32], index: 5, kind: input, shape index: {}]
  %s6 = inlined_call_operand.vmem [shape: bf16[16,32], index: 6, kind: output, shape index: {}]
  %s7 = sld [smem:[#allocation0]]
  $region42: #{decoder_forward.19} parent=0
    _
  %s9 = ssub.s32 1, %s7
  %s10 = scalar_select 0, %s9, %s7
  // Predicated region
  $region2: #{decoder_forward.19} parent=0 // pred_check
    _
  $region3: #{decoder_forward.19} parent=0 // pred_check_branch
    %12 = sbr.rel (0) target = $region5
  $region4: #{decoder_forward.19} parent=0 // pred_region
    _
  $region5: #{decoder_forward.19} parent=0 // pred_fallthru
    _
  // Predicated region
  $region6: #{decoder_forward.19} parent=0 // pred_check
    _
  $region7: #{decoder_forward.19} parent=0 // pred_check_branch
    %14 = sbr.rel (0) target = $region9
  $region8: #{decoder_forward.19} parent=0 // pred_region
    _
  $region9: #{decoder_forward.19} parent=0 // pred_fallthru
    _
  // Predicated region
  $region10: #{decoder_forward.19} parent=0 // pred_check
    _
  $region11: #{decoder_forward.19} parent=0 // pred_check_branch
    %16 = sbr.rel (0) target = $region13
  $region12: #{decoder_forward.19} parent=0 // pred_region
    _
  $region13: #{decoder_forward.19} parent=0 // pred_fallthru
    _
  // Predicated region
  $region14: #{decoder_forward.19} parent=0 // pred_check
    _
  $region15: #{decoder_forward.19} parent=0 // pred_check_branch
    %18 = sbr.rel (0) target = $region17
  $region16: #{decoder_forward.19} parent=0 // pred_region
    _
  $region17: #{decoder_forward.19} parent=0 // pred_fallthru
    _
  // Predicated region
  $region18: #{decoder_forward.19} parent=0 // pred_check
    _
  $region19: #{decoder_forward.19} parent=0 // pred_check_branch
    %20 = sbr.rel (0) target = $region21
  $region20: #{decoder_forward.19} parent=0 // pred_region
    _
  $region21: #{decoder_forward.19} parent=0 // pred_fallthru
    _
  // Predicated region
  $region22: #{decoder_forward.19} parent=0 // pred_check
    _
  $region23: #{decoder_forward.19} parent=0 // pred_check_branch
    %22 = sbr.rel (0) target = $region25
  $region24: #{decoder_forward.19} parent=0 // pred_region
    _
  $region25: #{decoder_forward.19} parent=0 // pred_fallthru
    _
  %p24 = scmp.eq.s32.totalorder 0, 0
  // Predicated region
  $region26: #{decoder_forward.19} parent=0 // pred_check
    %p25 = pneg %p24
  $region27: #{decoder_forward.19} parent=0 // pred_check_branch
    %27 = sbr.rel (%p25) target = $region29
  $region28: #{decoder_forward.19} parent=0 // pred_region
    %vm28 = vcmask 261120
    %29 = vst.msk [vmem:[#allocation2] sm:$0xff] %vm28, 0.0
    %30 = vst.msk [vmem:[#allocation2 + $0x8] sm:$0xff] %vm28, 0.0
  $region29: #{decoder_forward.19} parent=0 // pred_fallthru
    _
  %v31 = vld [vmem:[#allocation2] sm:$0xff]
  %v32 = vld [vmem:[#allocation2 + $0x8] sm:$0xff]
  %v33 = vld [vmem:[%s0] sm:$0xf]
  %v34 = vld [vmem:[%s0 + $0x4] sm:$0xf]
  %v35 = vld [vmem:[%s1] sm:$0xf]
  %v36 = vld [vmem:[%s1 + $0x4] sm:$0xf]
  %v37 = vld [vmem:[%s1 + $0x8] sm:$0xf]
  %v38 = vld [vmem:[%s1 + $0xc] sm:$0xf]
  %v41 = vunpack.c.l.b16 %v33
  %v42 = vunpack.c.l.b16 %v34
  %v43 = vpack.c.b16 %v42, %v41
  %v48 = vunpack.c.l.b16 %v35
  %v49 = vunpack.c.l.b16 %v36
  %v50 = vunpack.c.l.b16 %v37
  %v51 = vunpack.c.l.b16 %v38
  %v52 = vpack.c.b16 %v49, %v48
  %v53 = vpack.c.b16 %v51, %v50
  %vm56 = vcmask 261120
  %v58 = vsel %vm56, %v43, 0
  %60 = vmatpush.bf16.msra.mxu0 0
  %61 = vmatpush.bf16.msra.mxu0 0
  %62 = vmatpush.bf16.msra.mxu0 0
  %63 = vmatpush.bf16.msra.mxu0 0
  %64 = vmatpush.bf16.msra.mxu0 0
  %65 = vmatpush.bf16.msra.mxu0 0
  %66 = vmatpush.bf16.msra.mxu0 %v53
  %67 = vmatpush.bf16.msra.mxu0 %v52
  %68 = vmatmul.bf16.gmra.mxu0 %v58
  %v69 = vpop.f32.mrf.mxu0
  %v70 = vadd.f32 0.0, %v69
  %v71 = vpop.f32.mrf.mxu0
  %v72 = vadd.f32 0.0, %v71
  %73 = vdwg.mxu0
  %v74 = vadd.f32 %v31, %v70
  %v75 = vadd.f32 %v32, %v72
  %76 = vst.msk [vmem:[#allocation2] sm:$0xff] %vm56, %v74
  %77 = vst.msk [vmem:[#allocation2 + $0x8] sm:$0xff] %vm56, %v75
  // Predicated region
  $region30: #{decoder_forward.19} parent=0 // pred_check
    %p78 = pneg %p24
  $region31: #{decoder_forward.19} parent=0 // pred_check_branch
    %80 = sbr.rel (%p78) target = $region33
  $region32: #{decoder_forward.19} parent=0 // pred_region
    %v81 = vld [vmem:[#allocation2] sm:$0xff]
    %v82 = vld [vmem:[#allocation2 + $0x8] sm:$0xff]
    %v83 = vld [vmem:[%s2] sm:$0x1]
    %v85 = vperm.slane %v83, 0
    %v87 = vadd.f32 %v81, %v85
    %v88 = vadd.f32 %v82, %v85
    %v89 = vld [vmem:[%s3] sm:$0xf]
    %v90 = vld [vmem:[%s3 + $0x4] sm:$0xf]
    %v91 = vunpack.c.l.bf16 %v89
    %v92 = vunpack.c.l.bf16 %v90
    %v93 = vadd.f32 %v87, %v91
    %v94 = vadd.f32 %v88, %v92
    %v95 = vsel %vm56, %v93, 0.0
    %96 = vadd.xlane.f32.xlu0 %v95
    %v97 = vpop.xlane.xlu0 %96
    %v98 = vsel %vm56, %v94, 0.0
    %99 = vadd.xlane.f32.xlu0 %v98
    %v100 = vpop.xlane.xlu0 %99
    %v101 = vrcp.pop 32.0
    %v102 = vmul.f32 32.0, %v101
    %v103 = vsub.f32 1.0, %v102
    %v104 = vmul.f32 %v101, %v103
    %v105 = vadd.f32 %v101, %v104
    %vm106 = vweird.f32 %v101
    %v107 = vsel %vm106, %v101, %v105
    %v108 = vmul.f32 %v97, %v107
    %v109 = vmul.f32 %v100, %v107
    %v110 = vsub.f32 %v93, %v108
    %v111 = vsub.f32 %v94, %v109
    %v112 = vmul.f32 %v110, %v110
    %v113 = vmul.f32 %v111, %v111
    %v114 = vsel %vm56, %v112, 0.0
    %115 = vadd.xlane.f32.xlu0 %v114
    %v116 = vpop.xlane.xlu0 %115
    %v117 = vsel %vm56, %v113, 0.0
    %118 = vadd.xlane.f32.xlu0 %v117
    %v119 = vpop.xlane.xlu0 %118
    %v120 = vmul.f32 %v116, %v107
    %v121 = vmul.f32 %v119, %v107
    %v122 = vadd.f32 %v120, 1e-05
    %v123 = vadd.f32 %v121, 1e-05
    %v124 = vrsqrt.pop %v122
    %v125 = vmul.f32 %v124, %v122
    %v126 = vmul.f32 %v125, %v124
    %v127 = vmul.f32 0.5, %v126
    %v128 = vsub.f32 1.5, %v127
    %v129 = vmul.f32 %v124, %v128
    %vm130 = vweird.f32 %v122
    %vm131 = vweird.f32 %v124
    %vm132 = vmor %vm130, %vm131
    %v133 = vsel %vm132, %v124, %v129
    %v134 = vrsqrt.pop %v123
    %v135 = vmul.f32 %v134, %v123
    %v136 = vmul.f32 %v135, %v134
    %v137 = vmul.f32 0.5, %v136
    %v138 = vsub.f32 1.5, %v137
    %v139 = vmul.f32 %v134, %v138
    %vm140 = vweird.f32 %v123
    %vm141 = vweird.f32 %v134
    %vm142 = vmor %vm140, %vm141
    %v143 = vsel %vm142, %v134, %v139
    %v144 = vmul.f32 %v110, %v133
    %v145 = vmul.f32 %v111, %v143
    %v146 = vld [vmem:[%s4] sm:$0x1]
    %v148 = vperm.slane %v146, 0
    %v150 = vmul.f32 %v144, %v148
    %v151 = vmul.f32 %v145, %v148
    %v152 = vld [vmem:[%s5] sm:$0x1]
    %v154 = vperm.slane %v152, 0
    %v156 = vadd.f32 %v150, %v154
    %v157 = vadd.f32 %v151, %v154
    %v158 = vpack.c.bf16 %v156, %v156
    %v159 = vpack.c.bf16 %v157, %v157
    %vm160 = vcmask 257024
    %161 = vst.msk [vmem:[%s6] sm:$0xf] %vm160, %v158
    %162 = vst.msk [vmem:[%s6 + $0x4] sm:$0xf] %vm160, %v159
  $region33: #{decoder_forward.19} parent=0 // pred_fallthru
    _
  // Predicated region
  $region34: #{decoder_forward.19} parent=0 // pred_check
    _
  $region35: #{decoder_forward.19} parent=0 // pred_check_branch
    %164 = sbr.rel (0) target = $region37
  $region36: #{decoder_forward.19} parent=0 // pred_region
    _
  $region37: #{decoder_forward.19} parent=0 // pred_fallthru
    _
  // Predicated region
  $region38: #{decoder_forward.19} parent=0 // pred_check
    _
  $region39: #{decoder_forward.19} parent=0 // pred_check_branch
    %166 = sbr.rel (0) target = $region41
  $region40: #{decoder_forward.19} parent=0 // pred_region
    _
  $region41: #{decoder_forward.19} parent=0 // pred_fallthru
    _

// kernel: decoder_forward.20
$region0: #{decoder_forward.20}
  #allocation0 [shape = 'u32[]', space=smem, size = 0x4, offset = 0x4, fixed_abs, tag = 'smem constant byte address 0x4 - core index']
  #allocation1 [shape = 'u32[72,128]{1,0:T(1,128)}', space=vmem, size = 0x9000, scoped, tag = 'internal scratch']
  #allocation2 [shape = 'f32[16,32]{1,0:T(8,128)}', space=vmem, size = 0x2000, scoped, tag = 'scratch operand']
  %s0 = inlined_call_operand.vmem [shape: bf16[16,32], index: 0, kind: input, shape index: {}]
  %s1 = inlined_call_operand.vmem [shape: bf16[32,32], index: 1, kind: input, shape index: {}]
  %s2 = inlined_call_operand.vmem [shape: f32[1,32], index: 2, kind: input, shape index: {}]
  %s3 = inlined_call_operand.vmem [shape: bf16[16,32], index: 3, kind: output, shape index: {}]
  %s4 = sld [smem:[#allocation0]]
  $region30: #{decoder_forward.20} parent=0
    _
  %s6 = ssub.s32 1, %s4
  %s7 = scalar_select 0, %s6, %s4
  // Predicated region
  $region2: #{decoder_forward.20} parent=0 // pred_check
    _
  $region3: #{decoder_forward.20} parent=0 // pred_check_branch
    %9 = sbr.rel (0) target = $region5
  $region4: #{decoder_forward.20} parent=0 // pred_region
    _
  $region5: #{decoder_forward.20} parent=0 // pred_fallthru
    _
  // Predicated region
  $region6: #{decoder_forward.20} parent=0 // pred_check
    _
  $region7: #{decoder_forward.20} parent=0 // pred_check_branch
    %11 = sbr.rel (0) target = $region9
  $region8: #{decoder_forward.20} parent=0 // pred_region
    _
  $region9: #{decoder_forward.20} parent=0 // pred_fallthru
    _
  // Predicated region
  $region10: #{decoder_forward.20} parent=0 // pred_check
    _
  $region11: #{decoder_forward.20} parent=0 // pred_check_branch
    %13 = sbr.rel (0) target = $region13
  $region12: #{decoder_forward.20} parent=0 // pred_region
    _
  $region13: #{decoder_forward.20} parent=0 // pred_fallthru
    _
  %p15 = scmp.eq.s32.totalorder 0, 0
  // Predicated region
  $region14: #{decoder_forward.20} parent=0 // pred_check
    %p16 = pneg %p15
  $region15: #{decoder_forward.20} parent=0 // pred_check_branch
    %18 = sbr.rel (%p16) target = $region17
  $region16: #{decoder_forward.20} parent=0 // pred_region
    %vm19 = vcmask 261120
    %20 = vst.msk [vmem:[#allocation2] sm:$0xff] %vm19, 0.0
    %21 = vst.msk [vmem:[#allocation2 + $0x8] sm:$0xff] %vm19, 0.0
  $region17: #{decoder_forward.20} parent=0 // pred_fallthru
    _
  %v22 = vld [vmem:[#allocation2] sm:$0xff]
  %v23 = vld [vmem:[#allocation2 + $0x8] sm:$0xff]
  %v24 = vld [vmem:[%s0] sm:$0xf]
  %v25 = vld [vmem:[%s0 + $0x4] sm:$0xf]
  %v26 = vld [vmem:[%s1] sm:$0xf]
  %v27 = vld [vmem:[%s1 + $0x4] sm:$0xf]
  %v28 = vld [vmem:[%s1 + $0x8] sm:$0xf]
  %v29 = vld [vmem:[%s1 + $0xc] sm:$0xf]
  %v32 = vunpack.c.l.b16 %v24
  %v33 = vunpack.c.l.b16 %v25
  %v34 = vpack.c.b16 %v33, %v32
  %v39 = vunpack.c.l.b16 %v26
  %v40 = vunpack.c.l.b16 %v27
  %v41 = vunpack.c.l.b16 %v28
  %v42 = vunpack.c.l.b16 %v29
  %v43 = vpack.c.b16 %v40, %v39
  %v44 = vpack.c.b16 %v42, %v41
  %vm47 = vcmask 261120
  %v49 = vsel %vm47, %v34, 0
  %51 = vmatpush.bf16.msra.mxu0 0
  %52 = vmatpush.bf16.msra.mxu0 0
  %53 = vmatpush.bf16.msra.mxu0 0
  %54 = vmatpush.bf16.msra.mxu0 0
  %55 = vmatpush.bf16.msra.mxu0 0
  %56 = vmatpush.bf16.msra.mxu0 0
  %57 = vmatpush.bf16.msra.mxu0 %v44
  %58 = vmatpush.bf16.msra.mxu0 %v43
  %59 = vmatmul.bf16.gmra.mxu0 %v49
  %v60 = vpop.f32.mrf.mxu0
  %v61 = vadd.f32 0.0, %v60
  %v62 = vpop.f32.mrf.mxu0
  %v63 = vadd.f32 0.0, %v62
  %64 = vdwg.mxu0
  %v65 = vadd.f32 %v22, %v61
  %v66 = vadd.f32 %v23, %v63
  %67 = vst.msk [vmem:[#allocation2] sm:$0xff] %vm47, %v65
  %68 = vst.msk [vmem:[#allocation2 + $0x8] sm:$0xff] %vm47, %v66
  // Predicated region
  $region18: #{decoder_forward.20} parent=0 // pred_check
    %p69 = pneg %p15
  $region19: #{decoder_forward.20} parent=0 // pred_check_branch
    %71 = sbr.rel (%p69) target = $region21
  $region20: #{decoder_forward.20} parent=0 // pred_region
    %v72 = vld [vmem:[#allocation2] sm:$0xff]
    %v73 = vld [vmem:[#allocation2 + $0x8] sm:$0xff]
    %v74 = vld [vmem:[%s2] sm:$0x1]
    %v76 = vperm.slane %v74, 0
    %v78 = vadd.f32 %v72, %v76
    %v79 = vadd.f32 %v73, %v76
    %v80 = vpack.c.bf16 %v78, %v78
    %v81 = vpack.c.bf16 %v79, %v79
    %vm82 = vcmask 257024
    %83 = vst.msk [vmem:[%s3] sm:$0xf] %vm82, %v80
    %84 = vst.msk [vmem:[%s3 + $0x4] sm:$0xf] %vm82, %v81
  $region21: #{decoder_forward.20} parent=0 // pred_fallthru
    _
  // Predicated region
  $region22: #{decoder_forward.20} parent=0 // pred_check
    _
  $region23: #{decoder_forward.20} parent=0 // pred_check_branch
    %86 = sbr.rel (0) target = $region25
  $region24: #{decoder_forward.20} parent=0 // pred_region
    _
  $region25: #{decoder_forward.20} parent=0 // pred_fallthru
    _
  // Predicated region
  $region26: #{decoder_forward.20} parent=0 // pred_check
    _
  $region27: #{decoder_forward.20} parent=0 // pred_check_branch
    %88 = sbr.rel (0) target = $region29
  $region28: #{decoder_forward.20} parent=0 // pred_region
    _
  $region29: #{decoder_forward.20} parent=0 // pred_fallthru
    _

// kernel: decoder_forward.18
$region0: #{decoder_forward.18}
  #allocation0 [shape = 'u32[]', space=smem, size = 0x4, offset = 0x4, fixed_abs, tag = 'smem constant byte address 0x4 - core index']
  #allocation1 [shape = 'u32[72,128]{1,0:T(1,128)}', space=vmem, size = 0x9000, scoped, tag = 'internal scratch']
  #allocation2 [shape = 'f32[4,8,1]{2,1,0:T(8,128)}', space=vmem, size = 0x4000, scoped, tag = 'scratch operand']
  #allocation3 [shape = 'f32[4,8,1]{2,1,0:T(8,128)}', space=vmem, size = 0x4000, scoped, tag = 'scratch operand']
  #allocation4 [shape = 'f32[4,8,8]{2,1,0:T(8,128)}', space=vmem, size = 0x4000, scoped, tag = 'scratch operand']
  %s0 = inlined_call_operand.vmem [shape: bf16[2,8,32], index: 0, kind: input, shape index: {}]
  %s1 = inlined_call_operand.vmem [shape: bf16[2,8,32], index: 1, kind: input, shape index: {}]
  %s2 = inlined_call_operand.vmem [shape: bf16[2,8,32], index: 2, kind: input, shape index: {}]
  %s3 = inlined_call_operand.vmem [shape: f32[2,8,8], index: 3, kind: input, shape index: {}]
  %s4 = inlined_call_operand.vmem [shape: bf16[2,8,32], index: 4, kind: output, shape index: {}]
  %s5 = sld [smem:[#allocation0]]
  $region57: #{decoder_forward.18} parent=0
    _
  %s7 = ssub.s32 1, %s5
  %s8 = scalar_select 0, %s7, %s5
  loop: start=0, step=1, limit=4
  $region2: #{decoder_forward.18} parent=0 // loop_pre_header
    _
  $region3: #{decoder_forward.18} parent=0 // loop_header
    %s10 = sphi 0, %s14
    %p11 = scmp.ge.s32.totalorder %s10, 4
    %s17 = sphi 0, %s36
    %s18 = sphi 0, %s32
    %s19 = sphi 0, %s28
    %s20 = sphi 0, %s17
    %s21 = sphi 0, %s18
    %s22 = sphi 0, %s19
    %s23 = sphi 0, %s20
    %s24 = sphi 0, %s21
    %s25 = sphi 0, %s22
    %s41 = sphi 0, %s43
    %s44 = sphi 0, %s41
    %s45 = sphi 0, %s44
    %s61 = sphi 0, %s45
    %s69 = sphi 0, %s71
    %s72 = sphi 0, %s69
    %s73 = sphi 0, %s72
    %s89 = sphi 0, %s73
    %s97 = sphi 0, %s99
    %s100 = sphi 0, %s97
    %s101 = sphi 0, %s100
    %s117 = sphi 0, %s101
    %s127 = sphi 0, %s129
    %s130 = sphi 0, %s127
    %s131 = sphi 0, %s130
    %s147 = sphi 0, %s131
    %s155 = sphi 0, %s157
    %s158 = sphi 0, %s155
    %s159 = sphi 0, %s158
    %s175 = sphi 0, %s159
  $region4: #{decoder_forward.18} parent=0 // loop_header_branch
    %13 = sbr.rel (%p11) target = $region8
  $region5: #{decoder_forward.18} parent=0 // loop_body
    %s15 = ssub.s32 %s10, 1
    %s16 = ssub.s32 %s10, 2
    %s26 = sadd.s32 1, %s19
    %p27 = scmp.ge.s32.totalorder %s26, 1
    %s28 = scalar_select %p27, 0, %s26
    %s29 = sadd.s32 1, %s18
    %s30 = scalar_select %p27, %s29, %s18
    %p31 = scmp.ge.s32.totalorder %s30, 1
    %s32 = scalar_select %p31, 0, %s30
    %s33 = sadd.s32 1, %s17
    %s34 = scalar_select %p31, %s33, %s17
    %p35 = scmp.ge.s32.totalorder %s34, 2
    %s36 = scalar_select %p35, 0, %s34
    %s37 = ssub.s32 %s17, %s36
    %s38 = ssub.s32 %s18, %s32
    %s39 = sor.u32 %s37, %s38
    %p40 = scmp.eq.s32.totalorder %s39, 0
    %s42 = sadd.s32 %s41, 1
    %s43 = scalar_select %p40, %s41, %s42
    %p46 = pneg %p40
    %p47 = scmp.eq.s32.totalorder %s10, 1
    %p48 = por %p46, %p47
    %p49 = scmp.ne.s32.totalorder %s41, %s44
    %p50 = scmp.eq.s32.totalorder %s10, 0
    %p51 = por %p49, %p50
    %p52 = scmp.ne.s32.totalorder %s41, %s44
    %p53 = scmp.eq.s32.totalorder %s15, 1
    %p54 = por %p52, %p53
    %p55 = scmp.ne.s32.totalorder %s44, %s45
    %p56 = scmp.eq.s32.totalorder %s15, 0
    %p57 = por %p55, %p56
    %p58 = scmp.ne.s32.totalorder %s44, %s45
    %p59 = scmp.eq.s32.totalorder %s16, 1
    %p60 = por %p58, %p59
    %p62 = scmp.ne.s32.totalorder %s45, %s61
    %p63 = scmp.eq.s32.totalorder %s16, 0
    %p64 = por %p62, %p63
    %s65 = ssub.s32 %s17, %s36
    %s66 = ssub.s32 %s19, %s28
    %s67 = sor.u32 %s65, %s66
    %p68 = scmp.eq.s32.totalorder %s67, 0
    %s70 = sadd.s32 %s69, 1
    %s71 = scalar_select %p68, %s69, %s70
    %p74 = pneg %p68
    %p75 = scmp.eq.s32.totalorder %s10, 1
    %p76 = por %p74, %p75
    %p77 = scmp.ne.s32.totalorder %s69, %s72
    %p78 = scmp.eq.s32.totalorder %s10, 0
    %p79 = por %p77, %p78
    %p80 = scmp.ne.s32.totalorder %s69, %s72
    %p81 = scmp.eq.s32.totalorder %s15, 1
    %p82 = por %p80, %p81
    %p83 = scmp.ne.s32.totalorder %s72, %s73
    %p84 = scmp.eq.s32.totalorder %s15, 0
    %p85 = por %p83, %p84
    %p86 = scmp.ne.s32.totalorder %s72, %s73
    %p87 = scmp.eq.s32.totalorder %s16, 1
    %p88 = por %p86, %p87
    %p90 = scmp.ne.s32.totalorder %s73, %s89
    %p91 = scmp.eq.s32.totalorder %s16, 0
    %p92 = por %p90, %p91
    %s93 = ssub.s32 %s17, %s36
    %s94 = ssub.s32 %s19, %s28
    %s95 = sor.u32 %s93, %s94
    %p96 = scmp.eq.s32.totalorder %s95, 0
    %s98 = sadd.s32 %s97, 1
    %s99 = scalar_select %p96, %s97, %s98
    %p102 = pneg %p96
    %p103 = scmp.eq.s32.totalorder %s10, 1
    %p104 = por %p102, %p103
    %p105 = scmp.ne.s32.totalorder %s97, %s100
    %p106 = scmp.eq.s32.totalorder %s10, 0
    %p107 = por %p105, %p106
    %p108 = scmp.ne.s32.totalorder %s97, %s100
    %p109 = scmp.eq.s32.totalorder %s15, 1
    %p110 = por %p108, %p109
    %p111 = scmp.ne.s32.totalorder %s100, %s101
    %p112 = scmp.eq.s32.totalorder %s15, 0
    %p113 = por %p111, %p112
    %p114 = scmp.ne.s32.totalorder %s100, %s101
    %p115 = scmp.eq.s32.totalorder %s16, 1
    %p116 = por %p114, %p115
    %p118 = scmp.ne.s32.totalorder %s101, %s117
    %p119 = scmp.eq.s32.totalorder %s16, 0
    %p120 = por %p118, %p119
    %s121 = ssub.s32 %s17, %s36
    %s122 = ssub.s32 %s18, %s32
    %s123 = sor.u32 %s121, %s122
    %s124 = ssub.s32 %s19, %s28
    %s125 = sor.u32 %s123, %s124
    %p126 = scmp.eq.s32.totalorder %s125, 0
    %s128 = sadd.s32 %s127, 1
    %s129 = scalar_select %p126, %s127, %s128
    %p132 = pneg %p126
    %p133 = scmp.eq.s32.totalorder %s10, 1
    %p134 = por %p132, %p133
    %p135 = scmp.ne.s32.totalorder %s127, %s130
    %p136 = scmp.eq.s32.totalorder %s10, 0
    %p137 = por %p135, %p136
    %p138 = scmp.ne.s32.totalorder %s127, %s130
    %p139 = scmp.eq.s32.totalorder %s15, 1
    %p140 = por %p138, %p139
    %p141 = scmp.ne.s32.totalorder %s130, %s131
    %p142 = scmp.eq.s32.totalorder %s15, 0
    %p143 = por %p141, %p142
    %p144 = scmp.ne.s32.totalorder %s130, %s131
    %p145 = scmp.eq.s32.totalorder %s16, 1
    %p146 = por %p144, %p145
    %p148 = scmp.ne.s32.totalorder %s131, %s147
    %p149 = scmp.eq.s32.totalorder %s16, 0
    %p150 = por %p148, %p149
    %s151 = ssub.s32 %s17, %s36
    %s152 = ssub.s32 %s18, %s32
    %s153 = sor.u32 %s151, %s152
    %p154 = scmp.eq.s32.totalorder %s153, 0
    %s156 = sadd.s32 %s155, 1
    %s157 = scalar_select %p154, %s155, %s156
    %p160 = pneg %p154
    %p161 = scmp.eq.s32.totalorder %s10, 1
    %p162 = por %p160, %p161
    %p163 = scmp.ne.s32.totalorder %s155, %s158
    %p164 = scmp.eq.s32.totalorder %s10, 0
    %p165 = por %p163, %p164
    %p166 = scmp.ne.s32.totalorder %s155, %s158
    %p167 = scmp.eq.s32.totalorder %s15, 1
    %p168 = por %p166, %p167
    %p169 = scmp.ne.s32.totalorder %s158, %s159
    %p170 = scmp.eq.s32.totalorder %s15, 0
    %p171 = por %p169, %p170
    %p172 = scmp.ne.s32.totalorder %s158, %s159
    %p173 = scmp.eq.s32.totalorder %s16, 1
    %p174 = por %p172, %p173
    %p176 = scmp.ne.s32.totalorder %s159, %s175
    %p177 = scmp.eq.s32.totalorder %s16, 0
    %p178 = por %p176, %p177
    %p179 = scmp.le.s32.totalorder 1, %s10
    %p180 = scmp.lt.s32.totalorder %s10, 3
    %p181 = pnand %p179, %p180
    %p182 = pneg %p181
    // Predicated region
    $region9: #{decoder_forward.18} parent=5 // pred_check
      _
    $region10: #{decoder_forward.18} parent=5 // pred_check_branch
      %184 = sbr.rel (%p181) target = $region12
    $region11: #{decoder_forward.18} parent=5 // pred_region
      %s185 = ssub.s32 %s10, 1
    $region12: #{decoder_forward.18} parent=5 // pred_fallthru
      _
    %p186 = scmp.lt.s32.totalorder %s10, 2
    // Predicated region
    $region13: #{decoder_forward.18} parent=5 // pred_check
      %p187 = pneg %p186
    $region14: #{decoder_forward.18} parent=5 // pred_check_branch
      %189 = sbr.rel (%p187) target = $region16
    $region15: #{decoder_forward.18} parent=5 // pred_region
      // Predicated region
      $region17: #{decoder_forward.18} parent=15 // pred_check
        %p190 = pneg %p51
      $region18: #{decoder_forward.18} parent=15 // pred_check_branch
        %192 = sbr.rel (%p190) target = $region20
      $region19: #{decoder_forward.18} parent=15 // pred_region
        %p193 = scmp.lt.s32.totalorder %s17, 1
        %s194 = scalar_select %p193, %s17, 1
        %p195 = scmp.lt.s32.totalorder %s18, 0
        %s196 = scalar_select %p195, %s18, 0
        %s197 = sadd.s32 %s196, %s194
        %s198 = smul.addr %s197, 4
        %s199 = scalar_lea.vmem %s0, %s198
      $region20: #{decoder_forward.18} parent=15 // pred_fallthru
        _
      // Predicated region
      $region21: #{decoder_forward.18} parent=15 // pred_check
        %p200 = pneg %p79
      $region22: #{decoder_forward.18} parent=15 // pred_check_branch
        %202 = sbr.rel (%p200) target = $region24
      $region23: #{decoder_forward.18} parent=15 // pred_region
        %p203 = scmp.lt.s32.totalorder %s17, 1
        %s204 = scalar_select %p203, %s17, 1
        %p205 = scmp.lt.s32.totalorder %s19, 0
        %s206 = scalar_select %p205, %s19, 0
        %s207 = sadd.s32 %s206, %s204
        %s208 = smul.addr %s207, 4
        %s209 = scalar_lea.vmem %s1, %s208
      $region24: #{decoder_forward.18} parent=15 // pred_fallthru
        _
      // Predicated region
      $region25: #{decoder_forward.18} parent=15 // pred_check
        %p210 = pneg %p107
      $region26: #{decoder_forward.18} parent=15 // pred_check_branch
        %212 = sbr.rel (%p210) target = $region28
      $region27: #{decoder_forward.18} parent=15 // pred_region
        %p213 = scmp.lt.s32.totalorder %s17, 1
        %s214 = scalar_select %p213, %s17, 1
        %p215 = scmp.lt.s32.totalorder %s19, 0
        %s216 = scalar_select %p215, %s19, 0
        %s217 = sadd.s32 %s216, %s214
        %s218 = smul.addr %s217, 4
        %s219 = scalar_lea.vmem %s2, %s218
      $region28: #{decoder_forward.18} parent=15 // pred_fallthru
        _
      // Predicated region
      $region29: #{decoder_forward.18} parent=15 // pred_check
        %p220 = pneg %p137
      $region30: #{decoder_forward.18} parent=15 // pred_check_branch
        %222 = sbr.rel (%p220) target = $region32
      $region31: #{decoder_forward.18} parent=15 // pred_region
        %p223 = scmp.lt.s32.totalorder %s17, 1
        %s224 = scalar_select %p223, %s17, 1
        %p225 = scmp.lt.s32.totalorder %s18, 0
        %s226 = scalar_select %p225, %s18, 0
        %p227 = scmp.lt.s32.totalorder %s19, 0
        %s228 = scalar_select %p227, %s19, 0
        %s229 = sadd.s32 %s228, %s226
        %s230 = sadd.s32 %s229, %s224
        %s231 = smul.addr %s230, 8
        %s232 = scalar_lea.vmem %s3, %s231
      $region32: #{decoder_forward.18} parent=15 // pred_fallthru
        _
    $region16: #{decoder_forward.18} parent=5 // pred_fallthru
      _
    %p233 = scmp.le.s32.totalorder 1, %s10
    %p234 = scmp.lt.s32.totalorder %s10, 3
    %p235 = pnand %p233, %p234
    %p236 = pneg %p235
    // Predicated region
    $region33: #{decoder_forward.18} parent=5 // pred_check
      _
    $region34: #{decoder_forward.18} parent=5 // pred_check_branch
      %238 = sbr.rel (%p235) target = $region36
    $region35: #{decoder_forward.18} parent=5 // pred_region
      %s239 = ssub.s32 %s10, 1
      %p240 = scmp.lt.s32.totalorder %s20, 1
      %s241 = scalar_select %p240, %s20, 1
      %p242 = scmp.lt.s32.totalorder %s21, 0
      %s243 = scalar_select %p242, %s21, 0
      %s244 = sadd.s32 %s243, %s241
      %s245 = smul.addr %s244, 4
      %s246 = scalar_lea.vmem %s0, %s245
      %p247 = pneg %p57
      %p248 = pneg %p54
      %p249 = scmp.lt.s32.totalorder %s20, 1
      %s250 = scalar_select %p249, %s20, 1
      %p251 = scmp.lt.s32.totalorder %s22, 0
      %s252 = scalar_select %p251, %s22, 0
      %s253 = sadd.s32 %s252, %s250
      %s254 = smul.addr %s253, 4
      %s255 = scalar_lea.vmem %s1, %s254
      %p256 = pneg %p85
      %p257 = pneg %p82
      %p258 = scmp.lt.s32.totalorder %s20, 1
      %s259 = scalar_select %p258, %s20, 1
      %p260 = scmp.lt.s32.totalorder %s22, 0
      %s261 = scalar_select %p260, %s22, 0
      %s262 = sadd.s32 %s261, %s259
      %s263 = smul.addr %s262, 4
      %s264 = scalar_lea.vmem %s2, %s263
      %p265 = pneg %p113
      %p266 = pneg %p110
      %p267 = scmp.lt.s32.totalorder %s20, 1
      %s268 = scalar_select %p267, %s20, 1
      %p269 = scmp.lt.s32.totalorder %s21, 0
      %s270 = scalar_select %p269, %s21, 0
      %p271 = scmp.lt.s32.totalorder %s22, 0
      %s272 = scalar_select %p271, %s22, 0
      %s273 = sadd.s32 %s272, %s270
      %s274 = sadd.s32 %s273, %s268
      %s275 = smul.addr %s274, 8
      %s276 = scalar_lea.vmem %s3, %s275
      %p277 = pneg %p143
      %p278 = pneg %p140
      %p279 = pneg %p171
      %p280 = pneg %p168
      %p281 = scmp.lt.s32.totalorder %s20, 1
      %s282 = scalar_select %p281, %s20, 1
      %p283 = scmp.lt.s32.totalorder %s21, 0
      %s284 = scalar_select %p283, %s21, 0
      %s285 = sadd.s32 %s284, %s282
      %s286 = smul.addr %s285, 4
      %s287 = scalar_lea.vmem %s4, %s286
      %p288 = scmp.lt.s32.totalorder %s20, 1
      %s289 = scalar_select %p288, %s20, 1
      %p290 = scmp.lt.s32.totalorder %s21, 0
      %s291 = scalar_select %p290, %s21, 0
      %s292 = sadd.s32 %s291, %s289
      %s293 = smul.addr %s292, 4
      %s294 = scalar_lea.vmem %s0, %s293
      %p295 = scmp.lt.s32.totalorder %s20, 1
      %s296 = scalar_select %p295, %s20, 1
      %p297 = scmp.lt.s32.totalorder %s22, 0
      %s298 = scalar_select %p297, %s22, 0
      %s299 = sadd.s32 %s298, %s296
      %s300 = smul.addr %s299, 4
      %s301 = scalar_lea.vmem %s1, %s300
      %p302 = scmp.lt.s32.totalorder %s20, 1
      %s303 = scalar_select %p302, %s20, 1
      %p304 = scmp.lt.s32.totalorder %s22, 0
      %s305 = scalar_select %p304, %s22, 0
      %s306 = sadd.s32 %s305, %s303
      %s307 = smul.addr %s306, 4
      %s308 = scalar_lea.vmem %s2, %s307
      %p309 = scmp.lt.s32.totalorder %s20, 1
      %s310 = scalar_select %p309, %s20, 1
      %p311 = scmp.lt.s32.totalorder %s21, 0
      %s312 = scalar_select %p311, %s21, 0
      %p313 = scmp.lt.s32.totalorder %s22, 0
      %s314 = scalar_select %p313, %s22, 0
      %s315 = sadd.s32 %s314, %s312
      %s316 = sadd.s32 %s315, %s310
      %s317 = smul.addr %s316, 8
      %s318 = scalar_lea.vmem %s3, %s317
      %p319 = scmp.lt.s32.totalorder %s20, 1
      %s320 = scalar_select %p319, %s20, 1
      %p321 = scmp.lt.s32.totalorder %s21, 0
      %s322 = scalar_select %p321, %s21, 0
      %s323 = sadd.s32 %s322, %s320
      %s324 = smul.addr %s323, 4
      %s325 = scalar_lea.vmem %s4, %s324
      %p327 = scmp.eq.s32.totalorder %s22, 0
      // Predicated region
      $region37: #{decoder_forward.18} parent=35 // pred_check
        %p328 = pneg %p327
      $region38: #{decoder_forward.18} parent=35 // pred_check_branch
        %330 = sbr.rel (%p328) target = $region40
      $region39: #{decoder_forward.18} parent=35 // pred_region
        %vm331 = vcmask 7168
        %332 = vst.msk [vmem:[#allocation2] sm:$0xff] %vm331, -inf
        %333 = vst.msk [vmem:[#allocation2 + $0x8] sm:$0xff] %vm331, -inf
        %334 = vst.msk [vmem:[#allocation2 + $0x10] sm:$0xff] %vm331, -inf
        %335 = vst.msk [vmem:[#allocation2 + $0x18] sm:$0xff] %vm331, -inf
        %336 = vst.msk [vmem:[#allocation3] sm:$0xff] %vm331, 0.0
        %337 = vst.msk [vmem:[#allocation3 + $0x8] sm:$0xff] %vm331, 0.0
        %338 = vst.msk [vmem:[#allocation3 + $0x10] sm:$0xff] %vm331, 0.0
        %339 = vst.msk [vmem:[#allocation3 + $0x18] sm:$0xff] %vm331, 0.0
        %vm340 = vcmask 64512
        %341 = vst.msk [vmem:[#allocation4] sm:$0xff] %vm340, 0.0
        %342 = vst.msk [vmem:[#allocation4 + $0x8] sm:$0xff] %vm340, 0.0
        %343 = vst.msk [vmem:[#allocation4 + $0x10] sm:$0xff] %vm340, 0.0
        %344 = vst.msk [vmem:[#allocation4 + $0x18] sm:$0xff] %vm340, 0.0
      $region40: #{decoder_forward.18} parent=35 // pred_fallthru
        _
      %v345 = vld [vmem:[%s294] sm:$0xf]
      %v346 = vunpack.c.l.bf16 %v345
      %v347 = vmul.f32 %v346, 0.35355338
      %v348 = vpack.c.bf16 %v347, %v347
      %v349 = vld [vmem:[%s301] sm:$0xf]
      %v350 = vld [vmem:[%s308] sm:$0xf]
      %v351 = vld [vmem:[%s318] sm:$0xff]
      %vm352 = vcmask 64512
      %v354 = vsel %vm352, %v348, 0
      %v357 = vsel %vm352, %v349, 0
      %359 = vmatpush.bf16.xpose.msra.mxu0 0
      %360 = vmatpush.bf16.xpose.msra.mxu0 0
      %361 = vmatpush.bf16.xpose.msra.mxu0 0
      %362 = vmatpush.bf16.xpose.msra.mxu0 0
      %363 = vmatpush.bf16.xpose.msra.mxu0 0
      %364 = vmatpush.bf16.xpose.msra.mxu0 0
      %365 = vmatpush.bf16.xpose.msra.mxu0 0
      %366 = vmatpush.bf16.xpose.msra.mxu0 %v357
      %367 = vmatmul.bf16.gmra.mxu0 %v354
      %v368 = vpop.f32.mrf.mxu0
      %v369 = vadd.f32 %v351, %v368
      %v370 = vpop.f32.mrf.mxu0
      %371 = vdwg.mxu0
      %v372 = vld [vmem:[#allocation2] sm:$0xff]
      %v373 = vsel %vm352, %v369, -inf
      %374 = vmax.xlane.f32.xlu0 %v373
      %v375 = vpop.xlane.xlu0 %374
      %v376 = vmax.f32 %v372, %v375
      %v377 = vsub.f32 %v372, %v376
      %v378 = vmul.f32 %v377, 1.442695
      %v379 = vpow.pop %v378
      %381 = vset.pattern.permute.xlu0 0
      %382 = vperm.xlu0 %381, %v376
      %v383 = vpop.permute.xlu0 %382
      %v385 = vsub.f32 %v369, %v383
      %v386 = vmul.f32 %v385, 1.442695
      %v387 = vpow.pop %v386
      %v388 = vld [vmem:[#allocation3] sm:$0xff]
      %v389 = vmul.f32 %v379, %v388
      %v390 = vsel %vm352, %v387, 0.0
      %391 = vadd.xlane.f32.xlu0 %v390
      %v392 = vpop.xlane.xlu0 %391
      %v393 = vadd.f32 %v389, %v392
      %vm394 = vcmask 7168
      %395 = vst.msk [vmem:[#allocation3] sm:$0xff] %vm394, %v393
      %v396 = vld [vmem:[#allocation4] sm:$0xff]
      %398 = vset.pattern.permute.xlu0 0
      %399 = vperm.xlu0 %398, %v379
      %v400 = vpop.permute.xlu0 %399
      %v402 = vmul.f32 %v400, %v396
      %v403 = vpack.c.bf16 %v387, %v387
      %v405 = vsel %vm352, %v403, 0
      %vm407 = vcmask 1043456
      %v409 = vsel %vm407, %v350, 0
      %411 = vmatpush.bf16.msra.mxu0 0
      %412 = vmatpush.bf16.msra.mxu0 0
      %413 = vmatpush.bf16.msra.mxu0 0
      %414 = vmatpush.bf16.msra.mxu0 0
      %415 = vmatpush.bf16.msra.mxu0 0
      %416 = vmatpush.bf16.msra.mxu0 0
      %417 = vmatpush.bf16.msra.mxu0 0
      %418 = vmatpush.bf16.msra.mxu0 %v409
      %419 = vmatmul.bf16.gmra.mxu0 %v405
      %v420 = vpop.f32.mrf.mxu0
      %v421 = vadd.f32 0.0, %v420
      %v422 = vpop.f32.mrf.mxu0
      %423 = vdwg.mxu0
      %v424 = vadd.f32 %v402, %v421
      %425 = vst.msk [vmem:[#allocation4] sm:$0xff] %vm352, %v424
      %426 = vst.msk [vmem:[#allocation2] sm:$0xff] %vm394, %v376
      %v428 = vunpack.c.l.b16 %v348
      %v429 = vpack.c.b16 %v428, %v428
      %430 = vrot.lane.b32.xlu0 %v429, 120
      %v431 = vpop.permute.xlu0 %430
      %v433 = vunpack.c.l.b16 %v349
      %v434 = vpack.c.b16 %v433, %v433
      %435 = vrot.lane.b32.xlu0 %v434, 120
      %v436 = vpop.permute.xlu0 %435
      %v438 = vsel %vm352, %v431, 0
      %v441 = vsel %vm352, %v436, 0
      %443 = vmatpush.bf16.xpose.msra.mxu0 0
      %444 = vmatpush.bf16.xpose.msra.mxu0 0
      %445 = vmatpush.bf16.xpose.msra.mxu0 0
      %446 = vmatpush.bf16.xpose.msra.mxu0 0
      %447 = vmatpush.bf16.xpose.msra.mxu0 0
      %448 = vmatpush.bf16.xpose.msra.mxu0 0
      %449 = vmatpush.bf16.xpose.msra.mxu0 0
      %450 = vmatpush.bf16.xpose.msra.mxu0 %v441
      %451 = vmatmul.bf16.gmra.mxu0 %v438
      %v452 = vpop.f32.mrf.mxu0
      %v453 = vadd.f32 %v351, %v452
      %v454 = vpop.f32.mrf.mxu0
      %455 = vdwg.mxu0
      %s456 = scalar_lea.vmem [#allocation2], 8
      %v457 = vld [vmem:[%s456] sm:$0xff]
      %v458 = vsel %vm352, %v453, -inf
      %459 = vmax.xlane.f32.xlu0 %v458
      %v460 = vpop.xlane.xlu0 %459
      %v461 = vmax.f32 %v457, %v460
      %v462 = vsub.f32 %v457, %v461
      %v463 = vmul.f32 %v462, 1.442695
      %v464 = vpow.pop %v463
      %466 = vset.pattern.permute.xlu0 0
      %467 = vperm.xlu0 %466, %v461
      %v468 = vpop.permute.xlu0 %467
      %v470 = vsub.f32 %v453, %v468
      %v471 = vmul.f32 %v470, 1.442695
      %v472 = vpow.pop %v471
      %s473 = scalar_lea.vmem [#allocation3], 8
      %v474 = vld [vmem:[%s473] sm:$0xff]
      %v475 = vmul.f32 %v464, %v474
      %v476 = vsel %vm352, %v472, 0.0
      %477 = vadd.xlane.f32.xlu0 %v476
      %v478 = vpop.xlane.xlu0 %477
      %v479 = vadd.f32 %v475, %v478
      %480 = vst.msk [vmem:[%s473] sm:$0xff] %vm394, %v479
      %s481 = scalar_lea.vmem [#allocation4], 8
      %v482 = vld [vmem:[%s481] sm:$0xff]
      %484 = vset.pattern.permute.xlu0 0
      %485 = vperm.xlu0 %484, %v464
      %v486 = vpop.permute.xlu0 %485
      %v488 = vmul.f32 %v486, %v482
      %v489 = vpack.c.bf16 %v472, %v472
      %v491 = vunpack.c.l.b16 %v350
      %v492 = vpack.c.b16 %v491, %v491
      %493 = vrot.lane.b32.xlu0 %v492, 120
      %v494 = vpop.permute.xlu0 %493
      %v496 = vsel %vm352, %v489, 0
      %v499 = vsel %vm407, %v494, 0
      %501 = vmatpush.bf16.msra.mxu0 0
      %502 = vmatpush.bf16.msra.mxu0 0
      %503 = vmatpush.bf16.msra.mxu0 0
      %504 = vmatpush.bf16.msra.mxu0 0
      %505 = vmatpush.bf16.msra.mxu0 0
      %506 = vmatpush.bf16.msra.mxu0 0
      %507 = vmatpush.bf16.msra.mxu0 0
      %508 = vmatpush.bf16.msra.mxu0 %v499
      %509 = vmatmul.bf16.gmra.mxu0 %v496
      %v510 = vpop.f32.mrf.mxu0
      %v511 = vadd.f32 0.0, %v510
      %v512 = vpop.f32.mrf.mxu0
      %513 = vdwg.mxu0
      %v514 = vadd.f32 %v488, %v511
      %515 = vst.msk [vmem:[%s481] sm:$0xff] %vm352, %v514
      %516 = vst.msk [vmem:[%s456] sm:$0xff] %vm394, %v461
      %517 = vrot.lane.b32.xlu0 %v429, 112
      %v518 = vpop.permute.xlu0 %517
      %519 = vrot.lane.b32.xlu0 %v434, 112
      %v520 = vpop.permute.xlu0 %519
      %v522 = vsel %vm352, %v518, 0
      %v525 = vsel %vm352, %v520, 0
      %527 = vmatpush.bf16.xpose.msra.mxu0 0
      %528 = vmatpush.bf16.xpose.msra.mxu0 0
      %529 = vmatpush.bf16.xpose.msra.mxu0 0
      %530 = vmatpush.bf16.xpose.msra.mxu0 0
      %531 = vmatpush.bf16.xpose.msra.mxu0 0
      %532 = vmatpush.bf16.xpose.msra.mxu0 0
      %533 = vmatpush.bf16.xpose.msra.mxu0 0
      %534 = vmatpush.bf16.xpose.msra.mxu0 %v525
      %535 = vmatmul.bf16.gmra.mxu0 %v522
      %v536 = vpop.f32.mrf.mxu0
      %v537 = vadd.f32 %v351, %v536
      %v538 = vpop.f32.mrf.mxu0
      %539 = vdwg.mxu0
      %s540 = scalar_lea.vmem [#allocation2], 16
      %v541 = vld [vmem:[%s540] sm:$0xff]
      %v542 = vsel %vm352, %v537, -inf
      %543 = vmax.xlane.f32.xlu0 %v542
      %v544 = vpop.xlane.xlu0 %543
      %v545 = vmax.f32 %v541, %v544
      %v546 = vsub.f32 %v541, %v545
      %v547 = vmul.f32 %v546, 1.442695
      %v548 = vpow.pop %v547
      %550 = vset.pattern.permute.xlu0 0
      %551 = vperm.xlu0 %550, %v545
      %v552 = vpop.permute.xlu0 %551
      %v554 = vsub.f32 %v537, %v552
      %v555 = vmul.f32 %v554, 1.442695
      %v556 = vpow.pop %v555
      %s557 = scalar_lea.vmem [#allocation3], 16
      %v558 = vld [vmem:[%s557] sm:$0xff]
      %v559 = vmul.f32 %v548, %v558
      %v560 = vsel %vm352, %v556, 0.0
      %561 = vadd.xlane.f32.xlu0 %v560
      %v562 = vpop.xlane.xlu0 %561
      %v563 = vadd.f32 %v559, %v562
      %564 = vst.msk [vmem:[%s557] sm:$0xff] %vm394, %v563
      %s565 = scalar_lea.vmem [#allocation4], 16
      %v566 = vld [vmem:[%s565] sm:$0xff]
      %568 = vset.pattern.permute.xlu0 0
      %569 = vperm.xlu0 %568, %v548
      %v570 = vpop.permute.xlu0 %569
      %v572 = vmul.f32 %v570, %v566
      %v573 = vpack.c.bf16 %v556, %v556
      %574 = vrot.lane.b32.xlu0 %v492, 112
      %v575 = vpop.permute.xlu0 %574
      %v577 = vsel %vm352, %v573, 0
      %v580 = vsel %vm407, %v575, 0
      %582 = vmatpush.bf16.msra.mxu0 0
      %583 = vmatpush.bf16.msra.mxu0 0
      %584 = vmatpush.bf16.msra.mxu0 0
      %585 = vmatpush.bf16.msra.mxu0 0
      %586 = vmatpush.bf16.msra.mxu0 0
      %587 = vmatpush.bf16.msra.mxu0 0
      %588 = vmatpush.bf16.msra.mxu0 0
      %589 = vmatpush.bf16.msra.mxu0 %v580
      %590 = vmatmul.bf16.gmra.mxu0 %v577
      %v591 = vpop.f32.mrf.mxu0
      %v592 = vadd.f32 0.0, %v591
      %v593 = vpop.f32.mrf.mxu0
      %594 = vdwg.mxu0
      %v595 = vadd.f32 %v572, %v592
      %596 = vst.msk [vmem:[%s565] sm:$0xff] %vm352, %v595
      %597 = vst.msk [vmem:[%s540] sm:$0xff] %vm394, %v545
      %598 = vrot.lane.b32.xlu0 %v429, 104
      %v599 = vpop.permute.xlu0 %598
      %600 = vrot.lane.b32.xlu0 %v434, 104
      %v601 = vpop.permute.xlu0 %600
      %v603 = vsel %vm352, %v599, 0
      %v606 = vsel %vm352, %v601, 0
      %608 = vmatpush.bf16.xpose.msra.mxu0 0
      %609 = vmatpush.bf16.xpose.msra.mxu0 0
      %610 = vmatpush.bf16.xpose.msra.mxu0 0
      %611 = vmatpush.bf16.xpose.msra.mxu0 0
      %612 = vmatpush.bf16.xpose.msra.mxu0 0
      %613 = vmatpush.bf16.xpose.msra.mxu0 0
      %614 = vmatpush.bf16.xpose.msra.mxu0 0
      %615 = vmatpush.bf16.xpose.msra.mxu0 %v606
      %616 = vmatmul.bf16.gmra.mxu0 %v603
      %v617 = vpop.f32.mrf.mxu0
      %v618 = vadd.f32 %v351, %v617
      %v619 = vpop.f32.mrf.mxu0
      %620 = vdwg.mxu0
      %s621 = scalar_lea.vmem [#allocation2], 24
      %v622 = vld [vmem:[%s621] sm:$0xff]
      %v623 = vsel %vm352, %v618, -inf
      %624 = vmax.xlane.f32.xlu0 %v623
      %v625 = vpop.xlane.xlu0 %624
      %v626 = vmax.f32 %v622, %v625
      %v627 = vsub.f32 %v622, %v626
      %v628 = vmul.f32 %v627, 1.442695
      %v629 = vpow.pop %v628
      %631 = vset.pattern.permute.xlu0 0
      %632 = vperm.xlu0 %631, %v626
      %v633 = vpop.permute.xlu0 %632
      %v635 = vsub.f32 %v618, %v633
      %v636 = vmul.f32 %v635, 1.442695
      %v637 = vpow.pop %v636
      %s638 = scalar_lea.vmem [#allocation3], 24
      %v639 = vld [vmem:[%s638] sm:$0xff]
      %v640 = vmul.f32 %v629, %v639
      %v641 = vsel %vm352, %v637, 0.0
      %642 = vadd.xlane.f32.xlu0 %v641
      %v643 = vpop.xlane.xlu0 %642
      %v644 = vadd.f32 %v640, %v643
      %645 = vst.msk [vmem:[%s638] sm:$0xff] %vm394, %v644
      %s646 = scalar_lea.vmem [#allocation4], 24
      %v647 = vld [vmem:[%s646] sm:$0xff]
      %649 = vset.pattern.permute.xlu0 0
      %650 = vperm.xlu0 %649, %v629
      %v651 = vpop.permute.xlu0 %650
      %v653 = vmul.f32 %v651, %v647
      %v654 = vpack.c.bf16 %v637, %v637
      %655 = vrot.lane.b32.xlu0 %v492, 104
      %v656 = vpop.permute.xlu0 %655
      %v658 = vsel %vm352, %v654, 0
      %v661 = vsel %vm407, %v656, 0
      %663 = vmatpush.bf16.msra.mxu0 0
      %664 = vmatpush.bf16.msra.mxu0 0
      %665 = vmatpush.bf16.msra.mxu0 0
      %666 = vmatpush.bf16.msra.mxu0 0
      %667 = vmatpush.bf16.msra.mxu0 0
      %668 = vmatpush.bf16.msra.mxu0 0
      %669 = vmatpush.bf16.msra.mxu0 0
      %670 = vmatpush.bf16.msra.mxu0 %v661
      %671 = vmatmul.bf16.gmra.mxu0 %v658
      %v672 = vpop.f32.mrf.mxu0
      %v673 = vadd.f32 0.0, %v672
      %v674 = vpop.f32.mrf.mxu0
      %675 = vdwg.mxu0
      %v676 = vadd.f32 %v653, %v673
      %677 = vst.msk [vmem:[%s646] sm:$0xff] %vm352, %v676
      %678 = vst.msk [vmem:[%s621] sm:$0xff] %vm394, %v626
      // Predicated region
      $region41: #{decoder_forward.18} parent=35 // pred_check
        %p679 = pneg %p327
      $region42: #{decoder_forward.18} parent=35 // pred_check_branch
        %681 = sbr.rel (%p679) target = $region44
      $region43: #{decoder_forward.18} parent=35 // pred_region
        %v682 = vld [vmem:[#allocation4] sm:$0xff]
        %v683 = vld [vmem:[#allocation3] sm:$0xff]
        %v684 = vrcp.pop %v683
        %686 = vset.pattern.permute.xlu0 0
        %687 = vperm.xlu0 %686, %v684
        %v688 = vpop.permute.xlu0 %687
        %v690 = vmul.f32 %v682, %v688
        %v691 = vpack.c.bf16 %v690, %v690
        %v692 = vld [vmem:[%s481] sm:$0xff]
        %v693 = vld [vmem:[%s473] sm:$0xff]
        %v694 = vrcp.pop %v693
        %696 = vset.pattern.permute.xlu0 0
        %697 = vperm.xlu0 %696, %v694
        %v698 = vpop.permute.xlu0 %697
        %v700 = vmul.f32 %v692, %v698
        %v701 = vpack.c.bf16 %v700, %v700
        %v702 = vld [vmem:[%s565] sm:$0xff]
        %v703 = vld [vmem:[%s557] sm:$0xff]
        %v704 = vrcp.pop %v703
        %706 = vset.pattern.permute.xlu0 0
        %707 = vperm.xlu0 %706, %v704
        %v708 = vpop.permute.xlu0 %707
        %v710 = vmul.f32 %v702, %v708
        %v711 = vpack.c.bf16 %v710, %v710
        %v712 = vld [vmem:[%s646] sm:$0xff]
        %v713 = vld [vmem:[%s638] sm:$0xff]
        %v714 = vrcp.pop %v713
        %716 = vset.pattern.permute.xlu0 0
        %717 = vperm.xlu0 %716, %v714
        %v718 = vpop.permute.xlu0 %717
        %v720 = vmul.f32 %v712, %v718
        %v721 = vpack.c.bf16 %v720, %v720
        %v723 = vunpack.c.l.b16 %v701
        %v724 = vpack.c.b16 %v723, %v723
        %725 = vrot.lane.b32.xlu0 %v724, 8
        %v726 = vpop.permute.xlu0 %725
        %v728 = vunpack.c.l.b16 %v711
        %v729 = vpack.c.b16 %v728, %v728
        %730 = vrot.lane.b32.xlu0 %v729, 16
        %v731 = vpop.permute.xlu0 %730
        %v733 = vunpack.c.l.b16 %v721
        %v734 = vpack.c.b16 %v733, %v733
        %735 = vrot.lane.b32.xlu0 %v734, 24
        %v736 = vpop.permute.xlu0 %735
        %v739 = vsel %vm352, %v691, %v726
        %vm740 = vcmask 130048
        %v742 = vsel %vm740, %v739, %v731
        %vm743 = vcmask 195584
        %v745 = vsel %vm743, %v742, %v736
        %vm747 = vcmask 257024
        %748 = vst.msk [vmem:[%s325] sm:$0xf] %vm747, %v745
      $region44: #{decoder_forward.18} parent=35 // pred_fallthru
        _
      %p749 = scmp.lt.s32.totalorder %s20, 1
      %s750 = scalar_select %p749, %s20, 1
      %p751 = scmp.lt.s32.totalorder %s21, 0
      %s752 = scalar_select %p751, %s21, 0
      %s753 = sadd.s32 %s752, %s750
      %s754 = smul.addr %s753, 4
      %s755 = scalar_lea.vmem %s4, %s754
      // Predicated region
      $region45: #{decoder_forward.18} parent=35 // pred_check
        %p756 = pneg %p168
      $region46: #{decoder_forward.18} parent=35 // pred_check_branch
        %758 = sbr.rel (%p756) target = $region48
      $region47: #{decoder_forward.18} parent=35 // pred_region
        _
      $region48: #{decoder_forward.18} parent=35 // pred_fallthru
        _
    $region36: #{decoder_forward.18} parent=5 // pred_fallthru
      _
    %p759 = scmp.le.s32.totalorder 2, %s10
    // Predicated region
    $region49: #{decoder_forward.18} parent=5 // pred_check
      %p760 = pneg %p759
    $region50: #{decoder_forward.18} parent=5 // pred_check_branch
      %762 = sbr.rel (%p760) target = $region52
    $region51: #{decoder_forward.18} parent=5 // pred_region
      %s763 = ssub.s32 %s10, 2
      // Predicated region
      $region53: #{decoder_forward.18} parent=51 // pred_check
        %p764 = pneg %p174
      $region54: #{decoder_forward.18} parent=51 // pred_check_branch
        %766 = sbr.rel (%p764) target = $region56
      $region55: #{decoder_forward.18} parent=51 // pred_region
        %p767 = scmp.lt.s32.totalorder %s23, 1
        %s768 = scalar_select %p767, %s23, 1
        %p769 = scmp.lt.s32.totalorder %s24, 0
        %s770 = scalar_select %p769, %s24, 0
        %s771 = sadd.s32 %s770, %s768
        %s772 = smul.addr %s771, 4
        %s773 = scalar_lea.vmem %s4, %s772
      $region56: #{decoder_forward.18} parent=51 // pred_fallthru
        _
    $region52: #{decoder_forward.18} parent=5 // pred_fallthru
      _
  $region6: #{decoder_forward.18} parent=0 // loop_footer
    %s14 = sadd.s32 1, %s10
  $region7: #{decoder_forward.18} parent=0 // loop_footer_branch
    %9 = sbr.rel target = $region3
  $region8: #{decoder_forward.18} parent=0 // loop_exit
    _

// kernel: decoder_forward.21
$region0: #{decoder_forward.21}
  #allocation0 [shape = 'u32[]', space=smem, size = 0x4, offset = 0x4, fixed_abs, tag = 'smem constant byte address 0x4 - core index']
  #allocation1 [shape = 'u32[72,128]{1,0:T(1,128)}', space=vmem, size = 0x9000, scoped, tag = 'internal scratch']
  #allocation2 [shape = 'f32[16,64]{1,0:T(8,128)}', space=vmem, size = 0x2000, scoped, tag = 'scratch operand']
  %s0 = inlined_call_operand.vmem [shape: bf16[16,32], index: 0, kind: input, shape index: {}]
  %s1 = inlined_call_operand.vmem [shape: bf16[32,64], index: 1, kind: input, shape index: {}]
  %s2 = inlined_call_operand.vmem [shape: f32[1,64], index: 2, kind: input, shape index: {}]
  %s3 = inlined_call_operand.vmem [shape: bf16[16,64], index: 3, kind: output, shape index: {}]
  %s4 = sld [smem:[#allocation0]]
  $region30: #{decoder_forward.21} parent=0
    _
  %s6 = ssub.s32 1, %s4
  %s7 = scalar_select 0, %s6, %s4
  // Predicated region
  $region2: #{decoder_forward.21} parent=0 // pred_check
    _
  $region3: #{decoder_forward.21} parent=0 // pred_check_branch
    %9 = sbr.rel (0) target = $region5
  $region4: #{decoder_forward.21} parent=0 // pred_region
    _
  $region5: #{decoder_forward.21} parent=0 // pred_fallthru
    _
  // Predicated region
  $region6: #{decoder_forward.21} parent=0 // pred_check
    _
  $region7: #{decoder_forward.21} parent=0 // pred_check_branch
    %11 = sbr.rel (0) target = $region9
  $region8: #{decoder_forward.21} parent=0 // pred_region
    _
  $region9: #{decoder_forward.21} parent=0 // pred_fallthru
    _
  // Predicated region
  $region10: #{decoder_forward.21} parent=0 // pred_check
    _
  $region11: #{decoder_forward.21} parent=0 // pred_check_branch
    %13 = sbr.rel (0) target = $region13
  $region12: #{decoder_forward.21} parent=0 // pred_region
    _
  $region13: #{decoder_forward.21} parent=0 // pred_fallthru
    _
  %p15 = scmp.eq.s32.totalorder 0, 0
  // Predicated region
  $region14: #{decoder_forward.21} parent=0 // pred_check
    %p16 = pneg %p15
  $region15: #{decoder_forward.21} parent=0 // pred_check_branch
    %18 = sbr.rel (%p16) target = $region17
  $region16: #{decoder_forward.21} parent=0 // pred_region
    %vm19 = vcmask 523264
    %20 = vst.msk [vmem:[#allocation2] sm:$0xff] %vm19, 0.0
    %21 = vst.msk [vmem:[#allocation2 + $0x8] sm:$0xff] %vm19, 0.0
  $region17: #{decoder_forward.21} parent=0 // pred_fallthru
    _
  %v22 = vld [vmem:[#allocation2] sm:$0xff]
  %v23 = vld [vmem:[#allocation2 + $0x8] sm:$0xff]
  %v24 = vld [vmem:[%s0] sm:$0xf]
  %v25 = vld [vmem:[%s0 + $0x4] sm:$0xf]
  %v26 = vld [vmem:[%s1] sm:$0xf]
  %v27 = vld [vmem:[%s1 + $0x4] sm:$0xf]
  %v28 = vld [vmem:[%s1 + $0x8] sm:$0xf]
  %v29 = vld [vmem:[%s1 + $0xc] sm:$0xf]
  %v32 = vunpack.c.l.b16 %v24
  %v33 = vunpack.c.l.b16 %v25
  %v34 = vpack.c.b16 %v33, %v32
  %v39 = vunpack.c.l.b16 %v26
  %v40 = vunpack.c.l.b16 %v27
  %v41 = vunpack.c.l.b16 %v28
  %v42 = vunpack.c.l.b16 %v29
  %v43 = vpack.c.b16 %v40, %v39
  %v44 = vpack.c.b16 %v42, %v41
  %vm47 = vcmask 261120
  %v49 = vsel %vm47, %v34, 0
  %51 = vmatpush.bf16.msra.mxu0 0
  %52 = vmatpush.bf16.msra.mxu0 0
  %53 = vmatpush.bf16.msra.mxu0 0
  %54 = vmatpush.bf16.msra.mxu0 0
  %55 = vmatpush.bf16.msra.mxu0 0
  %56 = vmatpush.bf16.msra.mxu0 0
  %57 = vmatpush.bf16.msra.mxu0 %v44
  %58 = vmatpush.bf16.msra.mxu0 %v43
  %59 = vmatmul.bf16.gmra.mxu0 %v49
  %v60 = vpop.f32.mrf.mxu0
  %v61 = vadd.f32 0.0, %v60
  %v62 = vpop.f32.mrf.mxu0
  %v63 = vadd.f32 0.0, %v62
  %64 = vdwg.mxu0
  %v65 = vadd.f32 %v22, %v61
  %v66 = vadd.f32 %v23, %v63
  %vm67 = vcmask 523264
  %68 = vst.msk [vmem:[#allocation2] sm:$0xff] %vm67, %v65
  %69 = vst.msk [vmem:[#allocation2 + $0x8] sm:$0xff] %vm67, %v66
  // Predicated region
  $region18: #{decoder_forward.21} parent=0 // pred_check
    %p70 = pneg %p15
  $region19: #{decoder_forward.21} parent=0 // pred_check_branch
    %72 = sbr.rel (%p70) target = $region21
  $region20: #{decoder_forward.21} parent=0 // pred_region
    %v73 = vld [vmem:[#allocation2] sm:$0xff]
    %v74 = vld [vmem:[#allocation2 + $0x8] sm:$0xff]
    %v75 = vld [vmem:[%s2] sm:$0x1]
    %v77 = vperm.slane %v75, 0
    %v79 = vadd.f32 %v73, %v77
    %v80 = vadd.f32 %v74, %v77
    %v81 = vpack.c.bf16 %v79, %v79
    %v82 = vpack.c.bf16 %v80, %v80
    %vm83 = vcmask 519168
    %84 = vst.msk [vmem:[%s3] sm:$0xf] %vm83, %v81
    %85 = vst.msk [vmem:[%s3 + $0x4] sm:$0xf] %vm83, %v82
  $region21: #{decoder_forward.21} parent=0 // pred_fallthru
    _
  // Predicated region
  $region22: #{decoder_forward.21} parent=0 // pred_check
    _
  $region23: #{decoder_forward.21} parent=0 // pred_check_branch
    %87 = sbr.rel (0) target = $region25
  $region24: #{decoder_forward.21} parent=0 // pred_region
    _
  $region25: #{decoder_forward.21} parent=0 // pred_fallthru
    _
  // Predicated region
  $region26: #{decoder_forward.21} parent=0 // pred_check
    _
  $region27: #{decoder_forward.21} parent=0 // pred_check_branch
    %89 = sbr.rel (0) target = $region29
  $region28: #{decoder_forward.21} parent=0 // pred_region
    _
  $region29: #{decoder_forward.21} parent=0 // pred_fallthru
    _

// kernel: decoder_forward.24
$region0: #{decoder_forward.24}
  #allocation0 [shape = 'u32[]', space=smem, size = 0x4, offset = 0x4, fixed_abs, tag = 'smem constant byte address 0x4 - core index']
  #allocation1 [shape = 'u32[72,128]{1,0:T(1,128)}', space=vmem, size = 0x9000, scoped, tag = 'internal scratch']
  #allocation2 [shape = 'f32[16,32]{1,0:T(8,128)}', space=vmem, size = 0x2000, scoped, tag = 'scratch operand']
  %s0 = inlined_call_operand.vmem [shape: bf16[16,32], index: 0, kind: input, shape index: {}]
  %s1 = inlined_call_operand.vmem [shape: bf16[32,64], index: 1, kind: input, shape index: {}]
  %s2 = inlined_call_operand.vmem [shape: f32[1,64], index: 2, kind: input, shape index: {}]
  %s3 = inlined_call_operand.vmem [shape: bf16[64,32], index: 3, kind: input, shape index: {}]
  %s4 = inlined_call_operand.vmem [shape: f32[1,32], index: 4, kind: input, shape index: {}]
  %s5 = inlined_call_operand.vmem [shape: f32[1,32], index: 5, kind: input, shape index: {}]
  %s6 = inlined_call_operand.vmem [shape: f32[1,32], index: 6, kind: input, shape index: {}]
  %s7 = inlined_call_operand.vmem [shape: bf16[16,32], index: 7, kind: output, shape index: {}]
  %s8 = sld [smem:[#allocation0]]
  $region46: #{decoder_forward.24} parent=0
    _
  %s10 = ssub.s32 1, %s8
  %s11 = scalar_select 0, %s10, %s8
  // Predicated region
  $region2: #{decoder_forward.24} parent=0 // pred_check
    _
  $region3: #{decoder_forward.24} parent=0 // pred_check_branch
    %13 = sbr.rel (0) target = $region5
  $region4: #{decoder_forward.24} parent=0 // pred_region
    _
  $region5: #{decoder_forward.24} parent=0 // pred_fallthru
    _
  // Predicated region
  $region6: #{decoder_forward.24} parent=0 // pred_check
    _
  $region7: #{decoder_forward.24} parent=0 // pred_check_branch
    %15 = sbr.rel (0) target = $region9
  $region8: #{decoder_forward.24} parent=0 // pred_region
    _
  $region9: #{decoder_forward.24} parent=0 // pred_fallthru
    _
  // Predicated region
  $region10: #{decoder_forward.24} parent=0 // pred_check
    _
  $region11: #{decoder_forward.24} parent=0 // pred_check_branch
    %17 = sbr.rel (0) target = $region13
  $region12: #{decoder_forward.24} parent=0 // pred_region
    _
  $region13: #{decoder_forward.24} parent=0 // pred_fallthru
    _
  // Predicated region
  $region14: #{decoder_forward.24} parent=0 // pred_check
    _
  $region15: #{decoder_forward.24} parent=0 // pred_check_branch
    %19 = sbr.rel (0) target = $region17
  $region16: #{decoder_forward.24} parent=0 // pred_region
    _
  $region17: #{decoder_forward.24} parent=0 // pred_fallthru
    _
  // Predicated region
  $region18: #{decoder_forward.24} parent=0 // pred_check
    _
  $region19: #{decoder_forward.24} parent=0 // pred_check_branch
    %21 = sbr.rel (0) target = $region21
  $region20: #{decoder_forward.24} parent=0 // pred_region
    _
  $region21: #{decoder_forward.24} parent=0 // pred_fallthru
    _
  // Predicated region
  $region22: #{decoder_forward.24} parent=0 // pred_check
    _
  $region23: #{decoder_forward.24} parent=0 // pred_check_branch
    %23 = sbr.rel (0) target = $region25
  $region24: #{decoder_forward.24} parent=0 // pred_region
    _
  $region25: #{decoder_forward.24} parent=0 // pred_fallthru
    _
  // Predicated region
  $region26: #{decoder_forward.24} parent=0 // pred_check
    _
  $region27: #{decoder_forward.24} parent=0 // pred_check_branch
    %25 = sbr.rel (0) target = $region29
  $region28: #{decoder_forward.24} parent=0 // pred_region
    _
  $region29: #{decoder_forward.24} parent=0 // pred_fallthru
    _
  %p27 = scmp.eq.s32.totalorder 0, 0
  // Predicated region
  $region30: #{decoder_forward.24} parent=0 // pred_check
    %p28 = pneg %p27
  $region31: #{decoder_forward.24} parent=0 // pred_check_branch
    %30 = sbr.rel (%p28) target = $region33
  $region32: #{decoder_forward.24} parent=0 // pred_region
    %vm31 = vcmask 261120
    %32 = vst.msk [vmem:[#allocation2] sm:$0xff] %vm31, 0.0
    %33 = vst.msk [vmem:[#allocation2 + $0x8] sm:$0xff] %vm31, 0.0
  $region33: #{decoder_forward.24} parent=0 // pred_fallthru
    _
  %v34 = vld [vmem:[%s0] sm:$0xf]
  %v35 = vld [vmem:[%s0 + $0x4] sm:$0xf]
  %v36 = vld [vmem:[%s1] sm:$0xf]
  %v37 = vld [vmem:[%s1 + $0x4] sm:$0xf]
  %v38 = vld [vmem:[%s1 + $0x8] sm:$0xf]
  %v39 = vld [vmem:[%s1 + $0xc] sm:$0xf]
  %v40 = vld [vmem:[%s2] sm:$0x1]
  %v42 = vperm.slane %v40, 0
  %v46 = vunpack.c.l.b16 %v34
  %v47 = vunpack.c.l.b16 %v35
  %v48 = vpack.c.b16 %v47, %v46
  %v53 = vunpack.c.l.b16 %v36
  %v54 = vunpack.c.l.b16 %v37
  %v55 = vunpack.c.l.b16 %v38
  %v56 = vunpack.c.l.b16 %v39
  %v57 = vpack.c.b16 %v54, %v53
  %v58 = vpack.c.b16 %v56, %v55
  %vm61 = vcmask 261120
  %v63 = vsel %vm61, %v48, 0
  %65 = vmatpush.bf16.msra.mxu0 0
  %66 = vmatpush.bf16.msra.mxu0 0
  %67 = vmatpush.bf16.msra.mxu0 0
  %68 = vmatpush.bf16.msra.mxu0 0
  %69 = vmatpush.bf16.msra.mxu0 0
  %70 = vmatpush.bf16.msra.mxu0 0
  %71 = vmatpush.bf16.msra.mxu0 %v58
  %72 = vmatpush.bf16.msra.mxu0 %v57
  %73 = vmatmul.bf16.gmra.mxu0 %v63
  %v74 = vpop.f32.mrf.mxu0
  %v75 = vadd.f32 %v42, %v74
  %v76 = vpop.f32.mrf.mxu0
  %v77 = vadd.f32 %v42, %v76
  %78 = vdwg.mxu0
  %v79 = vmax.f32 %v75, 0.0
  %v80 = vmax.f32 %v77, 0.0
  %v81 = vld [vmem:[#allocation2] sm:$0xff]
  %v82 = vld [vmem:[#allocation2 + $0x8] sm:$0xff]
  %v83 = vpack.c.bf16 %v80, %v79
  %v84 = vld [vmem:[%s3] sm:$0xf]
  %v85 = vld [vmem:[%s3 + $0x4] sm:$0xf]
  %v86 = vld [vmem:[%s3 + $0x8] sm:$0xf]
  %v87 = vld [vmem:[%s3 + $0xc] sm:$0xf]
  %v88 = vld [vmem:[%s3 + $0x10] sm:$0xf]
  %v89 = vld [vmem:[%s3 + $0x14] sm:$0xf]
  %v90 = vld [vmem:[%s3 + $0x18] sm:$0xf]
  %v91 = vld [vmem:[%s3 + $0x1c] sm:$0xf]
  %v100 = vunpack.c.l.b16 %v84
  %v101 = vunpack.c.l.b16 %v85
  %v102 = vunpack.c.l.b16 %v86
  %v103 = vunpack.c.l.b16 %v87
  %v104 = vunpack.c.l.b16 %v88
  %v105 = vunpack.c.l.b16 %v89
  %v106 = vunpack.c.l.b16 %v90
  %v107 = vunpack.c.l.b16 %v91
  %v108 = vpack.c.b16 %v101, %v100
  %v109 = vpack.c.b16 %v103, %v102
  %v110 = vpack.c.b16 %v105, %v104
  %v111 = vpack.c.b16 %v107, %v106
  %vm116 = vcmask 523264
  %v118 = vsel %vm116, %v83, 0
  %120 = vmatpush.bf16.msra.mxu0 0
  %121 = vmatpush.bf16.msra.mxu0 0
  %122 = vmatpush.bf16.msra.mxu0 0
  %123 = vmatpush.bf16.msra.mxu0 0
  %124 = vmatpush.bf16.msra.mxu0 %v111
  %125 = vmatpush.bf16.msra.mxu0 %v110
  %126 = vmatpush.bf16.msra.mxu0 %v109
  %127 = vmatpush.bf16.msra.mxu0 %v108
  %128 = vmatmul.bf16.gmra.mxu0 %v118
  %v129 = vpop.f32.mrf.mxu0
  %v130 = vadd.f32 0.0, %v129
  %v131 = vpop.f32.mrf.mxu0
  %v132 = vadd.f32 0.0, %v131
  %133 = vdwg.mxu0
  %v134 = vadd.f32 %v81, %v130
  %v135 = vadd.f32 %v82, %v132
  %136 = vst.msk [vmem:[#allocation2] sm:$0xff] %vm61, %v134
  %137 = vst.msk [vmem:[#allocation2 + $0x8] sm:$0xff] %vm61, %v135
  // Predicated region
  $region34: #{decoder_forward.24} parent=0 // pred_check
    %p138 = pneg %p27
  $region35: #{decoder_forward.24} parent=0 // pred_check_branch
    %140 = sbr.rel (%p138) target = $region37
  $region36: #{decoder_forward.24} parent=0 // pred_region
    %v141 = vld [vmem:[#allocation2] sm:$0xff]
    %v142 = vld [vmem:[#allocation2 + $0x8] sm:$0xff]
    %v143 = vld [vmem:[%s4] sm:$0x1]
    %v145 = vperm.slane %v143, 0
    %v147 = vadd.f32 %v141, %v145
    %v148 = vadd.f32 %v142, %v145
    %v149 = vunpack.c.l.bf16 %v34
    %v150 = vunpack.c.l.bf16 %v35
    %v151 = vadd.f32 %v147, %v149
    %v152 = vadd.f32 %v148, %v150
    %v153 = vsel %vm61, %v151, 0.0
    %154 = vadd.xlane.f32.xlu0 %v153
    %v155 = vpop.xlane.xlu0 %154
    %v156 = vsel %vm61, %v152, 0.0
    %157 = vadd.xlane.f32.xlu0 %v156
    %v158 = vpop.xlane.xlu0 %157
    %v159 = vrcp.pop 32.0
    %v160 = vmul.f32 32.0, %v159
    %v161 = vsub.f32 1.0, %v160
    %v162 = vmul.f32 %v159, %v161
    %v163 = vadd.f32 %v159, %v162
    %vm164 = vweird.f32 %v159
    %v165 = vsel %vm164, %v159, %v163
    %v166 = vmul.f32 %v155, %v165
    %v167 = vmul.f32 %v158, %v165
    %v168 = vsub.f32 %v151, %v166
    %v169 = vsub.f32 %v152, %v167
    %v170 = vmul.f32 %v168, %v168
    %v171 = vmul.f32 %v169, %v169
    %v172 = vsel %vm61, %v170, 0.0
    %173 = vadd.xlane.f32.xlu0 %v172
    %v174 = vpop.xlane.xlu0 %173
    %v175 = vsel %vm61, %v171, 0.0
    %176 = vadd.xlane.f32.xlu0 %v175
    %v177 = vpop.xlane.xlu0 %176
    %v178 = vmul.f32 %v174, %v165
    %v179 = vmul.f32 %v177, %v165
    %v180 = vadd.f32 %v178, 1e-05
    %v181 = vadd.f32 %v179, 1e-05
    %v182 = vrsqrt.pop %v180
    %v183 = vmul.f32 %v182, %v180
    %v184 = vmul.f32 %v183, %v182
    %v185 = vmul.f32 0.5, %v184
    %v186 = vsub.f32 1.5, %v185
    %v187 = vmul.f32 %v182, %v186
    %vm188 = vweird.f32 %v180
    %vm189 = vweird.f32 %v182
    %vm190 = vmor %vm188, %vm189
    %v191 = vsel %vm190, %v182, %v187
    %v192 = vrsqrt.pop %v181
    %v193 = vmul.f32 %v192, %v181
    %v194 = vmul.f32 %v193, %v192
    %v195 = vmul.f32 0.5, %v194
    %v196 = vsub.f32 1.5, %v195
    %v197 = vmul.f32 %v192, %v196
    %vm198 = vweird.f32 %v181
    %vm199 = vweird.f32 %v192
    %vm200 = vmor %vm198, %vm199
    %v201 = vsel %vm200, %v192, %v197
    %v202 = vmul.f32 %v168, %v191
    %v203 = vmul.f32 %v169, %v201
    %v204 = vld [vmem:[%s5] sm:$0x1]
    %v206 = vperm.slane %v204, 0
    %v208 = vmul.f32 %v202, %v206
    %v209 = vmul.f32 %v203, %v206
    %v210 = vld [vmem:[%s6] sm:$0x1]
    %v212 = vperm.slane %v210, 0
    %v214 = vadd.f32 %v208, %v212
    %v215 = vadd.f32 %v209, %v212
    %v216 = vpack.c.bf16 %v214, %v214
    %v217 = vpack.c.bf16 %v215, %v215
    %vm218 = vcmask 257024
    %219 = vst.msk [vmem:[%s7] sm:$0xf] %vm218, %v216
    %220 = vst.msk [vmem:[%s7 + $0x4] sm:$0xf] %vm218, %v217
  $region37: #{decoder_forward.24} parent=0 // pred_fallthru
    _
  // Predicated region
  $region38: #{decoder_forward.24} parent=0 // pred_check
    _
  $region39: #{decoder_forward.24} parent=0 // pred_check_branch
    %222 = sbr.rel (0) target = $region41
  $region40: #{decoder_forward.24} parent=0 // pred_region
    _
  $region41: #{decoder_forward.24} parent=0 // pred_fallthru
    _
  // Predicated region
  $region42: #{decoder_forward.24} parent=0 // pred_check
    _
  $region43: #{decoder_forward.24} parent=0 // pred_check_branch
    %224 = sbr.rel (0) target = $region45
  $region44: #{decoder_forward.24} parent=0 // pred_region
    _
  $region45: #{decoder_forward.24} parent=0 // pred_fallthru
    _

// kernel: decoder_forward.33
$region0: #{decoder_forward.33}
  #allocation0 [shape = 'u32[]', space=smem, size = 0x4, offset = 0x4, fixed_abs, tag = 'smem constant byte address 0x4 - core index']
  #allocation1 [shape = 'u32[72,128]{1,0:T(1,128)}', space=vmem, size = 0x9000, scoped, tag = 'internal scratch']
  #allocation2 [shape = 'f32[16,256]{1,0:T(8,128)}', space=vmem, size = 0x4000, scoped, tag = 'scratch operand']
  %s0 = inlined_call_operand.vmem [shape: bf16[16,32], index: 0, kind: input, shape index: {}]
  %s1 = inlined_call_operand.vmem [shape: bf16[32,256], index: 1, kind: input, shape index: {}]
  %s2 = inlined_call_operand.vmem [shape: f32[1,256], index: 2, kind: input, shape index: {}]
  %s3 = inlined_call_operand.vmem [shape: f32[16,256], index: 3, kind: output, shape index: {}]
  %s4 = sld [smem:[#allocation0]]
  $region30: #{decoder_forward.33} parent=0
    _
  %s6 = ssub.s32 1, %s4
  %s7 = scalar_select 0, %s6, %s4
  // Predicated region
  $region2: #{decoder_forward.33} parent=0 // pred_check
    _
  $region3: #{decoder_forward.33} parent=0 // pred_check_branch
    %9 = sbr.rel (0) target = $region5
  $region4: #{decoder_forward.33} parent=0 // pred_region
    _
  $region5: #{decoder_forward.33} parent=0 // pred_fallthru
    _
  // Predicated region
  $region6: #{decoder_forward.33} parent=0 // pred_check
    _
  $region7: #{decoder_forward.33} parent=0 // pred_check_branch
    %11 = sbr.rel (0) target = $region9
  $region8: #{decoder_forward.33} parent=0 // pred_region
    _
  $region9: #{decoder_forward.33} parent=0 // pred_fallthru
    _
  // Predicated region
  $region10: #{decoder_forward.33} parent=0 // pred_check
    _
  $region11: #{decoder_forward.33} parent=0 // pred_check_branch
    %13 = sbr.rel (0) target = $region13
  $region12: #{decoder_forward.33} parent=0 // pred_region
    _
  $region13: #{decoder_forward.33} parent=0 // pred_fallthru
    _
  %p15 = scmp.eq.s32.totalorder 0, 0
  // Predicated region
  $region14: #{decoder_forward.33} parent=0 // pred_check
    %p16 = pneg %p15
  $region15: #{decoder_forward.33} parent=0 // pred_check_branch
    %18 = sbr.rel (%p16) target = $region17
  $region16: #{decoder_forward.33} parent=0 // pred_region
    %19 = vst [vmem:[#allocation2] sm:$0xff] 0.0
    %20 = vst [vmem:[#allocation2 + $0x8] sm:$0xff] 0.0
    %21 = vst [vmem:[#allocation2 + $0x10] sm:$0xff] 0.0
    %22 = vst [vmem:[#allocation2 + $0x18] sm:$0xff] 0.0
  $region17: #{decoder_forward.33} parent=0 // pred_fallthru
    _
  %v23 = vld [vmem:[#allocation2] sm:$0xff]
  %v24 = vld [vmem:[#allocation2 + $0x8] sm:$0xff]
  %v25 = vld [vmem:[#allocation2 + $0x10] sm:$0xff]
  %v26 = vld [vmem:[#allocation2 + $0x18] sm:$0xff]
  %v27 = vld [vmem:[%s0] sm:$0xf]
  %v28 = vld [vmem:[%s0 + $0x4] sm:$0xf]
  %v29 = vld [vmem:[%s1] sm:$0xff]
  %v30 = vld [vmem:[%s1 + $0x8] sm:$0xff]
  %v31 = vld [vmem:[%s1 + $0x10] sm:$0xff]
  %v32 = vld [vmem:[%s1 + $0x18] sm:$0xff]
  %v35 = vunpack.c.l.b16 %v27
  %v36 = vunpack.c.l.b16 %v28
  %v37 = vpack.c.b16 %v36, %v35
  %v42 = vunpack.c.l.b16 %v29
  %v43 = vunpack.c.h.b16 %v29
  %v44 = vunpack.c.l.b16 %v30
  %v45 = vunpack.c.h.b16 %v30
  %v46 = vunpack.c.l.b16 %v31
  %v47 = vunpack.c.h.b16 %v31
  %v48 = vunpack.c.l.b16 %v32
  %v49 = vunpack.c.h.b16 %v32
  %v50 = vpack.c.b16 %v44, %v42
  %v51 = vpack.c.b16 %v45, %v43
  %v52 = vpack.c.b16 %v48, %v46
  %v53 = vpack.c.b16 %v49, %v47
  %vm58 = vcmask 261120
  %v60 = vsel %vm58, %v37, 0
  %62 = vmatpush.bf16.msra.mxu0 0
  %63 = vmatpush.bf16.msra.mxu0 0
  %64 = vmatpush.bf16.msra.mxu0 0
  %65 = vmatpush.bf16.msra.mxu0 0
  %66 = vmatpush.bf16.msra.mxu0 0
  %67 = vmatpush.bf16.msra.mxu0 0
  %68 = vmatpush.bf16.msra.mxu0 %v52
  %69 = vmatpush.bf16.msra.mxu0 %v50
  %70 = vmatmul.bf16.gmra.mxu0 %v60
  %v71 = vpop.f32.mrf.mxu0
  %v72 = vadd.f32 0.0, %v71
  %v73 = vpop.f32.mrf.mxu0
  %v74 = vadd.f32 0.0, %v73
  %75 = vdwg.mxu0
  %76 = vmatpush.bf16.msra.mxu0 0
  %77 = vmatpush.bf16.msra.mxu0 0
  %78 = vmatpush.bf16.msra.mxu0 0
  %79 = vmatpush.bf16.msra.mxu0 0
  %80 = vmatpush.bf16.msra.mxu0 0
  %81 = vmatpush.bf16.msra.mxu0 0
  %82 = vmatpush.bf16.msra.mxu0 %v53
  %83 = vmatpush.bf16.msra.mxu0 %v51
  %84 = vmatmul.bf16.gmra.mxu0 %v60
  %v85 = vpop.f32.mrf.mxu0
  %v86 = vadd.f32 0.0, %v85
  %v87 = vpop.f32.mrf.mxu0
  %v88 = vadd.f32 0.0, %v87
  %89 = vdwg.mxu0
  %v90 = vadd.f32 %v23, %v72
  %v91 = vadd.f32 %v24, %v86
  %v92 = vadd.f32 %v25, %v74
  %v93 = vadd.f32 %v26, %v88
  %94 = vst [vmem:[#allocation2] sm:$0xff] %v90
  %95 = vst [vmem:[#allocation2 + $0x8] sm:$0xff] %v91
  %96 = vst [vmem:[#allocation2 + $0x10] sm:$0xff] %v92
  %97 = vst [vmem:[#allocation2 + $0x18] sm:$0xff] %v93
  // Predicated region
  $region18: #{decoder_forward.33} parent=0 // pred_check
    %p98 = pneg %p15
  $region19: #{decoder_forward.33} parent=0 // pred_check_branch
    %100 = sbr.rel (%p98) target = $region21
  $region20: #{decoder_forward.33} parent=0 // pred_region
    %v101 = vld [vmem:[#allocation2] sm:$0xff]
    %v102 = vld [vmem:[#allocation2 + $0x8] sm:$0xff]
    %v103 = vld [vmem:[#allocation2 + $0x10] sm:$0xff]
    %v104 = vld [vmem:[#allocation2 + $0x18] sm:$0xff]
    %v105 = vld [vmem:[%s2] sm:$0x3]
    %v107 = vperm.slane %v105, 0
    %v108 = vperm.slane %v105, 1
    %v111 = vadd.f32 %v101, %v107
    %v112 = vadd.f32 %v102, %v108
    %v113 = vadd.f32 %v103, %v107
    %v114 = vadd.f32 %v104, %v108
    %115 = vst [vmem:[%s3] sm:$0xff] %v111
    %116 = vst [vmem:[%s3 + $0x8] sm:$0xff] %v112
    %117 = vst [vmem:[%s3 + $0x10] sm:$0xff] %v113
    %118 = vst [vmem:[%s3 + $0x18] sm:$0xff] %v114
  $region21: #{decoder_forward.33} parent=0 // pred_fallthru
    _
  // Predicated region
  $region22: #{decoder_forward.33} parent=0 // pred_check
    _
  $region23: #{decoder_forward.33} parent=0 // pred_check_branch
    %120 = sbr.rel (0) target = $region25
  $region24: #{decoder_forward.33} parent=0 // pred_region
    _
  $region25: #{decoder_forward.33} parent=0 // pred_fallthru
    _
  // Predicated region
  $region26: #{decoder_forward.33} parent=0 // pred_check
    _
  $region27: #{decoder_forward.33} parent=0 // pred_check_branch
    %122 = sbr.rel (0) target = $region29
  $region28: #{decoder_forward.33} parent=0 // pred_region
    _
  $region29: #{decoder_forward.33} parent=0 // pred_fallthru
    _

// kernel: decoder_forward.22
$region0: #{decoder_forward.22}
  #allocation0 [shape = 'u32[]', space=smem, size = 0x4, offset = 0x4, fixed_abs, tag = 'smem constant byte address 0x4 - core index']
  #allocation1 [shape = 'u32[72,128]{1,0:T(1,128)}', space=vmem, size = 0x9000, scoped, tag = 'internal scratch']
  #allocation2 [shape = 'f32[4,8,1]{2,1,0:T(8,128)}', space=vmem, size = 0x4000, scoped, tag = 'scratch operand']
  #allocation3 [shape = 'f32[4,8,1]{2,1,0:T(8,128)}', space=vmem, size = 0x4000, scoped, tag = 'scratch operand']
  #allocation4 [shape = 'f32[4,8,8]{2,1,0:T(8,128)}', space=vmem, size = 0x4000, scoped, tag = 'scratch operand']
  %s0 = inlined_call_operand.vmem [shape: bf16[2,8,32], index: 0, kind: input, shape index: {}]
  %s1 = inlined_call_operand.vmem [shape: bf16[2,8,32], index: 1, kind: input, shape index: {}]
  %s2 = inlined_call_operand.vmem [shape: bf16[2,8,32], index: 2, kind: input, shape index: {}]
  %s3 = inlined_call_operand.vmem [shape: f32[2,1,8], index: 3, kind: input, shape index: {}]
  %s4 = inlined_call_operand.vmem [shape: bf16[2,8,32], index: 4, kind: output, shape index: {}]
  %s5 = sld [smem:[#allocation0]]
  $region57: #{decoder_forward.22} parent=0
    _
  %s7 = ssub.s32 1, %s5
  %s8 = scalar_select 0, %s7, %s5
  loop: start=0, step=1, limit=4
  $region2: #{decoder_forward.22} parent=0 // loop_pre_header
    _
  $region3: #{decoder_forward.22} parent=0 // loop_header
    %s10 = sphi 0, %s14
    %p11 = scmp.ge.s32.totalorder %s10, 4
    %s17 = sphi 0, %s36
    %s18 = sphi 0, %s32
    %s19 = sphi 0, %s28
    %s20 = sphi 0, %s17
    %s21 = sphi 0, %s18
    %s22 = sphi 0, %s19
    %s23 = sphi 0, %s20
    %s24 = sphi 0, %s21
    %s25 = sphi 0, %s22
    %s41 = sphi 0, %s43
    %s44 = sphi 0, %s41
    %s45 = sphi 0, %s44
    %s61 = sphi 0, %s45
    %s69 = sphi 0, %s71
    %s72 = sphi 0, %s69
    %s73 = sphi 0, %s72
    %s89 = sphi 0, %s73
    %s97 = sphi 0, %s99
    %s100 = sphi 0, %s97
    %s101 = sphi 0, %s100
    %s117 = sphi 0, %s101
    %s125 = sphi 0, %s127
    %s128 = sphi 0, %s125
    %s129 = sphi 0, %s128
    %s145 = sphi 0, %s129
    %s153 = sphi 0, %s155
    %s156 = sphi 0, %s153
    %s157 = sphi 0, %s156
    %s173 = sphi 0, %s157
  $region4: #{decoder_forward.22} parent=0 // loop_header_branch
    %13 = sbr.rel (%p11) target = $region8
  $region5: #{decoder_forward.22} parent=0 // loop_body
    %s15 = ssub.s32 %s10, 1
    %s16 = ssub.s32 %s10, 2
    %s26 = sadd.s32 1, %s19
    %p27 = scmp.ge.s32.totalorder %s26, 1
    %s28 = scalar_select %p27, 0, %s26
    %s29 = sadd.s32 1, %s18
    %s30 = scalar_select %p27, %s29, %s18
    %p31 = scmp.ge.s32.totalorder %s30, 1
    %s32 = scalar_select %p31, 0, %s30
    %s33 = sadd.s32 1, %s17
    %s34 = scalar_select %p31, %s33, %s17
    %p35 = scmp.ge.s32.totalorder %s34, 2
    %s36 = scalar_select %p35, 0, %s34
    %s37 = ssub.s32 %s17, %s36
    %s38 = ssub.s32 %s18, %s32
    %s39 = sor.u32 %s37, %s38
    %p40 = scmp.eq.s32.totalorder %s39, 0
    %s42 = sadd.s32 %s41, 1
    %s43 = scalar_select %p40, %s41, %s42
    %p46 = pneg %p40
    %p47 = scmp.eq.s32.totalorder %s10, 1
    %p48 = por %p46, %p47
    %p49 = scmp.ne.s32.totalorder %s41, %s44
    %p50 = scmp.eq.s32.totalorder %s10, 0
    %p51 = por %p49, %p50
    %p52 = scmp.ne.s32.totalorder %s41, %s44
    %p53 = scmp.eq.s32.totalorder %s15, 1
    %p54 = por %p52, %p53
    %p55 = scmp.ne.s32.totalorder %s44, %s45
    %p56 = scmp.eq.s32.totalorder %s15, 0
    %p57 = por %p55, %p56
    %p58 = scmp.ne.s32.totalorder %s44, %s45
    %p59 = scmp.eq.s32.totalorder %s16, 1
    %p60 = por %p58, %p59
    %p62 = scmp.ne.s32.totalorder %s45, %s61
    %p63 = scmp.eq.s32.totalorder %s16, 0
    %p64 = por %p62, %p63
    %s65 = ssub.s32 %s17, %s36
    %s66 = ssub.s32 %s19, %s28
    %s67 = sor.u32 %s65, %s66
    %p68 = scmp.eq.s32.totalorder %s67, 0
    %s70 = sadd.s32 %s69, 1
    %s71 = scalar_select %p68, %s69, %s70
    %p74 = pneg %p68
    %p75 = scmp.eq.s32.totalorder %s10, 1
    %p76 = por %p74, %p75
    %p77 = scmp.ne.s32.totalorder %s69, %s72
    %p78 = scmp.eq.s32.totalorder %s10, 0
    %p79 = por %p77, %p78
    %p80 = scmp.ne.s32.totalorder %s69, %s72
    %p81 = scmp.eq.s32.totalorder %s15, 1
    %p82 = por %p80, %p81
    %p83 = scmp.ne.s32.totalorder %s72, %s73
    %p84 = scmp.eq.s32.totalorder %s15, 0
    %p85 = por %p83, %p84
    %p86 = scmp.ne.s32.totalorder %s72, %s73
    %p87 = scmp.eq.s32.totalorder %s16, 1
    %p88 = por %p86, %p87
    %p90 = scmp.ne.s32.totalorder %s73, %s89
    %p91 = scmp.eq.s32.totalorder %s16, 0
    %p92 = por %p90, %p91
    %s93 = ssub.s32 %s17, %s36
    %s94 = ssub.s32 %s19, %s28
    %s95 = sor.u32 %s93, %s94
    %p96 = scmp.eq.s32.totalorder %s95, 0
    %s98 = sadd.s32 %s97, 1
    %s99 = scalar_select %p96, %s97, %s98
    %p102 = pneg %p96
    %p103 = scmp.eq.s32.totalorder %s10, 1
    %p104 = por %p102, %p103
    %p105 = scmp.ne.s32.totalorder %s97, %s100
    %p106 = scmp.eq.s32.totalorder %s10, 0
    %p107 = por %p105, %p106
    %p108 = scmp.ne.s32.totalorder %s97, %s100
    %p109 = scmp.eq.s32.totalorder %s15, 1
    %p110 = por %p108, %p109
    %p111 = scmp.ne.s32.totalorder %s100, %s101
    %p112 = scmp.eq.s32.totalorder %s15, 0
    %p113 = por %p111, %p112
    %p114 = scmp.ne.s32.totalorder %s100, %s101
    %p115 = scmp.eq.s32.totalorder %s16, 1
    %p116 = por %p114, %p115
    %p118 = scmp.ne.s32.totalorder %s101, %s117
    %p119 = scmp.eq.s32.totalorder %s16, 0
    %p120 = por %p118, %p119
    %s121 = ssub.s32 %s17, %s36
    %s122 = ssub.s32 %s19, %s28
    %s123 = sor.u32 %s121, %s122
    %p124 = scmp.eq.s32.totalorder %s123, 0
    %s126 = sadd.s32 %s125, 1
    %s127 = scalar_select %p124, %s125, %s126
    %p130 = pneg %p124
    %p131 = scmp.eq.s32.totalorder %s10, 1
    %p132 = por %p130, %p131
    %p133 = scmp.ne.s32.totalorder %s125, %s128
    %p134 = scmp.eq.s32.totalorder %s10, 0
    %p135 = por %p133, %p134
    %p136 = scmp.ne.s32.totalorder %s125, %s128
    %p137 = scmp.eq.s32.totalorder %s15, 1
    %p138 = por %p136, %p137
    %p139 = scmp.ne.s32.totalorder %s128, %s129
    %p140 = scmp.eq.s32.totalorder %s15, 0
    %p141 = por %p139, %p140
    %p142 = scmp.ne.s32.totalorder %s128, %s129
    %p143 = scmp.eq.s32.totalorder %s16, 1
    %p144 = por %p142, %p143
    %p146 = scmp.ne.s32.totalorder %s129, %s145
    %p147 = scmp.eq.s32.totalorder %s16, 0
    %p148 = por %p146, %p147
    %s149 = ssub.s32 %s17, %s36
    %s150 = ssub.s32 %s18, %s32
    %s151 = sor.u32 %s149, %s150
    %p152 = scmp.eq.s32.totalorder %s151, 0
    %s154 = sadd.s32 %s153, 1
    %s155 = scalar_select %p152, %s153, %s154
    %p158 = pneg %p152
    %p159 = scmp.eq.s32.totalorder %s10, 1
    %p160 = por %p158, %p159
    %p161 = scmp.ne.s32.totalorder %s153, %s156
    %p162 = scmp.eq.s32.totalorder %s10, 0
    %p163 = por %p161, %p162
    %p164 = scmp.ne.s32.totalorder %s153, %s156
    %p165 = scmp.eq.s32.totalorder %s15, 1
    %p166 = por %p164, %p165
    %p167 = scmp.ne.s32.totalorder %s156, %s157
    %p168 = scmp.eq.s32.totalorder %s15, 0
    %p169 = por %p167, %p168
    %p170 = scmp.ne.s32.totalorder %s156, %s157
    %p171 = scmp.eq.s32.totalorder %s16, 1
    %p172 = por %p170, %p171
    %p174 = scmp.ne.s32.totalorder %s157, %s173
    %p175 = scmp.eq.s32.totalorder %s16, 0
    %p176 = por %p174, %p175
    %p177 = scmp.le.s32.totalorder 1, %s10
    %p178 = scmp.lt.s32.totalorder %s10, 3
    %p179 = pnand %p177, %p178
    %p180 = pneg %p179
    // Predicated region
    $region9: #{decoder_forward.22} parent=5 // pred_check
      _
    $region10: #{decoder_forward.22} parent=5 // pred_check_branch
      %182 = sbr.rel (%p179) target = $region12
    $region11: #{decoder_forward.22} parent=5 // pred_region
      %s183 = ssub.s32 %s10, 1
    $region12: #{decoder_forward.22} parent=5 // pred_fallthru
      _
    %p184 = scmp.lt.s32.totalorder %s10, 2
    // Predicated region
    $region13: #{decoder_forward.22} parent=5 // pred_check
      %p185 = pneg %p184
    $region14: #{decoder_forward.22} parent=5 // pred_check_branch
      %187 = sbr.rel (%p185) target = $region16
    $region15: #{decoder_forward.22} parent=5 // pred_region
      // Predicated region
      $region17: #{decoder_forward.22} parent=15 // pred_check
        %p188 = pneg %p51
      $region18: #{decoder_forward.22} parent=15 // pred_check_branch
        %190 = sbr.rel (%p188) target = $region20
      $region19: #{decoder_forward.22} parent=15 // pred_region
        %p191 = scmp.lt.s32.totalorder %s17, 1
        %s192 = scalar_select %p191, %s17, 1
        %p193 = scmp.lt.s32.totalorder %s18, 0
        %s194 = scalar_select %p193, %s18, 0
        %s195 = sadd.s32 %s194, %s192
        %s196 = smul.addr %s195, 4
        %s197 = scalar_lea.vmem %s0, %s196
      $region20: #{decoder_forward.22} parent=15 // pred_fallthru
        _
      // Predicated region
      $region21: #{decoder_forward.22} parent=15 // pred_check
        %p198 = pneg %p79
      $region22: #{decoder_forward.22} parent=15 // pred_check_branch
        %200 = sbr.rel (%p198) target = $region24
      $region23: #{decoder_forward.22} parent=15 // pred_region
        %p201 = scmp.lt.s32.totalorder %s17, 1
        %s202 = scalar_select %p201, %s17, 1
        %p203 = scmp.lt.s32.totalorder %s19, 0
        %s204 = scalar_select %p203, %s19, 0
        %s205 = sadd.s32 %s204, %s202
        %s206 = smul.addr %s205, 4
        %s207 = scalar_lea.vmem %s1, %s206
      $region24: #{decoder_forward.22} parent=15 // pred_fallthru
        _
      // Predicated region
      $region25: #{decoder_forward.22} parent=15 // pred_check
        %p208 = pneg %p107
      $region26: #{decoder_forward.22} parent=15 // pred_check_branch
        %210 = sbr.rel (%p208) target = $region28
      $region27: #{decoder_forward.22} parent=15 // pred_region
        %p211 = scmp.lt.s32.totalorder %s17, 1
        %s212 = scalar_select %p211, %s17, 1
        %p213 = scmp.lt.s32.totalorder %s19, 0
        %s214 = scalar_select %p213, %s19, 0
        %s215 = sadd.s32 %s214, %s212
        %s216 = smul.addr %s215, 4
        %s217 = scalar_lea.vmem %s2, %s216
      $region28: #{decoder_forward.22} parent=15 // pred_fallthru
        _
      // Predicated region
      $region29: #{decoder_forward.22} parent=15 // pred_check
        %p218 = pneg %p135
      $region30: #{decoder_forward.22} parent=15 // pred_check_branch
        %220 = sbr.rel (%p218) target = $region32
      $region31: #{decoder_forward.22} parent=15 // pred_region
        %p221 = scmp.lt.s32.totalorder %s17, 1
        %s222 = scalar_select %p221, %s17, 1
        %p223 = scmp.lt.s32.totalorder %s19, 0
        %s224 = scalar_select %p223, %s19, 0
        %s225 = sadd.s32 %s224, %s222
        %s226 = scalar_lea.vmem %s3, %s225
      $region32: #{decoder_forward.22} parent=15 // pred_fallthru
        _
    $region16: #{decoder_forward.22} parent=5 // pred_fallthru
      _
    %p227 = scmp.le.s32.totalorder 1, %s10
    %p228 = scmp.lt.s32.totalorder %s10, 3
    %p229 = pnand %p227, %p228
    %p230 = pneg %p229
    // Predicated region
    $region33: #{decoder_forward.22} parent=5 // pred_check
      _
    $region34: #{decoder_forward.22} parent=5 // pred_check_branch
      %232 = sbr.rel (%p229) target = $region36
    $region35: #{decoder_forward.22} parent=5 // pred_region
      %s233 = ssub.s32 %s10, 1
      %p234 = scmp.lt.s32.totalorder %s20, 1
      %s235 = scalar_select %p234, %s20, 1
      %p236 = scmp.lt.s32.totalorder %s21, 0
      %s237 = scalar_select %p236, %s21, 0
      %s238 = sadd.s32 %s237, %s235
      %s239 = smul.addr %s238, 4
      %s240 = scalar_lea.vmem %s0, %s239
      %p241 = pneg %p57
      %p242 = pneg %p54
      %p243 = scmp.lt.s32.totalorder %s20, 1
      %s244 = scalar_select %p243, %s20, 1
      %p245 = scmp.lt.s32.totalorder %s22, 0
      %s246 = scalar_select %p245, %s22, 0
      %s247 = sadd.s32 %s246, %s244
      %s248 = smul.addr %s247, 4
      %s249 = scalar_lea.vmem %s1, %s248
      %p250 = pneg %p85
      %p251 = pneg %p82
      %p252 = scmp.lt.s32.totalorder %s20, 1
      %s253 = scalar_select %p252, %s20, 1
      %p254 = scmp.lt.s32.totalorder %s22, 0
      %s255 = scalar_select %p254, %s22, 0
      %s256 = sadd.s32 %s255, %s253
      %s257 = smul.addr %s256, 4
      %s258 = scalar_lea.vmem %s2, %s257
      %p259 = pneg %p113
      %p260 = pneg %p110
      %p261 = scmp.lt.s32.totalorder %s20, 1
      %s262 = scalar_select %p261, %s20, 1
      %p263 = scmp.lt.s32.totalorder %s22, 0
      %s264 = scalar_select %p263, %s22, 0
      %s265 = sadd.s32 %s264, %s262
      %s266 = scalar_lea.vmem %s3, %s265
      %p267 = pneg %p141
      %p268 = pneg %p138
      %p269 = pneg %p169
      %p270 = pneg %p166
      %p271 = scmp.lt.s32.totalorder %s20, 1
      %s272 = scalar_select %p271, %s20, 1
      %p273 = scmp.lt.s32.totalorder %s21, 0
      %s274 = scalar_select %p273, %s21, 0
      %s275 = sadd.s32 %s274, %s272
      %s276 = smul.addr %s275, 4
      %s277 = scalar_lea.vmem %s4, %s276
      %p278 = scmp.lt.s32.totalorder %s20, 1
      %s279 = scalar_select %p278, %s20, 1
      %p280 = scmp.lt.s32.totalorder %s21, 0
      %s281 = scalar_select %p280, %s21, 0
      %s282 = sadd.s32 %s281, %s279
      %s283 = smul.addr %s282, 4
      %s284 = scalar_lea.vmem %s0, %s283
      %p285 = scmp.lt.s32.totalorder %s20, 1
      %s286 = scalar_select %p285, %s20, 1
      %p287 = scmp.lt.s32.totalorder %s22, 0
      %s288 = scalar_select %p287, %s22, 0
      %s289 = sadd.s32 %s288, %s286
      %s290 = smul.addr %s289, 4
      %s291 = scalar_lea.vmem %s1, %s290
      %p292 = scmp.lt.s32.totalorder %s20, 1
      %s293 = scalar_select %p292, %s20, 1
      %p294 = scmp.lt.s32.totalorder %s22, 0
      %s295 = scalar_select %p294, %s22, 0
      %s296 = sadd.s32 %s295, %s293
      %s297 = smul.addr %s296, 4
      %s298 = scalar_lea.vmem %s2, %s297
      %p299 = scmp.lt.s32.totalorder %s20, 1
      %s300 = scalar_select %p299, %s20, 1
      %p301 = scmp.lt.s32.totalorder %s22, 0
      %s302 = scalar_select %p301, %s22, 0
      %s303 = sadd.s32 %s302, %s300
      %s304 = scalar_lea.vmem %s3, %s303
      %p305 = scmp.lt.s32.totalorder %s20, 1
      %s306 = scalar_select %p305, %s20, 1
      %p307 = scmp.lt.s32.totalorder %s21, 0
      %s308 = scalar_select %p307, %s21, 0
      %s309 = sadd.s32 %s308, %s306
      %s310 = smul.addr %s309, 4
      %s311 = scalar_lea.vmem %s4, %s310
      %p313 = scmp.eq.s32.totalorder %s22, 0
      // Predicated region
      $region37: #{decoder_forward.22} parent=35 // pred_check
        %p314 = pneg %p313
      $region38: #{decoder_forward.22} parent=35 // pred_check_branch
        %316 = sbr.rel (%p314) target = $region40
      $region39: #{decoder_forward.22} parent=35 // pred_region
        %vm317 = vcmask 7168
        %318 = vst.msk [vmem:[#allocation2] sm:$0xff] %vm317, -inf
        %319 = vst.msk [vmem:[#allocation2 + $0x8] sm:$0xff] %vm317, -inf
        %320 = vst.msk [vmem:[#allocation2 + $0x10] sm:$0xff] %vm317, -inf
        %321 = vst.msk [vmem:[#allocation2 + $0x18] sm:$0xff] %vm317, -inf
        %322 = vst.msk [vmem:[#allocation3] sm:$0xff] %vm317, 0.0
        %323 = vst.msk [vmem:[#allocation3 + $0x8] sm:$0xff] %vm317, 0.0
        %324 = vst.msk [vmem:[#allocation3 + $0x10] sm:$0xff] %vm317, 0.0
        %325 = vst.msk [vmem:[#allocation3 + $0x18] sm:$0xff] %vm317, 0.0
        %vm326 = vcmask 64512
        %327 = vst.msk [vmem:[#allocation4] sm:$0xff] %vm326, 0.0
        %328 = vst.msk [vmem:[#allocation4 + $0x8] sm:$0xff] %vm326, 0.0
        %329 = vst.msk [vmem:[#allocation4 + $0x10] sm:$0xff] %vm326, 0.0
        %330 = vst.msk [vmem:[#allocation4 + $0x18] sm:$0xff] %vm326, 0.0
      $region40: #{decoder_forward.22} parent=35 // pred_fallthru
        _
      %v331 = vld [vmem:[%s284] sm:$0xf]
      %v332 = vunpack.c.l.bf16 %v331
      %v333 = vmul.f32 %v332, 0.35355338
      %v334 = vpack.c.bf16 %v333, %v333
      %v335 = vld [vmem:[%s291] sm:$0xf]
      %v336 = vld [vmem:[%s298] sm:$0xf]
      %v337 = vld [vmem:[%s304] sm:$0x1]
      %v339 = vperm.slane %v337, 0
      %vm341 = vcmask 64512
      %v343 = vsel %vm341, %v334, 0
      %v346 = vsel %vm341, %v335, 0
      %348 = vmatpush.bf16.xpose.msra.mxu0 0
      %349 = vmatpush.bf16.xpose.msra.mxu0 0
      %350 = vmatpush.bf16.xpose.msra.mxu0 0
      %351 = vmatpush.bf16.xpose.msra.mxu0 0
      %352 = vmatpush.bf16.xpose.msra.mxu0 0
      %353 = vmatpush.bf16.xpose.msra.mxu0 0
      %354 = vmatpush.bf16.xpose.msra.mxu0 0
      %355 = vmatpush.bf16.xpose.msra.mxu0 %v346
      %356 = vmatmul.bf16.gmra.mxu0 %v343
      %v357 = vpop.f32.mrf.mxu0
      %v358 = vadd.f32 %v339, %v357
      %v359 = vpop.f32.mrf.mxu0
      %360 = vdwg.mxu0
      %v361 = vld [vmem:[#allocation2] sm:$0xff]
      %v362 = vsel %vm341, %v358, -inf
      %363 = vmax.xlane.f32.xlu0 %v362
      %v364 = vpop.xlane.xlu0 %363
      %v365 = vmax.f32 %v361, %v364
      %v366 = vsub.f32 %v361, %v365
      %v367 = vmul.f32 %v366, 1.442695
      %v368 = vpow.pop %v367
      %370 = vset.pattern.permute.xlu0 0
      %371 = vperm.xlu0 %370, %v365
      %v372 = vpop.permute.xlu0 %371
      %v374 = vsub.f32 %v358, %v372
      %v375 = vmul.f32 %v374, 1.442695
      %v376 = vpow.pop %v375
      %v377 = vld [vmem:[#allocation3] sm:$0xff]
      %v378 = vmul.f32 %v368, %v377
      %v379 = vsel %vm341, %v376, 0.0
      %380 = vadd.xlane.f32.xlu0 %v379
      %v381 = vpop.xlane.xlu0 %380
      %v382 = vadd.f32 %v378, %v381
      %vm383 = vcmask 7168
      %384 = vst.msk [vmem:[#allocation3] sm:$0xff] %vm383, %v382
      %v385 = vld [vmem:[#allocation4] sm:$0xff]
      %387 = vset.pattern.permute.xlu0 0
      %388 = vperm.xlu0 %387, %v368
      %v389 = vpop.permute.xlu0 %388
      %v391 = vmul.f32 %v389, %v385
      %v392 = vpack.c.bf16 %v376, %v376
      %v394 = vsel %vm341, %v392, 0
      %vm396 = vcmask 1043456
      %v398 = vsel %vm396, %v336, 0
      %400 = vmatpush.bf16.msra.mxu0 0
      %401 = vmatpush.bf16.msra.mxu0 0
      %402 = vmatpush.bf16.msra.mxu0 0
      %403 = vmatpush.bf16.msra.mxu0 0
      %404 = vmatpush.bf16.msra.mxu0 0
      %405 = vmatpush.bf16.msra.mxu0 0
      %406 = vmatpush.bf16.msra.mxu0 0
      %407 = vmatpush.bf16.msra.mxu0 %v398
      %408 = vmatmul.bf16.gmra.mxu0 %v394
      %v409 = vpop.f32.mrf.mxu0
      %v410 = vadd.f32 0.0, %v409
      %v411 = vpop.f32.mrf.mxu0
      %412 = vdwg.mxu0
      %v413 = vadd.f32 %v391, %v410
      %414 = vst.msk [vmem:[#allocation4] sm:$0xff] %vm341, %v413
      %415 = vst.msk [vmem:[#allocation2] sm:$0xff] %vm383, %v365
      %v417 = vunpack.c.l.b16 %v334
      %v418 = vpack.c.b16 %v417, %v417
      %419 = vrot.lane.b32.xlu0 %v418, 120
      %v420 = vpop.permute.xlu0 %419
      %v422 = vunpack.c.l.b16 %v335
      %v423 = vpack.c.b16 %v422, %v422
      %424 = vrot.lane.b32.xlu0 %v423, 120
      %v425 = vpop.permute.xlu0 %424
      %v427 = vsel %vm341, %v420, 0
      %v430 = vsel %vm341, %v425, 0
      %432 = vmatpush.bf16.xpose.msra.mxu0 0
      %433 = vmatpush.bf16.xpose.msra.mxu0 0
      %434 = vmatpush.bf16.xpose.msra.mxu0 0
      %435 = vmatpush.bf16.xpose.msra.mxu0 0
      %436 = vmatpush.bf16.xpose.msra.mxu0 0
      %437 = vmatpush.bf16.xpose.msra.mxu0 0
      %438 = vmatpush.bf16.xpose.msra.mxu0 0
      %439 = vmatpush.bf16.xpose.msra.mxu0 %v430
      %440 = vmatmul.bf16.gmra.mxu0 %v427
      %v441 = vpop.f32.mrf.mxu0
      %v442 = vadd.f32 %v339, %v441
      %v443 = vpop.f32.mrf.mxu0
      %444 = vdwg.mxu0
      %s445 = scalar_lea.vmem [#allocation2], 8
      %v446 = vld [vmem:[%s445] sm:$0xff]
      %v447 = vsel %vm341, %v442, -inf
      %448 = vmax.xlane.f32.xlu0 %v447
      %v449 = vpop.xlane.xlu0 %448
      %v450 = vmax.f32 %v446, %v449
      %v451 = vsub.f32 %v446, %v450
      %v452 = vmul.f32 %v451, 1.442695
      %v453 = vpow.pop %v452
      %455 = vset.pattern.permute.xlu0 0
      %456 = vperm.xlu0 %455, %v450
      %v457 = vpop.permute.xlu0 %456
      %v459 = vsub.f32 %v442, %v457
      %v460 = vmul.f32 %v459, 1.442695
      %v461 = vpow.pop %v460
      %s462 = scalar_lea.vmem [#allocation3], 8
      %v463 = vld [vmem:[%s462] sm:$0xff]
      %v464 = vmul.f32 %v453, %v463
      %v465 = vsel %vm341, %v461, 0.0
      %466 = vadd.xlane.f32.xlu0 %v465
      %v467 = vpop.xlane.xlu0 %466
      %v468 = vadd.f32 %v464, %v467
      %469 = vst.msk [vmem:[%s462] sm:$0xff] %vm383, %v468
      %s470 = scalar_lea.vmem [#allocation4], 8
      %v471 = vld [vmem:[%s470] sm:$0xff]
      %473 = vset.pattern.permute.xlu0 0
      %474 = vperm.xlu0 %473, %v453
      %v475 = vpop.permute.xlu0 %474
      %v477 = vmul.f32 %v475, %v471
      %v478 = vpack.c.bf16 %v461, %v461
      %v480 = vunpack.c.l.b16 %v336
      %v481 = vpack.c.b16 %v480, %v480
      %482 = vrot.lane.b32.xlu0 %v481, 120
      %v483 = vpop.permute.xlu0 %482
      %v485 = vsel %vm341, %v478, 0
      %v488 = vsel %vm396, %v483, 0
      %490 = vmatpush.bf16.msra.mxu0 0
      %491 = vmatpush.bf16.msra.mxu0 0
      %492 = vmatpush.bf16.msra.mxu0 0
      %493 = vmatpush.bf16.msra.mxu0 0
      %494 = vmatpush.bf16.msra.mxu0 0
      %495 = vmatpush.bf16.msra.mxu0 0
      %496 = vmatpush.bf16.msra.mxu0 0
      %497 = vmatpush.bf16.msra.mxu0 %v488
      %498 = vmatmul.bf16.gmra.mxu0 %v485
      %v499 = vpop.f32.mrf.mxu0
      %v500 = vadd.f32 0.0, %v499
      %v501 = vpop.f32.mrf.mxu0
      %502 = vdwg.mxu0
      %v503 = vadd.f32 %v477, %v500
      %504 = vst.msk [vmem:[%s470] sm:$0xff] %vm341, %v503
      %505 = vst.msk [vmem:[%s445] sm:$0xff] %vm383, %v450
      %506 = vrot.lane.b32.xlu0 %v418, 112
      %v507 = vpop.permute.xlu0 %506
      %508 = vrot.lane.b32.xlu0 %v423, 112
      %v509 = vpop.permute.xlu0 %508
      %v511 = vsel %vm341, %v507, 0
      %v514 = vsel %vm341, %v509, 0
      %516 = vmatpush.bf16.xpose.msra.mxu0 0
      %517 = vmatpush.bf16.xpose.msra.mxu0 0
      %518 = vmatpush.bf16.xpose.msra.mxu0 0
      %519 = vmatpush.bf16.xpose.msra.mxu0 0
      %520 = vmatpush.bf16.xpose.msra.mxu0 0
      %521 = vmatpush.bf16.xpose.msra.mxu0 0
      %522 = vmatpush.bf16.xpose.msra.mxu0 0
      %523 = vmatpush.bf16.xpose.msra.mxu0 %v514
      %524 = vmatmul.bf16.gmra.mxu0 %v511
      %v525 = vpop.f32.mrf.mxu0
      %v526 = vadd.f32 %v339, %v525
      %v527 = vpop.f32.mrf.mxu0
      %528 = vdwg.mxu0
      %s529 = scalar_lea.vmem [#allocation2], 16
      %v530 = vld [vmem:[%s529] sm:$0xff]
      %v531 = vsel %vm341, %v526, -inf
      %532 = vmax.xlane.f32.xlu0 %v531
      %v533 = vpop.xlane.xlu0 %532
      %v534 = vmax.f32 %v530, %v533
      %v535 = vsub.f32 %v530, %v534
      %v536 = vmul.f32 %v535, 1.442695
      %v537 = vpow.pop %v536
      %539 = vset.pattern.permute.xlu0 0
      %540 = vperm.xlu0 %539, %v534
      %v541 = vpop.permute.xlu0 %540
      %v543 = vsub.f32 %v526, %v541
      %v544 = vmul.f32 %v543, 1.442695
      %v545 = vpow.pop %v544
      %s546 = scalar_lea.vmem [#allocation3], 16
      %v547 = vld [vmem:[%s546] sm:$0xff]
      %v548 = vmul.f32 %v537, %v547
      %v549 = vsel %vm341, %v545, 0.0
      %550 = vadd.xlane.f32.xlu0 %v549
      %v551 = vpop.xlane.xlu0 %550
      %v552 = vadd.f32 %v548, %v551
      %553 = vst.msk [vmem:[%s546] sm:$0xff] %vm383, %v552
      %s554 = scalar_lea.vmem [#allocation4], 16
      %v555 = vld [vmem:[%s554] sm:$0xff]
      %557 = vset.pattern.permute.xlu0 0
      %558 = vperm.xlu0 %557, %v537
      %v559 = vpop.permute.xlu0 %558
      %v561 = vmul.f32 %v559, %v555
      %v562 = vpack.c.bf16 %v545, %v545
      %563 = vrot.lane.b32.xlu0 %v481, 112
      %v564 = vpop.permute.xlu0 %563
      %v566 = vsel %vm341, %v562, 0
      %v569 = vsel %vm396, %v564, 0
      %571 = vmatpush.bf16.msra.mxu0 0
      %572 = vmatpush.bf16.msra.mxu0 0
      %573 = vmatpush.bf16.msra.mxu0 0
      %574 = vmatpush.bf16.msra.mxu0 0
      %575 = vmatpush.bf16.msra.mxu0 0
      %576 = vmatpush.bf16.msra.mxu0 0
      %577 = vmatpush.bf16.msra.mxu0 0
      %578 = vmatpush.bf16.msra.mxu0 %v569
      %579 = vmatmul.bf16.gmra.mxu0 %v566
      %v580 = vpop.f32.mrf.mxu0
      %v581 = vadd.f32 0.0, %v580
      %v582 = vpop.f32.mrf.mxu0
      %583 = vdwg.mxu0
      %v584 = vadd.f32 %v561, %v581
      %585 = vst.msk [vmem:[%s554] sm:$0xff] %vm341, %v584
      %586 = vst.msk [vmem:[%s529] sm:$0xff] %vm383, %v534
      %587 = vrot.lane.b32.xlu0 %v418, 104
      %v588 = vpop.permute.xlu0 %587
      %589 = vrot.lane.b32.xlu0 %v423, 104
      %v590 = vpop.permute.xlu0 %589
      %v592 = vsel %vm341, %v588, 0
      %v595 = vsel %vm341, %v590, 0
      %597 = vmatpush.bf16.xpose.msra.mxu0 0
      %598 = vmatpush.bf16.xpose.msra.mxu0 0
      %599 = vmatpush.bf16.xpose.msra.mxu0 0
      %600 = vmatpush.bf16.xpose.msra.mxu0 0
      %601 = vmatpush.bf16.xpose.msra.mxu0 0
      %602 = vmatpush.bf16.xpose.msra.mxu0 0
      %603 = vmatpush.bf16.xpose.msra.mxu0 0
      %604 = vmatpush.bf16.xpose.msra.mxu0 %v595
      %605 = vmatmul.bf16.gmra.mxu0 %v592
      %v606 = vpop.f32.mrf.mxu0
      %v607 = vadd.f32 %v339, %v606
      %v608 = vpop.f32.mrf.mxu0
      %609 = vdwg.mxu0
      %s610 = scalar_lea.vmem [#allocation2], 24
      %v611 = vld [vmem:[%s610] sm:$0xff]
      %v612 = vsel %vm341, %v607, -inf
      %613 = vmax.xlane.f32.xlu0 %v612
      %v614 = vpop.xlane.xlu0 %613
      %v615 = vmax.f32 %v611, %v614
      %v616 = vsub.f32 %v611, %v615
      %v617 = vmul.f32 %v616, 1.442695
      %v618 = vpow.pop %v617
      %620 = vset.pattern.permute.xlu0 0
      %621 = vperm.xlu0 %620, %v615
      %v622 = vpop.permute.xlu0 %621
      %v624 = vsub.f32 %v607, %v622
      %v625 = vmul.f32 %v624, 1.442695
      %v626 = vpow.pop %v625
      %s627 = scalar_lea.vmem [#allocation3], 24
      %v628 = vld [vmem:[%s627] sm:$0xff]
      %v629 = vmul.f32 %v618, %v628
      %v630 = vsel %vm341, %v626, 0.0
      %631 = vadd.xlane.f32.xlu0 %v630
      %v632 = vpop.xlane.xlu0 %631
      %v633 = vadd.f32 %v629, %v632
      %634 = vst.msk [vmem:[%s627] sm:$0xff] %vm383, %v633
      %s635 = scalar_lea.vmem [#allocation4], 24
      %v636 = vld [vmem:[%s635] sm:$0xff]
      %638 = vset.pattern.permute.xlu0 0
      %639 = vperm.xlu0 %638, %v618
      %v640 = vpop.permute.xlu0 %639
      %v642 = vmul.f32 %v640, %v636
      %v643 = vpack.c.bf16 %v626, %v626
      %644 = vrot.lane.b32.xlu0 %v481, 104
      %v645 = vpop.permute.xlu0 %644
      %v647 = vsel %vm341, %v643, 0
      %v650 = vsel %vm396, %v645, 0
      %652 = vmatpush.bf16.msra.mxu0 0
      %653 = vmatpush.bf16.msra.mxu0 0
      %654 = vmatpush.bf16.msra.mxu0 0
      %655 = vmatpush.bf16.msra.mxu0 0
      %656 = vmatpush.bf16.msra.mxu0 0
      %657 = vmatpush.bf16.msra.mxu0 0
      %658 = vmatpush.bf16.msra.mxu0 0
      %659 = vmatpush.bf16.msra.mxu0 %v650
      %660 = vmatmul.bf16.gmra.mxu0 %v647
      %v661 = vpop.f32.mrf.mxu0
      %v662 = vadd.f32 0.0, %v661
      %v663 = vpop.f32.mrf.mxu0
      %664 = vdwg.mxu0
      %v665 = vadd.f32 %v642, %v662
      %666 = vst.msk [vmem:[%s635] sm:$0xff] %vm341, %v665
      %667 = vst.msk [vmem:[%s610] sm:$0xff] %vm383, %v615
      // Predicated region
      $region41: #{decoder_forward.22} parent=35 // pred_check
        %p668 = pneg %p313
      $region42: #{decoder_forward.22} parent=35 // pred_check_branch
        %670 = sbr.rel (%p668) target = $region44
      $region43: #{decoder_forward.22} parent=35 // pred_region
        %v671 = vld [vmem:[#allocation4] sm:$0xff]
        %v672 = vld [vmem:[#allocation3] sm:$0xff]
        %v673 = vrcp.pop %v672
        %675 = vset.pattern.permute.xlu0 0
        %676 = vperm.xlu0 %675, %v673
        %v677 = vpop.permute.xlu0 %676
        %v679 = vmul.f32 %v671, %v677
        %v680 = vpack.c.bf16 %v679, %v679
        %v681 = vld [vmem:[%s470] sm:$0xff]
        %v682 = vld [vmem:[%s462] sm:$0xff]
        %v683 = vrcp.pop %v682
        %685 = vset.pattern.permute.xlu0 0
        %686 = vperm.xlu0 %685, %v683
        %v687 = vpop.permute.xlu0 %686
        %v689 = vmul.f32 %v681, %v687
        %v690 = vpack.c.bf16 %v689, %v689
        %v691 = vld [vmem:[%s554] sm:$0xff]
        %v692 = vld [vmem:[%s546] sm:$0xff]
        %v693 = vrcp.pop %v692
        %695 = vset.pattern.permute.xlu0 0
        %696 = vperm.xlu0 %695, %v693
        %v697 = vpop.permute.xlu0 %696
        %v699 = vmul.f32 %v691, %v697
        %v700 = vpack.c.bf16 %v699, %v699
        %v701 = vld [vmem:[%s635] sm:$0xff]
        %v702 = vld [vmem:[%s627] sm:$0xff]
        %v703 = vrcp.pop %v702
        %705 = vset.pattern.permute.xlu0 0
        %706 = vperm.xlu0 %705, %v703
        %v707 = vpop.permute.xlu0 %706
        %v709 = vmul.f32 %v701, %v707
        %v710 = vpack.c.bf16 %v709, %v709
        %v712 = vunpack.c.l.b16 %v690
        %v713 = vpack.c.b16 %v712, %v712
        %714 = vrot.lane.b32.xlu0 %v713, 8
        %v715 = vpop.permute.xlu0 %714
        %v717 = vunpack.c.l.b16 %v700
        %v718 = vpack.c.b16 %v717, %v717
        %719 = vrot.lane.b32.xlu0 %v718, 16
        %v720 = vpop.permute.xlu0 %719
        %v722 = vunpack.c.l.b16 %v710
        %v723 = vpack.c.b16 %v722, %v722
        %724 = vrot.lane.b32.xlu0 %v723, 24
        %v725 = vpop.permute.xlu0 %724
        %v728 = vsel %vm341, %v680, %v715
        %vm729 = vcmask 130048
        %v731 = vsel %vm729, %v728, %v720
        %vm732 = vcmask 195584
        %v734 = vsel %vm732, %v731, %v725
        %vm736 = vcmask 257024
        %737 = vst.msk [vmem:[%s311] sm:$0xf] %vm736, %v734
      $region44: #{decoder_forward.22} parent=35 // pred_fallthru
        _
      %p738 = scmp.lt.s32.totalorder %s20, 1
      %s739 = scalar_select %p738, %s20, 1
      %p740 = scmp.lt.s32.totalorder %s21, 0
      %s741 = scalar_select %p740, %s21, 0
      %s742 = sadd.s32 %s741, %s739
      %s743 = smul.addr %s742, 4
      %s744 = scalar_lea.vmem %s4, %s743
      // Predicated region
      $region45: #{decoder_forward.22} parent=35 // pred_check
        %p745 = pneg %p166
      $region46: #{decoder_forward.22} parent=35 // pred_check_branch
        %747 = sbr.rel (%p745) target = $region48
      $region47: #{decoder_forward.22} parent=35 // pred_region
        _
      $region48: #{decoder_forward.22} parent=35 // pred_fallthru
        _
    $region36: #{decoder_forward.22} parent=5 // pred_fallthru
      _
    %p748 = scmp.le.s32.totalorder 2, %s10
    // Predicated region
    $region49: #{decoder_forward.22} parent=5 // pred_check
      %p749 = pneg %p748
    $region50: #{decoder_forward.22} parent=5 // pred_check_branch
      %751 = sbr.rel (%p749) target = $region52
    $region51: #{decoder_forward.22} parent=5 // pred_region
      %s752 = ssub.s32 %s10, 2
      // Predicated region
      $region53: #{decoder_forward.22} parent=51 // pred_check
        %p753 = pneg %p172
      $region54: #{decoder_forward.22} parent=51 // pred_check_branch
        %755 = sbr.rel (%p753) target = $region56
      $region55: #{decoder_forward.22} parent=51 // pred_region
        %p756 = scmp.lt.s32.totalorder %s23, 1
        %s757 = scalar_select %p756, %s23, 1
        %p758 = scmp.lt.s32.totalorder %s24, 0
        %s759 = scalar_select %p758, %s24, 0
        %s760 = sadd.s32 %s759, %s757
        %s761 = smul.addr %s760, 4
        %s762 = scalar_lea.vmem %s4, %s761
      $region56: #{decoder_forward.22} parent=51 // pred_fallthru
        _
    $region52: #{decoder_forward.22} parent=5 // pred_fallthru
      _
  $region6: #{decoder_forward.22} parent=0 // loop_footer
    %s14 = sadd.s32 1, %s10
  $region7: #{decoder_forward.22} parent=0 // loop_footer_branch
    %9 = sbr.rel target = $region3
  $region8: #{decoder_forward.22} parent=0 // loop_exit
    _

</llo_original>
